<compile_context>
chip_gen: v5e
topology: v5e:2x2
jax: 0.10.0
libtpu: 0.0.40
codegen_flags: <defaults>
</compile_context>

<pallas_src>
import functools
import math

import jax
import jax.numpy as jnp
import numpy as np
from jax.experimental import pallas as pl
from jax.experimental.pallas import tpu as pltpu


# ----------------------------------------------------------------------------
# Fused encoder kernel: one grid step == one image, everything VMEM-resident.
# ----------------------------------------------------------------------------
def _encoder_kernel(x_ref, w1_ref, b1_ref, w2_ref, b2_ref, s1_ref, s2_ref,
                    wfc_ref, bfc_ref, out_ref, p1_ref, *, h_in, w_in):
    c_in = x_ref.shape[-1]
    c1 = w1_ref.shape[-1]
    c2 = w2_ref.shape[-1]
    h1, w1 = h_in // 2, w_in // 2          # conv1 (stride-2) output spatial
    h2w2 = wfc_ref.shape[0]                # conv2 output pixels (= (h1//2)*(w1//2))

    # ---- conv1 (k=3, s=2, p=1): 9 shifted stride-1 taps on the pre-padded
    #      NHWC input, accumulated on the MXU; then stride-2 subsampling as a
    #      matmul with a constant 0/1 selection matrix (keeps every read a
    #      contiguous static slice).
    acc1 = jnp.zeros((h_in * w_in, c1), jnp.float32)
    for kh in range(3):
        for kw in range(3):
            xt = x_ref[0, kh:kh + h_in, kw:kw + w_in, :].reshape(h_in * w_in, c_in)
            acc1 = acc1 + jnp.dot(xt, w1_ref[kh * 3 + kw],
                                  preferred_element_type=jnp.float32)
    a1 = jnp.dot(s1_ref[...], acc1, preferred_element_type=jnp.float32)  # (h1*w1, c1)
    a1 = jnp.maximum(a1 + b1_ref[...], 0.0)                              # bias + ReLU

    # ---- keep act1 (zero-padded by 1 for conv2) in VMEM scratch
    p1_ref[...] = jnp.zeros_like(p1_ref)
    p1_ref[1:1 + h1, 1:1 + w1, :] = a1.reshape(h1, w1, c1)

    # ---- conv2 (k=3, s=2, p=1): same 9-tap + selection trick, reading the
    #      VMEM-resident padded activation.
    acc2 = jnp.zeros((h1 * w1, c2), jnp.float32)
    for kh in range(3):
        for kw in range(3):
            at = p1_ref[kh:kh + h1, kw:kw + w1, :].reshape(h1 * w1, c1)
            acc2 = acc2 + jnp.dot(at, w2_ref[kh * 3 + kw],
                                  preferred_element_type=jnp.float32)
    a2 = jnp.dot(s2_ref[...], acc2, preferred_element_type=jnp.float32)  # (h2*w2, c2)
    a2 = jnp.maximum(a2 + b2_ref[...], 0.0)

    # ---- FC on the channels-last activation; wfc was permuted at prep time
    #      so this matches PyTorch's (c, h, w) .view() flatten order exactly.
    out = bfc_ref[...]                                                    # (1, E)
    for hw in range(h2w2):
        out = out + jnp.dot(a2[hw:hw + 1, :], wfc_ref[hw],
                            preferred_element_type=jnp.float32)
    out_ref[...] = out.reshape(1, 1, -1)


# ----------------------------------------------------------------------------
# One-time parameter preparation (weight permutes / selection matrices).
# ----------------------------------------------------------------------------
def prepare_params(params, image_size):
    h_in, w_in, _ = image_size
    assert h_in % 4 == 0 and w_in % 4 == 0
    h1, w1 = h_in // 2, w_in // 2
    h2, w2 = h1 // 2, w1 // 2
    c1 = params["conv1_w"].shape[0]
    c2 = params["conv2_w"].shape[0]
    e = params["fc_w"].shape[0]

    def tap_weights(w):  # OIHW -> (KH*KW, I, O), one (C_in, C_out) matrix per tap
        o, i, kh, kw = w.shape
        return jnp.transpose(w, (2, 3, 1, 0)).reshape(kh * kw, i, o)

    def select_matrix(hf, wf):  # stride-2 row selector for a (hf*wf, C) matrix
        hs, ws = hf // 2, wf // 2
        s = np.zeros((hs * ws, hf * wf), np.float32)
        r = np.arange(hs * ws)
        s[r, (2 * (r // ws)) * wf + 2 * (r % ws)] = 1.0
        return jnp.asarray(s)

    # fc_w[e, c*(h2*w2) + hw]  ->  wfc[hw, c, e]  (NHWC flatten order)
    wfc = jnp.transpose(params["fc_w"].reshape(e, c2, h2 * w2), (2, 1, 0))

    return {
        "w1": tap_weights(params["conv1_w"]),
        "b1": params["conv1_b"].reshape(1, c1),
        "w2": tap_weights(params["conv2_w"]),
        "b2": params["conv2_b"].reshape(1, c2),
        "s1": select_matrix(h_in, w_in),
        "s2": select_matrix(h1, w1),
        "wfc": wfc,
        "bfc": params["fc_b"].reshape(1, e),
    }


# ----------------------------------------------------------------------------
# Forward pass: single pallas_call, grid over batch ("parallel" for megacore).
# ----------------------------------------------------------------------------
def encoder_forward(x, prep):
    b, c_in, h_in, w_in = x.shape
    c1 = prep["w1"].shape[-1]
    e = prep["wfc"].shape[-1]
    h1, w1 = h_in // 2, w_in // 2

    # Only per-call glue: NCHW -> NHWC + spatial pad of the (tiny) raw input.
    xp = jnp.pad(jnp.transpose(x, (0, 2, 3, 1)),
                 ((0, 0), (1, 1), (1, 1), (0, 0)))

    kernel = functools.partial(_encoder_kernel, h_in=h_in, w_in=w_in)
    out = pl.pallas_call(
        kernel,
        out_shape=jax.ShapeDtypeStruct((b, 1, e), jnp.float32),
        grid=(b,),
        in_specs=[
            pl.BlockSpec((1, h_in + 2, w_in + 2, c_in), lambda i: (i, 0, 0, 0)),
            pl.BlockSpec(prep["w1"].shape, lambda i: (0, 0, 0)),
            pl.BlockSpec(prep["b1"].shape, lambda i: (0, 0)),
            pl.BlockSpec(prep["w2"].shape, lambda i: (0, 0, 0)),
            pl.BlockSpec(prep["b2"].shape, lambda i: (0, 0)),
            pl.BlockSpec(prep["s1"].shape, lambda i: (0, 0)),
            pl.BlockSpec(prep["s2"].shape, lambda i: (0, 0)),
            pl.BlockSpec(prep["wfc"].shape, lambda i: (0, 0, 0)),
            pl.BlockSpec(prep["bfc"].shape, lambda i: (0, 0)),
        ],
        out_specs=pl.BlockSpec((1, 1, e), lambda i: (i, 0, 0)),
        scratch_shapes=[pltpu.VMEM((h1 + 2, w1 + 2, c1), jnp.float32)],
        compiler_params=pltpu.CompilerParams(
            dimension_semantics=("parallel",)),
    )(xp, prep["w1"], prep["b1"], prep["w2"], prep["b2"],
      prep["s1"], prep["s2"], prep["wfc"], prep["bfc"])
    return out.reshape(b, e)


# ----------------------------------------------------------------------------
# Pure-JAX reference (matches the PyTorch module) + init
# ----------------------------------------------------------------------------
def encoder_reference(x, params):
    dn = ("NCHW", "OIHW", "NCHW")
    y = jax.lax.conv_general_dilated(
        x, params["conv1_w"], (2, 2), ((1, 1), (1, 1)), dimension_numbers=dn)
    y = jax.nn.relu(y + params["conv1_b"][None, :, None, None])
    y = jax.lax.conv_general_dilated(
        y, params["conv2_w"], (2, 2), ((1, 1), (1, 1)), dimension_numbers=dn)
    y = jax.nn.relu(y + params["conv2_b"][None, :, None, None])
    flat = y.reshape(y.shape[0], -1)
    return flat @ params["fc_w"].T + params["fc_b"]


def init_params(key, image_size, embedding_size):
    h_in, w_in, c_in = image_size
    channels = (32, 64)
    flat_dim = channels[1] * (h_in // 4) * (w_in // 4)
    ks = jax.random.split(key, 6)

    def uniform(k, shape, fan_in):
        bound = 1.0 / math.sqrt(fan_in)
        return jax.random.uniform(k, shape, jnp.float32, -bound, bound)

    return {
        "conv1_w": uniform(ks[0], (channels[0], c_in, 3, 3), c_in * 9),
        "conv1_b": uniform(ks[1], (channels[0],), c_in * 9),
        "conv2_w": uniform(ks[2], (channels[1], channels[0], 3, 3), channels[0] * 9),
        "conv2_b": uniform(ks[3], (channels[1],), channels[0] * 9),
        "fc_w": uniform(ks[4], (embedding_size, flat_dim), flat_dim),
        "fc_b": uniform(ks[5], (embedding_size,), flat_dim),
    }


if __name__ == "__main__":
    # batch=2, image_size=(16, 16, 4) (H, W, C_in), embedding_size=32.
    # Input is NCHW: (2, 4, 16, 16), matching the PyTorch module.
    image_size = (16, 16, 4)
    embedding_size = 32
    batch = 2

    key = jax.random.PRNGKey(0)
    k_params, k_x = jax.random.split(key)
    params = init_params(k_params, image_size, embedding_size)
    prep = prepare_params(params, image_size)
    x = jax.random.normal(
        k_x, (batch, image_size[2], image_size[0], image_size[1]), jnp.float32)

    fwd = jax.jit(encoder_forward)
    out = jax.block_until_ready(fwd(x, prep))
    ref = jax.block_until_ready(encoder_reference(x, params))

    assert out.shape == (batch, embedding_size), out.shape
    np.testing.assert_allclose(np.asarray(out), np.asarray(ref),
                               rtol=2e-5, atol=2e-5)
    print("KERNEL_OK")
</pallas_src>

<mosaic_0001>
module attributes {stable_mosaic.version = 11 : i64} {
  func.func @_encoder_kernel(%arg0: i32, %arg1: memref<1x18x18x4xf32, #tpu.memory_space<vmem>>, %arg2: memref<9x4x32xf32, #tpu.memory_space<vmem>>, %arg3: memref<1x32xf32, #tpu.memory_space<vmem>>, %arg4: memref<9x32x64xf32, #tpu.memory_space<vmem>>, %arg5: memref<1x64xf32, #tpu.memory_space<vmem>>, %arg6: memref<64x256xf32, #tpu.memory_space<vmem>>, %arg7: memref<16x64xf32, #tpu.memory_space<vmem>>, %arg8: memref<16x64x32xf32, #tpu.memory_space<vmem>>, %arg9: memref<1x32xf32, #tpu.memory_space<vmem>>, %arg10: memref<1x1x32xf32, #tpu.memory_space<vmem>>, %arg11: memref<10x10x32xf32, #tpu.memory_space<vmem>>) attributes {dimension_semantics = [#tpu.dimension_semantics<parallel>], iteration_bounds = array<i64: 2>, scalar_prefetch = 0 : i64, scratch_operands = 1 : i64, tpu.core_type = #tpu.core_type<tc>, window_params = [{transform_indices = @transform_0, window_bounds = array<i64: 1, 18, 18, 4>}, {pipeline_mode = #tpu.pipeline_mode<synchronous>, transform_indices = @transform_1, window_bounds = array<i64: 9, 4, 32>}, {pipeline_mode = #tpu.pipeline_mode<synchronous>, transform_indices = @transform_2, window_bounds = array<i64: 1, 32>}, {pipeline_mode = #tpu.pipeline_mode<synchronous>, transform_indices = @transform_3, window_bounds = array<i64: 9, 32, 64>}, {pipeline_mode = #tpu.pipeline_mode<synchronous>, transform_indices = @transform_4, window_bounds = array<i64: 1, 64>}, {pipeline_mode = #tpu.pipeline_mode<synchronous>, transform_indices = @transform_5, window_bounds = array<i64: 64, 256>}, {pipeline_mode = #tpu.pipeline_mode<synchronous>, transform_indices = @transform_6, window_bounds = array<i64: 16, 64>}, {pipeline_mode = #tpu.pipeline_mode<synchronous>, transform_indices = @transform_7, window_bounds = array<i64: 16, 64, 32>}, {pipeline_mode = #tpu.pipeline_mode<synchronous>, transform_indices = @transform_8, window_bounds = array<i64: 1, 32>}, {transform_indices = @transform_9, window_bounds = array<i64: 1, 1, 32>}]} {
    %cst = arith.constant 0.000000e+00 : f32
    %0 = vector.broadcast %cst : f32 to vector<256x32xf32>
    %c0 = arith.constant 0 : index
    %c0_0 = arith.constant 0 : index
    %c0_1 = arith.constant 0 : index
    %c0_2 = arith.constant 0 : index
    %1 = vector.load %arg1[%c0, %c0_0, %c0_1, %c0_2] : memref<1x18x18x4xf32, #tpu.memory_space<vmem>>, vector<1x16x16x4xf32>
    %2 = vector.shape_cast %1 : vector<1x16x16x4xf32> to vector<16x16x4xf32>
    %3 = vector.shape_cast %2 : vector<16x16x4xf32> to vector<256x4xf32>
    %c0_3 = arith.constant 0 : index
    %c0_4 = arith.constant 0 : index
    %c0_5 = arith.constant 0 : index
    %4 = vector.load %arg2[%c0_3, %c0_4, %c0_5] : memref<9x4x32xf32, #tpu.memory_space<vmem>>, vector<1x4x32xf32>
    %5 = vector.shape_cast %4 : vector<1x4x32xf32> to vector<4x32xf32>
    %cst_6 = arith.constant dense<0.000000e+00> : vector<256x32xf32>
    %6 = tpu.matmul %3, %5, %cst_6 {dimension_numbers = #tpu.dot_dimension_numbers<[1], [0], [0], [1], [0, 0, 1, 1], [], []>} : vector<256x4xf32>, vector<4x32xf32>, vector<256x32xf32> -> vector<256x32xf32>
    %7 = arith.addf %0, %6 : vector<256x32xf32>
    %c0_7 = arith.constant 0 : index
    %c0_8 = arith.constant 0 : index
    %c1 = arith.constant 1 : index
    %c0_9 = arith.constant 0 : index
    %8 = vector.load %arg1[%c0_7, %c0_8, %c1, %c0_9] : memref<1x18x18x4xf32, #tpu.memory_space<vmem>>, vector<1x16x16x4xf32>
    %9 = vector.shape_cast %8 : vector<1x16x16x4xf32> to vector<16x16x4xf32>
    %10 = vector.shape_cast %9 : vector<16x16x4xf32> to vector<256x4xf32>
    %c1_10 = arith.constant 1 : index
    %c0_11 = arith.constant 0 : index
    %c0_12 = arith.constant 0 : index
    %11 = vector.load %arg2[%c1_10, %c0_11, %c0_12] : memref<9x4x32xf32, #tpu.memory_space<vmem>>, vector<1x4x32xf32>
    %12 = vector.shape_cast %11 : vector<1x4x32xf32> to vector<4x32xf32>
    %cst_13 = arith.constant dense<0.000000e+00> : vector<256x32xf32>
    %13 = tpu.matmul %10, %12, %cst_13 {dimension_numbers = #tpu.dot_dimension_numbers<[1], [0], [0], [1], [0, 0, 1, 1], [], []>} : vector<256x4xf32>, vector<4x32xf32>, vector<256x32xf32> -> vector<256x32xf32>
    %14 = arith.addf %7, %13 : vector<256x32xf32>
    %c0_14 = arith.constant 0 : index
    %c0_15 = arith.constant 0 : index
    %c2 = arith.constant 2 : index
    %c0_16 = arith.constant 0 : index
    %15 = vector.load %arg1[%c0_14, %c0_15, %c2, %c0_16] : memref<1x18x18x4xf32, #tpu.memory_space<vmem>>, vector<1x16x16x4xf32>
    %16 = vector.shape_cast %15 : vector<1x16x16x4xf32> to vector<16x16x4xf32>
    %17 = vector.shape_cast %16 : vector<16x16x4xf32> to vector<256x4xf32>
    %c2_17 = arith.constant 2 : index
    %c0_18 = arith.constant 0 : index
    %c0_19 = arith.constant 0 : index
    %18 = vector.load %arg2[%c2_17, %c0_18, %c0_19] : memref<9x4x32xf32, #tpu.memory_space<vmem>>, vector<1x4x32xf32>
    %19 = vector.shape_cast %18 : vector<1x4x32xf32> to vector<4x32xf32>
    %cst_20 = arith.constant dense<0.000000e+00> : vector<256x32xf32>
    %20 = tpu.matmul %17, %19, %cst_20 {dimension_numbers = #tpu.dot_dimension_numbers<[1], [0], [0], [1], [0, 0, 1, 1], [], []>} : vector<256x4xf32>, vector<4x32xf32>, vector<256x32xf32> -> vector<256x32xf32>
    %21 = arith.addf %14, %20 : vector<256x32xf32>
    %c0_21 = arith.constant 0 : index
    %c1_22 = arith.constant 1 : index
    %c0_23 = arith.constant 0 : index
    %c0_24 = arith.constant 0 : index
    %22 = vector.load %arg1[%c0_21, %c1_22, %c0_23, %c0_24] : memref<1x18x18x4xf32, #tpu.memory_space<vmem>>, vector<1x16x16x4xf32>
    %23 = vector.shape_cast %22 : vector<1x16x16x4xf32> to vector<16x16x4xf32>
    %24 = vector.shape_cast %23 : vector<16x16x4xf32> to vector<256x4xf32>
    %c3 = arith.constant 3 : index
    %c0_25 = arith.constant 0 : index
    %c0_26 = arith.constant 0 : index
    %25 = vector.load %arg2[%c3, %c0_25, %c0_26] : memref<9x4x32xf32, #tpu.memory_space<vmem>>, vector<1x4x32xf32>
    %26 = vector.shape_cast %25 : vector<1x4x32xf32> to vector<4x32xf32>
    %cst_27 = arith.constant dense<0.000000e+00> : vector<256x32xf32>
    %27 = tpu.matmul %24, %26, %cst_27 {dimension_numbers = #tpu.dot_dimension_numbers<[1], [0], [0], [1], [0, 0, 1, 1], [], []>} : vector<256x4xf32>, vector<4x32xf32>, vector<256x32xf32> -> vector<256x32xf32>
    %28 = arith.addf %21, %27 : vector<256x32xf32>
    %c0_28 = arith.constant 0 : index
    %c1_29 = arith.constant 1 : index
    %c1_30 = arith.constant 1 : index
    %c0_31 = arith.constant 0 : index
    %29 = vector.load %arg1[%c0_28, %c1_29, %c1_30, %c0_31] : memref<1x18x18x4xf32, #tpu.memory_space<vmem>>, vector<1x16x16x4xf32>
    %30 = vector.shape_cast %29 : vector<1x16x16x4xf32> to vector<16x16x4xf32>
    %31 = vector.shape_cast %30 : vector<16x16x4xf32> to vector<256x4xf32>
    %c4 = arith.constant 4 : index
    %c0_32 = arith.constant 0 : index
    %c0_33 = arith.constant 0 : index
    %32 = vector.load %arg2[%c4, %c0_32, %c0_33] : memref<9x4x32xf32, #tpu.memory_space<vmem>>, vector<1x4x32xf32>
    %33 = vector.shape_cast %32 : vector<1x4x32xf32> to vector<4x32xf32>
    %cst_34 = arith.constant dense<0.000000e+00> : vector<256x32xf32>
    %34 = tpu.matmul %31, %33, %cst_34 {dimension_numbers = #tpu.dot_dimension_numbers<[1], [0], [0], [1], [0, 0, 1, 1], [], []>} : vector<256x4xf32>, vector<4x32xf32>, vector<256x32xf32> -> vector<256x32xf32>
    %35 = arith.addf %28, %34 : vector<256x32xf32>
    %c0_35 = arith.constant 0 : index
    %c1_36 = arith.constant 1 : index
    %c2_37 = arith.constant 2 : index
    %c0_38 = arith.constant 0 : index
    %36 = vector.load %arg1[%c0_35, %c1_36, %c2_37, %c0_38] : memref<1x18x18x4xf32, #tpu.memory_space<vmem>>, vector<1x16x16x4xf32>
    %37 = vector.shape_cast %36 : vector<1x16x16x4xf32> to vector<16x16x4xf32>
    %38 = vector.shape_cast %37 : vector<16x16x4xf32> to vector<256x4xf32>
    %c5 = arith.constant 5 : index
    %c0_39 = arith.constant 0 : index
    %c0_40 = arith.constant 0 : index
    %39 = vector.load %arg2[%c5, %c0_39, %c0_40] : memref<9x4x32xf32, #tpu.memory_space<vmem>>, vector<1x4x32xf32>
    %40 = vector.shape_cast %39 : vector<1x4x32xf32> to vector<4x32xf32>
    %cst_41 = arith.constant dense<0.000000e+00> : vector<256x32xf32>
    %41 = tpu.matmul %38, %40, %cst_41 {dimension_numbers = #tpu.dot_dimension_numbers<[1], [0], [0], [1], [0, 0, 1, 1], [], []>} : vector<256x4xf32>, vector<4x32xf32>, vector<256x32xf32> -> vector<256x32xf32>
    %42 = arith.addf %35, %41 : vector<256x32xf32>
    %c0_42 = arith.constant 0 : index
    %c2_43 = arith.constant 2 : index
    %c0_44 = arith.constant 0 : index
    %c0_45 = arith.constant 0 : index
    %43 = vector.load %arg1[%c0_42, %c2_43, %c0_44, %c0_45] : memref<1x18x18x4xf32, #tpu.memory_space<vmem>>, vector<1x16x16x4xf32>
    %44 = vector.shape_cast %43 : vector<1x16x16x4xf32> to vector<16x16x4xf32>
    %45 = vector.shape_cast %44 : vector<16x16x4xf32> to vector<256x4xf32>
    %c6 = arith.constant 6 : index
    %c0_46 = arith.constant 0 : index
    %c0_47 = arith.constant 0 : index
    %46 = vector.load %arg2[%c6, %c0_46, %c0_47] : memref<9x4x32xf32, #tpu.memory_space<vmem>>, vector<1x4x32xf32>
    %47 = vector.shape_cast %46 : vector<1x4x32xf32> to vector<4x32xf32>
    %cst_48 = arith.constant dense<0.000000e+00> : vector<256x32xf32>
    %48 = tpu.matmul %45, %47, %cst_48 {dimension_numbers = #tpu.dot_dimension_numbers<[1], [0], [0], [1], [0, 0, 1, 1], [], []>} : vector<256x4xf32>, vector<4x32xf32>, vector<256x32xf32> -> vector<256x32xf32>
    %49 = arith.addf %42, %48 : vector<256x32xf32>
    %c0_49 = arith.constant 0 : index
    %c2_50 = arith.constant 2 : index
    %c1_51 = arith.constant 1 : index
    %c0_52 = arith.constant 0 : index
    %50 = vector.load %arg1[%c0_49, %c2_50, %c1_51, %c0_52] : memref<1x18x18x4xf32, #tpu.memory_space<vmem>>, vector<1x16x16x4xf32>
    %51 = vector.shape_cast %50 : vector<1x16x16x4xf32> to vector<16x16x4xf32>
    %52 = vector.shape_cast %51 : vector<16x16x4xf32> to vector<256x4xf32>
    %c7 = arith.constant 7 : index
    %c0_53 = arith.constant 0 : index
    %c0_54 = arith.constant 0 : index
    %53 = vector.load %arg2[%c7, %c0_53, %c0_54] : memref<9x4x32xf32, #tpu.memory_space<vmem>>, vector<1x4x32xf32>
    %54 = vector.shape_cast %53 : vector<1x4x32xf32> to vector<4x32xf32>
    %cst_55 = arith.constant dense<0.000000e+00> : vector<256x32xf32>
    %55 = tpu.matmul %52, %54, %cst_55 {dimension_numbers = #tpu.dot_dimension_numbers<[1], [0], [0], [1], [0, 0, 1, 1], [], []>} : vector<256x4xf32>, vector<4x32xf32>, vector<256x32xf32> -> vector<256x32xf32>
    %56 = arith.addf %49, %55 : vector<256x32xf32>
    %c0_56 = arith.constant 0 : index
    %c2_57 = arith.constant 2 : index
    %c2_58 = arith.constant 2 : index
    %c0_59 = arith.constant 0 : index
    %57 = vector.load %arg1[%c0_56, %c2_57, %c2_58, %c0_59] : memref<1x18x18x4xf32, #tpu.memory_space<vmem>>, vector<1x16x16x4xf32>
    %58 = vector.shape_cast %57 : vector<1x16x16x4xf32> to vector<16x16x4xf32>
    %59 = vector.shape_cast %58 : vector<16x16x4xf32> to vector<256x4xf32>
    %c8 = arith.constant 8 : index
    %c0_60 = arith.constant 0 : index
    %c0_61 = arith.constant 0 : index
    %60 = vector.load %arg2[%c8, %c0_60, %c0_61] : memref<9x4x32xf32, #tpu.memory_space<vmem>>, vector<1x4x32xf32>
    %61 = vector.shape_cast %60 : vector<1x4x32xf32> to vector<4x32xf32>
    %cst_62 = arith.constant dense<0.000000e+00> : vector<256x32xf32>
    %62 = tpu.matmul %59, %61, %cst_62 {dimension_numbers = #tpu.dot_dimension_numbers<[1], [0], [0], [1], [0, 0, 1, 1], [], []>} : vector<256x4xf32>, vector<4x32xf32>, vector<256x32xf32> -> vector<256x32xf32>
    %63 = arith.addf %56, %62 : vector<256x32xf32>
    %c0_63 = arith.constant 0 : index
    %c0_64 = arith.constant 0 : index
    %64 = vector.load %arg6[%c0_63, %c0_64] : memref<64x256xf32, #tpu.memory_space<vmem>>, vector<64x256xf32>
    %cst_65 = arith.constant dense<0.000000e+00> : vector<64x32xf32>
    %65 = tpu.matmul %64, %63, %cst_65 {dimension_numbers = #tpu.dot_dimension_numbers<[1], [0], [0], [1], [0, 0, 1, 1], [], []>} : vector<64x256xf32>, vector<256x32xf32>, vector<64x32xf32> -> vector<64x32xf32>
    %c0_66 = arith.constant 0 : index
    %c0_67 = arith.constant 0 : index
    %66 = vector.load %arg3[%c0_66, %c0_67] : memref<1x32xf32, #tpu.memory_space<vmem>>, vector<1x32xf32>
    %67 = vector.broadcast %66 : vector<1x32xf32> to vector<64x32xf32>
    %68 = arith.addf %65, %67 : vector<64x32xf32>
    %cst_68 = arith.constant 0.000000e+00 : f32
    %69 = vector.broadcast %cst_68 : f32 to vector<64x32xf32>
    %70 = arith.maximumf %68, %69 : vector<64x32xf32>
    %cst_69 = arith.constant 0.000000e+00 : f32
    %71 = vector.broadcast %cst_69 : f32 to vector<10x10x32xf32>
    %c0_70 = arith.constant 0 : index
    %c0_71 = arith.constant 0 : index
    %c0_72 = arith.constant 0 : index
    %72 = vector.load %arg11[%c0_70, %c0_71, %c0_72] : memref<10x10x32xf32, #tpu.memory_space<vmem>>, vector<10x10x32xf32>
    tpu.vector_store %arg11[%c0_70, %c0_71, %c0_72], %71 {strides = array<i32>} : memref<10x10x32xf32, #tpu.memory_space<vmem>>, vector<10x10x32xf32>,
    %73 = vector.shape_cast %70 : vector<64x32xf32> to vector<8x8x32xf32>
    %c1_73 = arith.constant 1 : index
    %c1_74 = arith.constant 1 : index
    %c0_75 = arith.constant 0 : index
    %74 = vector.load %arg11[%c1_73, %c1_74, %c0_75] : memref<10x10x32xf32, #tpu.memory_space<vmem>>, vector<8x8x32xf32>
    tpu.vector_store %arg11[%c1_73, %c1_74, %c0_75], %73 {strides = array<i32>} : memref<10x10x32xf32, #tpu.memory_space<vmem>>, vector<8x8x32xf32>,
    %cst_76 = arith.constant 0.000000e+00 : f32
    %75 = vector.broadcast %cst_76 : f32 to vector<64x64xf32>
    %c0_77 = arith.constant 0 : index
    %c0_78 = arith.constant 0 : index
    %c0_79 = arith.constant 0 : index
    %76 = vector.load %arg11[%c0_77, %c0_78, %c0_79] : memref<10x10x32xf32, #tpu.memory_space<vmem>>, vector<8x8x32xf32>
    %77 = vector.shape_cast %76 : vector<8x8x32xf32> to vector<64x32xf32>
    %c0_80 = arith.constant 0 : index
    %c0_81 = arith.constant 0 : index
    %c0_82 = arith.constant 0 : index
    %78 = vector.load %arg4[%c0_80, %c0_81, %c0_82] : memref<9x32x64xf32, #tpu.memory_space<vmem>>, vector<1x32x64xf32>
    %79 = vector.shape_cast %78 : vector<1x32x64xf32> to vector<32x64xf32>
    %cst_83 = arith.constant dense<0.000000e+00> : vector<64x64xf32>
    %80 = tpu.matmul %77, %79, %cst_83 {dimension_numbers = #tpu.dot_dimension_numbers<[1], [0], [0], [1], [0, 0, 1, 1], [], []>} : vector<64x32xf32>, vector<32x64xf32>, vector<64x64xf32> -> vector<64x64xf32>
    %81 = arith.addf %75, %80 : vector<64x64xf32>
    %c0_84 = arith.constant 0 : index
    %c1_85 = arith.constant 1 : index
    %c0_86 = arith.constant 0 : index
    %82 = vector.load %arg11[%c0_84, %c1_85, %c0_86] : memref<10x10x32xf32, #tpu.memory_space<vmem>>, vector<8x8x32xf32>
    %83 = vector.shape_cast %82 : vector<8x8x32xf32> to vector<64x32xf32>
    %c1_87 = arith.constant 1 : index
    %c0_88 = arith.constant 0 : index
    %c0_89 = arith.constant 0 : index
    %84 = vector.load %arg4[%c1_87, %c0_88, %c0_89] : memref<9x32x64xf32, #tpu.memory_space<vmem>>, vector<1x32x64xf32>
    %85 = vector.shape_cast %84 : vector<1x32x64xf32> to vector<32x64xf32>
    %cst_90 = arith.constant dense<0.000000e+00> : vector<64x64xf32>
    %86 = tpu.matmul %83, %85, %cst_90 {dimension_numbers = #tpu.dot_dimension_numbers<[1], [0], [0], [1], [0, 0, 1, 1], [], []>} : vector<64x32xf32>, vector<32x64xf32>, vector<64x64xf32> -> vector<64x64xf32>
    %87 = arith.addf %81, %86 : vector<64x64xf32>
    %c0_91 = arith.constant 0 : index
    %c2_92 = arith.constant 2 : index
    %c0_93 = arith.constant 0 : index
    %88 = vector.load %arg11[%c0_91, %c2_92, %c0_93] : memref<10x10x32xf32, #tpu.memory_space<vmem>>, vector<8x8x32xf32>
    %89 = vector.shape_cast %88 : vector<8x8x32xf32> to vector<64x32xf32>
    %c2_94 = arith.constant 2 : index
    %c0_95 = arith.constant 0 : index
    %c0_96 = arith.constant 0 : index
    %90 = vector.load %arg4[%c2_94, %c0_95, %c0_96] : memref<9x32x64xf32, #tpu.memory_space<vmem>>, vector<1x32x64xf32>
    %91 = vector.shape_cast %90 : vector<1x32x64xf32> to vector<32x64xf32>
    %cst_97 = arith.constant dense<0.000000e+00> : vector<64x64xf32>
    %92 = tpu.matmul %89, %91, %cst_97 {dimension_numbers = #tpu.dot_dimension_numbers<[1], [0], [0], [1], [0, 0, 1, 1], [], []>} : vector<64x32xf32>, vector<32x64xf32>, vector<64x64xf32> -> vector<64x64xf32>
    %93 = arith.addf %87, %92 : vector<64x64xf32>
    %c1_98 = arith.constant 1 : index
    %c0_99 = arith.constant 0 : index
    %c0_100 = arith.constant 0 : index
    %94 = vector.load %arg11[%c1_98, %c0_99, %c0_100] : memref<10x10x32xf32, #tpu.memory_space<vmem>>, vector<8x8x32xf32>
    %95 = vector.shape_cast %94 : vector<8x8x32xf32> to vector<64x32xf32>
    %c3_101 = arith.constant 3 : index
    %c0_102 = arith.constant 0 : index
    %c0_103 = arith.constant 0 : index
    %96 = vector.load %arg4[%c3_101, %c0_102, %c0_103] : memref<9x32x64xf32, #tpu.memory_space<vmem>>, vector<1x32x64xf32>
    %97 = vector.shape_cast %96 : vector<1x32x64xf32> to vector<32x64xf32>
    %cst_104 = arith.constant dense<0.000000e+00> : vector<64x64xf32>
    %98 = tpu.matmul %95, %97, %cst_104 {dimension_numbers = #tpu.dot_dimension_numbers<[1], [0], [0], [1], [0, 0, 1, 1], [], []>} : vector<64x32xf32>, vector<32x64xf32>, vector<64x64xf32> -> vector<64x64xf32>
    %99 = arith.addf %93, %98 : vector<64x64xf32>
    %c1_105 = arith.constant 1 : index
    %c1_106 = arith.constant 1 : index
    %c0_107 = arith.constant 0 : index
    %100 = vector.load %arg11[%c1_105, %c1_106, %c0_107] : memref<10x10x32xf32, #tpu.memory_space<vmem>>, vector<8x8x32xf32>
    %101 = vector.shape_cast %100 : vector<8x8x32xf32> to vector<64x32xf32>
    %c4_108 = arith.constant 4 : index
    %c0_109 = arith.constant 0 : index
    %c0_110 = arith.constant 0 : index
    %102 = vector.load %arg4[%c4_108, %c0_109, %c0_110] : memref<9x32x64xf32, #tpu.memory_space<vmem>>, vector<1x32x64xf32>
    %103 = vector.shape_cast %102 : vector<1x32x64xf32> to vector<32x64xf32>
    %cst_111 = arith.constant dense<0.000000e+00> : vector<64x64xf32>
    %104 = tpu.matmul %101, %103, %cst_111 {dimension_numbers = #tpu.dot_dimension_numbers<[1], [0], [0], [1], [0, 0, 1, 1], [], []>} : vector<64x32xf32>, vector<32x64xf32>, vector<64x64xf32> -> vector<64x64xf32>
    %105 = arith.addf %99, %104 : vector<64x64xf32>
    %c1_112 = arith.constant 1 : index
    %c2_113 = arith.constant 2 : index
    %c0_114 = arith.constant 0 : index
    %106 = vector.load %arg11[%c1_112, %c2_113, %c0_114] : memref<10x10x32xf32, #tpu.memory_space<vmem>>, vector<8x8x32xf32>
    %107 = vector.shape_cast %106 : vector<8x8x32xf32> to vector<64x32xf32>
    %c5_115 = arith.constant 5 : index
    %c0_116 = arith.constant 0 : index
    %c0_117 = arith.constant 0 : index
    %108 = vector.load %arg4[%c5_115, %c0_116, %c0_117] : memref<9x32x64xf32, #tpu.memory_space<vmem>>, vector<1x32x64xf32>
    %109 = vector.shape_cast %108 : vector<1x32x64xf32> to vector<32x64xf32>
    %cst_118 = arith.constant dense<0.000000e+00> : vector<64x64xf32>
    %110 = tpu.matmul %107, %109, %cst_118 {dimension_numbers = #tpu.dot_dimension_numbers<[1], [0], [0], [1], [0, 0, 1, 1], [], []>} : vector<64x32xf32>, vector<32x64xf32>, vector<64x64xf32> -> vector<64x64xf32>
    %111 = arith.addf %105, %110 : vector<64x64xf32>
    %c2_119 = arith.constant 2 : index
    %c0_120 = arith.constant 0 : index
    %c0_121 = arith.constant 0 : index
    %112 = vector.load %arg11[%c2_119, %c0_120, %c0_121] : memref<10x10x32xf32, #tpu.memory_space<vmem>>, vector<8x8x32xf32>
    %113 = vector.shape_cast %112 : vector<8x8x32xf32> to vector<64x32xf32>
    %c6_122 = arith.constant 6 : index
    %c0_123 = arith.constant 0 : index
    %c0_124 = arith.constant 0 : index
    %114 = vector.load %arg4[%c6_122, %c0_123, %c0_124] : memref<9x32x64xf32, #tpu.memory_space<vmem>>, vector<1x32x64xf32>
    %115 = vector.shape_cast %114 : vector<1x32x64xf32> to vector<32x64xf32>
    %cst_125 = arith.constant dense<0.000000e+00> : vector<64x64xf32>
    %116 = tpu.matmul %113, %115, %cst_125 {dimension_numbers = #tpu.dot_dimension_numbers<[1], [0], [0], [1], [0, 0, 1, 1], [], []>} : vector<64x32xf32>, vector<32x64xf32>, vector<64x64xf32> -> vector<64x64xf32>
    %117 = arith.addf %111, %116 : vector<64x64xf32>
    %c2_126 = arith.constant 2 : index
    %c1_127 = arith.constant 1 : index
    %c0_128 = arith.constant 0 : index
    %118 = vector.load %arg11[%c2_126, %c1_127, %c0_128] : memref<10x10x32xf32, #tpu.memory_space<vmem>>, vector<8x8x32xf32>
    %119 = vector.shape_cast %118 : vector<8x8x32xf32> to vector<64x32xf32>
    %c7_129 = arith.constant 7 : index
    %c0_130 = arith.constant 0 : index
    %c0_131 = arith.constant 0 : index
    %120 = vector.load %arg4[%c7_129, %c0_130, %c0_131] : memref<9x32x64xf32, #tpu.memory_space<vmem>>, vector<1x32x64xf32>
    %121 = vector.shape_cast %120 : vector<1x32x64xf32> to vector<32x64xf32>
    %cst_132 = arith.constant dense<0.000000e+00> : vector<64x64xf32>
    %122 = tpu.matmul %119, %121, %cst_132 {dimension_numbers = #tpu.dot_dimension_numbers<[1], [0], [0], [1], [0, 0, 1, 1], [], []>} : vector<64x32xf32>, vector<32x64xf32>, vector<64x64xf32> -> vector<64x64xf32>
    %123 = arith.addf %117, %122 : vector<64x64xf32>
    %c2_133 = arith.constant 2 : index
    %c2_134 = arith.constant 2 : index
    %c0_135 = arith.constant 0 : index
    %124 = vector.load %arg11[%c2_133, %c2_134, %c0_135] : memref<10x10x32xf32, #tpu.memory_space<vmem>>, vector<8x8x32xf32>
    %125 = vector.shape_cast %124 : vector<8x8x32xf32> to vector<64x32xf32>
    %c8_136 = arith.constant 8 : index
    %c0_137 = arith.constant 0 : index
    %c0_138 = arith.constant 0 : index
    %126 = vector.load %arg4[%c8_136, %c0_137, %c0_138] : memref<9x32x64xf32, #tpu.memory_space<vmem>>, vector<1x32x64xf32>
    %127 = vector.shape_cast %126 : vector<1x32x64xf32> to vector<32x64xf32>
    %cst_139 = arith.constant dense<0.000000e+00> : vector<64x64xf32>
    %128 = tpu.matmul %125, %127, %cst_139 {dimension_numbers = #tpu.dot_dimension_numbers<[1], [0], [0], [1], [0, 0, 1, 1], [], []>} : vector<64x32xf32>, vector<32x64xf32>, vector<64x64xf32> -> vector<64x64xf32>
    %129 = arith.addf %123, %128 : vector<64x64xf32>
    %c0_140 = arith.constant 0 : index
    %c0_141 = arith.constant 0 : index
    %130 = vector.load %arg7[%c0_140, %c0_141] : memref<16x64xf32, #tpu.memory_space<vmem>>, vector<16x64xf32>
    %cst_142 = arith.constant dense<0.000000e+00> : vector<16x64xf32>
    %131 = tpu.matmul %130, %129, %cst_142 {dimension_numbers = #tpu.dot_dimension_numbers<[1], [0], [0], [1], [0, 0, 1, 1], [], []>} : vector<16x64xf32>, vector<64x64xf32>, vector<16x64xf32> -> vector<16x64xf32>
    %c0_143 = arith.constant 0 : index
    %c0_144 = arith.constant 0 : index
    %132 = vector.load %arg5[%c0_143, %c0_144] : memref<1x64xf32, #tpu.memory_space<vmem>>, vector<1x64xf32>
    %133 = vector.broadcast %132 : vector<1x64xf32> to vector<16x64xf32>
    %134 = arith.addf %131, %133 : vector<16x64xf32>
    %cst_145 = arith.constant 0.000000e+00 : f32
    %135 = vector.broadcast %cst_145 : f32 to vector<16x64xf32>
    %136 = arith.maximumf %134, %135 : vector<16x64xf32>
    %c0_146 = arith.constant 0 : index
    %c0_147 = arith.constant 0 : index
    %137 = vector.load %arg9[%c0_146, %c0_147] : memref<1x32xf32, #tpu.memory_space<vmem>>, vector<1x32xf32>
    %138 = vector.extract_strided_slice %136 {offsets = [0, 0], sizes = [1, 64], strides = [1, 1]} : vector<16x64xf32> to vector<1x64xf32>
    %c0_148 = arith.constant 0 : index
    %c0_149 = arith.constant 0 : index
    %c0_150 = arith.constant 0 : index
    %139 = vector.load %arg8[%c0_148, %c0_149, %c0_150] : memref<16x64x32xf32, #tpu.memory_space<vmem>>, vector<1x64x32xf32>
    %140 = vector.shape_cast %139 : vector<1x64x32xf32> to vector<64x32xf32>
    %cst_151 = arith.constant dense<0.000000e+00> : vector<1x32xf32>
    %141 = tpu.matmul %138, %140, %cst_151 {dimension_numbers = #tpu.dot_dimension_numbers<[1], [0], [0], [1], [0, 0, 1, 1], [], []>} : vector<1x64xf32>, vector<64x32xf32>, vector<1x32xf32> -> vector<1x32xf32>
    %142 = arith.addf %137, %141 : vector<1x32xf32>
    %143 = vector.extract_strided_slice %136 {offsets = [1, 0], sizes = [1, 64], strides = [1, 1]} : vector<16x64xf32> to vector<1x64xf32>
    %c1_152 = arith.constant 1 : index
    %c0_153 = arith.constant 0 : index
    %c0_154 = arith.constant 0 : index
    %144 = vector.load %arg8[%c1_152, %c0_153, %c0_154] : memref<16x64x32xf32, #tpu.memory_space<vmem>>, vector<1x64x32xf32>
    %145 = vector.shape_cast %144 : vector<1x64x32xf32> to vector<64x32xf32>
    %cst_155 = arith.constant dense<0.000000e+00> : vector<1x32xf32>
    %146 = tpu.matmul %143, %145, %cst_155 {dimension_numbers = #tpu.dot_dimension_numbers<[1], [0], [0], [1], [0, 0, 1, 1], [], []>} : vector<1x64xf32>, vector<64x32xf32>, vector<1x32xf32> -> vector<1x32xf32>
    %147 = arith.addf %142, %146 : vector<1x32xf32>
    %148 = vector.extract_strided_slice %136 {offsets = [2, 0], sizes = [1, 64], strides = [1, 1]} : vector<16x64xf32> to vector<1x64xf32>
    %c2_156 = arith.constant 2 : index
    %c0_157 = arith.constant 0 : index
    %c0_158 = arith.constant 0 : index
    %149 = vector.load %arg8[%c2_156, %c0_157, %c0_158] : memref<16x64x32xf32, #tpu.memory_space<vmem>>, vector<1x64x32xf32>
    %150 = vector.shape_cast %149 : vector<1x64x32xf32> to vector<64x32xf32>
    %cst_159 = arith.constant dense<0.000000e+00> : vector<1x32xf32>
    %151 = tpu.matmul %148, %150, %cst_159 {dimension_numbers = #tpu.dot_dimension_numbers<[1], [0], [0], [1], [0, 0, 1, 1], [], []>} : vector<1x64xf32>, vector<64x32xf32>, vector<1x32xf32> -> vector<1x32xf32>
    %152 = arith.addf %147, %151 : vector<1x32xf32>
    %153 = vector.extract_strided_slice %136 {offsets = [3, 0], sizes = [1, 64], strides = [1, 1]} : vector<16x64xf32> to vector<1x64xf32>
    %c3_160 = arith.constant 3 : index
    %c0_161 = arith.constant 0 : index
    %c0_162 = arith.constant 0 : index
    %154 = vector.load %arg8[%c3_160, %c0_161, %c0_162] : memref<16x64x32xf32, #tpu.memory_space<vmem>>, vector<1x64x32xf32>
    %155 = vector.shape_cast %154 : vector<1x64x32xf32> to vector<64x32xf32>
    %cst_163 = arith.constant dense<0.000000e+00> : vector<1x32xf32>
    %156 = tpu.matmul %153, %155, %cst_163 {dimension_numbers = #tpu.dot_dimension_numbers<[1], [0], [0], [1], [0, 0, 1, 1], [], []>} : vector<1x64xf32>, vector<64x32xf32>, vector<1x32xf32> -> vector<1x32xf32>
    %157 = arith.addf %152, %156 : vector<1x32xf32>
    %158 = vector.extract_strided_slice %136 {offsets = [4, 0], sizes = [1, 64], strides = [1, 1]} : vector<16x64xf32> to vector<1x64xf32>
    %c4_164 = arith.constant 4 : index
    %c0_165 = arith.constant 0 : index
    %c0_166 = arith.constant 0 : index
    %159 = vector.load %arg8[%c4_164, %c0_165, %c0_166] : memref<16x64x32xf32, #tpu.memory_space<vmem>>, vector<1x64x32xf32>
    %160 = vector.shape_cast %159 : vector<1x64x32xf32> to vector<64x32xf32>
    %cst_167 = arith.constant dense<0.000000e+00> : vector<1x32xf32>
    %161 = tpu.matmul %158, %160, %cst_167 {dimension_numbers = #tpu.dot_dimension_numbers<[1], [0], [0], [1], [0, 0, 1, 1], [], []>} : vector<1x64xf32>, vector<64x32xf32>, vector<1x32xf32> -> vector<1x32xf32>
    %162 = arith.addf %157, %161 : vector<1x32xf32>
    %163 = vector.extract_strided_slice %136 {offsets = [5, 0], sizes = [1, 64], strides = [1, 1]} : vector<16x64xf32> to vector<1x64xf32>
    %c5_168 = arith.constant 5 : index
    %c0_169 = arith.constant 0 : index
    %c0_170 = arith.constant 0 : index
    %164 = vector.load %arg8[%c5_168, %c0_169, %c0_170] : memref<16x64x32xf32, #tpu.memory_space<vmem>>, vector<1x64x32xf32>
    %165 = vector.shape_cast %164 : vector<1x64x32xf32> to vector<64x32xf32>
    %cst_171 = arith.constant dense<0.000000e+00> : vector<1x32xf32>
    %166 = tpu.matmul %163, %165, %cst_171 {dimension_numbers = #tpu.dot_dimension_numbers<[1], [0], [0], [1], [0, 0, 1, 1], [], []>} : vector<1x64xf32>, vector<64x32xf32>, vector<1x32xf32> -> vector<1x32xf32>
    %167 = arith.addf %162, %166 : vector<1x32xf32>
    %168 = vector.extract_strided_slice %136 {offsets = [6, 0], sizes = [1, 64], strides = [1, 1]} : vector<16x64xf32> to vector<1x64xf32>
    %c6_172 = arith.constant 6 : index
    %c0_173 = arith.constant 0 : index
    %c0_174 = arith.constant 0 : index
    %169 = vector.load %arg8[%c6_172, %c0_173, %c0_174] : memref<16x64x32xf32, #tpu.memory_space<vmem>>, vector<1x64x32xf32>
    %170 = vector.shape_cast %169 : vector<1x64x32xf32> to vector<64x32xf32>
    %cst_175 = arith.constant dense<0.000000e+00> : vector<1x32xf32>
    %171 = tpu.matmul %168, %170, %cst_175 {dimension_numbers = #tpu.dot_dimension_numbers<[1], [0], [0], [1], [0, 0, 1, 1], [], []>} : vector<1x64xf32>, vector<64x32xf32>, vector<1x32xf32> -> vector<1x32xf32>
    %172 = arith.addf %167, %171 : vector<1x32xf32>
    %173 = vector.extract_strided_slice %136 {offsets = [7, 0], sizes = [1, 64], strides = [1, 1]} : vector<16x64xf32> to vector<1x64xf32>
    %c7_176 = arith.constant 7 : index
    %c0_177 = arith.constant 0 : index
    %c0_178 = arith.constant 0 : index
    %174 = vector.load %arg8[%c7_176, %c0_177, %c0_178] : memref<16x64x32xf32, #tpu.memory_space<vmem>>, vector<1x64x32xf32>
    %175 = vector.shape_cast %174 : vector<1x64x32xf32> to vector<64x32xf32>
    %cst_179 = arith.constant dense<0.000000e+00> : vector<1x32xf32>
    %176 = tpu.matmul %173, %175, %cst_179 {dimension_numbers = #tpu.dot_dimension_numbers<[1], [0], [0], [1], [0, 0, 1, 1], [], []>} : vector<1x64xf32>, vector<64x32xf32>, vector<1x32xf32> -> vector<1x32xf32>
    %177 = arith.addf %172, %176 : vector<1x32xf32>
    %178 = vector.extract_strided_slice %136 {offsets = [8, 0], sizes = [1, 64], strides = [1, 1]} : vector<16x64xf32> to vector<1x64xf32>
    %c8_180 = arith.constant 8 : index
    %c0_181 = arith.constant 0 : index
    %c0_182 = arith.constant 0 : index
    %179 = vector.load %arg8[%c8_180, %c0_181, %c0_182] : memref<16x64x32xf32, #tpu.memory_space<vmem>>, vector<1x64x32xf32>
    %180 = vector.shape_cast %179 : vector<1x64x32xf32> to vector<64x32xf32>
    %cst_183 = arith.constant dense<0.000000e+00> : vector<1x32xf32>
    %181 = tpu.matmul %178, %180, %cst_183 {dimension_numbers = #tpu.dot_dimension_numbers<[1], [0], [0], [1], [0, 0, 1, 1], [], []>} : vector<1x64xf32>, vector<64x32xf32>, vector<1x32xf32> -> vector<1x32xf32>
    %182 = arith.addf %177, %181 : vector<1x32xf32>
    %183 = vector.extract_strided_slice %136 {offsets = [9, 0], sizes = [1, 64], strides = [1, 1]} : vector<16x64xf32> to vector<1x64xf32>
    %c9 = arith.constant 9 : index
    %c0_184 = arith.constant 0 : index
    %c0_185 = arith.constant 0 : index
    %184 = vector.load %arg8[%c9, %c0_184, %c0_185] : memref<16x64x32xf32, #tpu.memory_space<vmem>>, vector<1x64x32xf32>
    %185 = vector.shape_cast %184 : vector<1x64x32xf32> to vector<64x32xf32>
    %cst_186 = arith.constant dense<0.000000e+00> : vector<1x32xf32>
    %186 = tpu.matmul %183, %185, %cst_186 {dimension_numbers = #tpu.dot_dimension_numbers<[1], [0], [0], [1], [0, 0, 1, 1], [], []>} : vector<1x64xf32>, vector<64x32xf32>, vector<1x32xf32> -> vector<1x32xf32>
    %187 = arith.addf %182, %186 : vector<1x32xf32>
    %188 = vector.extract_strided_slice %136 {offsets = [10, 0], sizes = [1, 64], strides = [1, 1]} : vector<16x64xf32> to vector<1x64xf32>
    %c10 = arith.constant 10 : index
    %c0_187 = arith.constant 0 : index
    %c0_188 = arith.constant 0 : index
    %189 = vector.load %arg8[%c10, %c0_187, %c0_188] : memref<16x64x32xf32, #tpu.memory_space<vmem>>, vector<1x64x32xf32>
    %190 = vector.shape_cast %189 : vector<1x64x32xf32> to vector<64x32xf32>
    %cst_189 = arith.constant dense<0.000000e+00> : vector<1x32xf32>
    %191 = tpu.matmul %188, %190, %cst_189 {dimension_numbers = #tpu.dot_dimension_numbers<[1], [0], [0], [1], [0, 0, 1, 1], [], []>} : vector<1x64xf32>, vector<64x32xf32>, vector<1x32xf32> -> vector<1x32xf32>
    %192 = arith.addf %187, %191 : vector<1x32xf32>
    %193 = vector.extract_strided_slice %136 {offsets = [11, 0], sizes = [1, 64], strides = [1, 1]} : vector<16x64xf32> to vector<1x64xf32>
    %c11 = arith.constant 11 : index
    %c0_190 = arith.constant 0 : index
    %c0_191 = arith.constant 0 : index
    %194 = vector.load %arg8[%c11, %c0_190, %c0_191] : memref<16x64x32xf32, #tpu.memory_space<vmem>>, vector<1x64x32xf32>
    %195 = vector.shape_cast %194 : vector<1x64x32xf32> to vector<64x32xf32>
    %cst_192 = arith.constant dense<0.000000e+00> : vector<1x32xf32>
    %196 = tpu.matmul %193, %195, %cst_192 {dimension_numbers = #tpu.dot_dimension_numbers<[1], [0], [0], [1], [0, 0, 1, 1], [], []>} : vector<1x64xf32>, vector<64x32xf32>, vector<1x32xf32> -> vector<1x32xf32>
    %197 = arith.addf %192, %196 : vector<1x32xf32>
    %198 = vector.extract_strided_slice %136 {offsets = [12, 0], sizes = [1, 64], strides = [1, 1]} : vector<16x64xf32> to vector<1x64xf32>
    %c12 = arith.constant 12 : index
    %c0_193 = arith.constant 0 : index
    %c0_194 = arith.constant 0 : index
    %199 = vector.load %arg8[%c12, %c0_193, %c0_194] : memref<16x64x32xf32, #tpu.memory_space<vmem>>, vector<1x64x32xf32>
    %200 = vector.shape_cast %199 : vector<1x64x32xf32> to vector<64x32xf32>
    %cst_195 = arith.constant dense<0.000000e+00> : vector<1x32xf32>
    %201 = tpu.matmul %198, %200, %cst_195 {dimension_numbers = #tpu.dot_dimension_numbers<[1], [0], [0], [1], [0, 0, 1, 1], [], []>} : vector<1x64xf32>, vector<64x32xf32>, vector<1x32xf32> -> vector<1x32xf32>
    %202 = arith.addf %197, %201 : vector<1x32xf32>
    %203 = vector.extract_strided_slice %136 {offsets = [13, 0], sizes = [1, 64], strides = [1, 1]} : vector<16x64xf32> to vector<1x64xf32>
    %c13 = arith.constant 13 : index
    %c0_196 = arith.constant 0 : index
    %c0_197 = arith.constant 0 : index
    %204 = vector.load %arg8[%c13, %c0_196, %c0_197] : memref<16x64x32xf32, #tpu.memory_space<vmem>>, vector<1x64x32xf32>
    %205 = vector.shape_cast %204 : vector<1x64x32xf32> to vector<64x32xf32>
    %cst_198 = arith.constant dense<0.000000e+00> : vector<1x32xf32>
    %206 = tpu.matmul %203, %205, %cst_198 {dimension_numbers = #tpu.dot_dimension_numbers<[1], [0], [0], [1], [0, 0, 1, 1], [], []>} : vector<1x64xf32>, vector<64x32xf32>, vector<1x32xf32> -> vector<1x32xf32>
    %207 = arith.addf %202, %206 : vector<1x32xf32>
    %208 = vector.extract_strided_slice %136 {offsets = [14, 0], sizes = [1, 64], strides = [1, 1]} : vector<16x64xf32> to vector<1x64xf32>
    %c14 = arith.constant 14 : index
    %c0_199 = arith.constant 0 : index
    %c0_200 = arith.constant 0 : index
    %209 = vector.load %arg8[%c14, %c0_199, %c0_200] : memref<16x64x32xf32, #tpu.memory_space<vmem>>, vector<1x64x32xf32>
    %210 = vector.shape_cast %209 : vector<1x64x32xf32> to vector<64x32xf32>
    %cst_201 = arith.constant dense<0.000000e+00> : vector<1x32xf32>
    %211 = tpu.matmul %208, %210, %cst_201 {dimension_numbers = #tpu.dot_dimension_numbers<[1], [0], [0], [1], [0, 0, 1, 1], [], []>} : vector<1x64xf32>, vector<64x32xf32>, vector<1x32xf32> -> vector<1x32xf32>
    %212 = arith.addf %207, %211 : vector<1x32xf32>
    %213 = vector.extract_strided_slice %136 {offsets = [15, 0], sizes = [1, 64], strides = [1, 1]} : vector<16x64xf32> to vector<1x64xf32>
    %c15 = arith.constant 15 : index
    %c0_202 = arith.constant 0 : index
    %c0_203 = arith.constant 0 : index
    %214 = vector.load %arg8[%c15, %c0_202, %c0_203] : memref<16x64x32xf32, #tpu.memory_space<vmem>>, vector<1x64x32xf32>
    %215 = vector.shape_cast %214 : vector<1x64x32xf32> to vector<64x32xf32>
    %cst_204 = arith.constant dense<0.000000e+00> : vector<1x32xf32>
    %216 = tpu.matmul %213, %215, %cst_204 {dimension_numbers = #tpu.dot_dimension_numbers<[1], [0], [0], [1], [0, 0, 1, 1], [], []>} : vector<1x64xf32>, vector<64x32xf32>, vector<1x32xf32> -> vector<1x32xf32>
    %217 = arith.addf %212, %216 : vector<1x32xf32>
    %218 = vector.shape_cast %217 : vector<1x32xf32> to vector<1x1x32xf32>
    %c0_205 = arith.constant 0 : index
    %c0_206 = arith.constant 0 : index
    %c0_207 = arith.constant 0 : index
    %219 = vector.load %arg10[%c0_205, %c0_206, %c0_207] : memref<1x1x32xf32, #tpu.memory_space<vmem>>, vector<1x1x32xf32>
    tpu.vector_store %arg10[%c0_205, %c0_206, %c0_207], %218 {strides = array<i32>} : memref<1x1x32xf32, #tpu.memory_space<vmem>>, vector<1x1x32xf32>,
    return
  }
  func.func @transform_0(%arg0: i32) -> (i32, i32, i32, i32) {
    %c0_i32 = arith.constant 0 : i32
    %c0_i32_0 = arith.constant 0 : i32
    %c0_i32_1 = arith.constant 0 : i32
    %c0_i32_2 = arith.constant 0 : i32
    return %arg0, %c0_i32, %c0_i32_0, %c0_i32_1 : i32, i32, i32, i32
  }
  func.func @transform_1(%arg0: i32) -> (i32, i32, i32) {
    %c0_i32 = arith.constant 0 : i32
    %c0_i32_0 = arith.constant 0 : i32
    %c0_i32_1 = arith.constant 0 : i32
    %c0_i32_2 = arith.constant 0 : i32
    return %c0_i32, %c0_i32_0, %c0_i32_1 : i32, i32, i32
  }
  func.func @transform_2(%arg0: i32) -> (i32, i32) {
    %c0_i32 = arith.constant 0 : i32
    %c0_i32_0 = arith.constant 0 : i32
    %c0_i32_1 = arith.constant 0 : i32
    return %c0_i32, %c0_i32_0 : i32, i32
  }
  func.func @transform_3(%arg0: i32) -> (i32, i32, i32) {
    %c0_i32 = arith.constant 0 : i32
    %c0_i32_0 = arith.constant 0 : i32
    %c0_i32_1 = arith.constant 0 : i32
    %c0_i32_2 = arith.constant 0 : i32
    return %c0_i32, %c0_i32_0, %c0_i32_1 : i32, i32, i32
  }
  func.func @transform_4(%arg0: i32) -> (i32, i32) {
    %c0_i32 = arith.constant 0 : i32
    %c0_i32_0 = arith.constant 0 : i32
    %c0_i32_1 = arith.constant 0 : i32
    return %c0_i32, %c0_i32_0 : i32, i32
  }
  func.func @transform_5(%arg0: i32) -> (i32, i32) {
    %c0_i32 = arith.constant 0 : i32
    %c0_i32_0 = arith.constant 0 : i32
    %c0_i32_1 = arith.constant 0 : i32
    return %c0_i32, %c0_i32_0 : i32, i32
  }
  func.func @transform_6(%arg0: i32) -> (i32, i32) {
    %c0_i32 = arith.constant 0 : i32
    %c0_i32_0 = arith.constant 0 : i32
    %c0_i32_1 = arith.constant 0 : i32
    return %c0_i32, %c0_i32_0 : i32, i32
  }
  func.func @transform_7(%arg0: i32) -> (i32, i32, i32) {
    %c0_i32 = arith.constant 0 : i32
    %c0_i32_0 = arith.constant 0 : i32
    %c0_i32_1 = arith.constant 0 : i32
    %c0_i32_2 = arith.constant 0 : i32
    return %c0_i32, %c0_i32_0, %c0_i32_1 : i32, i32, i32
  }
  func.func @transform_8(%arg0: i32) -> (i32, i32) {
    %c0_i32 = arith.constant 0 : i32
    %c0_i32_0 = arith.constant 0 : i32
    %c0_i32_1 = arith.constant 0 : i32
    return %c0_i32, %c0_i32_0 : i32, i32
  }
  func.func @transform_9(%arg0: i32) -> (i32, i32, i32) {
    %c0_i32 = arith.constant 0 : i32
    %c0_i32_0 = arith.constant 0 : i32
    %c0_i32_1 = arith.constant 0 : i32
    return %arg0, %c0_i32, %c0_i32_0 : i32, i32, i32
  }
}

</mosaic_0001>

<llo_original>
// kernel: encoder_forward.1
$region0: #{encoder_forward.1}
  #allocation0 [shape = 'u32[]', space=smem, size = 0x4, offset = 0x4, fixed_abs, tag = 'smem constant byte address 0x4 - core index']
  #allocation1 [shape = 'u32[72,128]{1,0:T(1,128)}', space=vmem, size = 0x9000, scoped, tag = 'internal scratch']
  #allocation2 [shape = 'f32[10,10,32]{2,1,0:T(8,128)}', space=vmem, size = 0x14000, scoped, tag = 'scratch operand']
  %s0 = inlined_call_operand.vmem [shape: f32[2,18,18,4], index: 0, kind: input, shape index: {}]
  %s1 = inlined_call_operand.vmem [shape: f32[9,4,32], index: 1, kind: input, shape index: {}]
  %s2 = inlined_call_operand.vmem [shape: f32[1,32], index: 2, kind: input, shape index: {}]
  %s3 = inlined_call_operand.vmem [shape: f32[9,32,64], index: 3, kind: input, shape index: {}]
  %s4 = inlined_call_operand.vmem [shape: f32[1,64], index: 4, kind: input, shape index: {}]
  %s5 = inlined_call_operand.vmem [shape: f32[64,256], index: 5, kind: input, shape index: {}]
  %s6 = inlined_call_operand.vmem [shape: f32[16,64], index: 6, kind: input, shape index: {}]
  %s7 = inlined_call_operand.vmem [shape: f32[16,64,32], index: 7, kind: input, shape index: {}]
  %s8 = inlined_call_operand.vmem [shape: f32[1,32], index: 8, kind: input, shape index: {}]
  %s9 = inlined_call_operand.hbm [shape: f32[2,1,32], index: 9, kind: output, shape index: {}]
  %s10 = sld [smem:[#allocation0]]
  $region69: #{encoder_forward.1} parent=0
    _
  %s12 = ssub.s32 1, %s10
  %s13 = scalar_select 0, %s12, %s10
  $region1: #{encoder_forward.1} parent=0
    #allocation3 [shape = 'u8[1024]{0}', space=vmem, size = 0x400, scoped, tag = 'output window, operand 0']
    #allocation4 [shape = 's32[2]{0}', space=sflag, size = 0x8, scoped, tag = 'scoped memory for encoder_forward.1']
    %14 = vsyncpa [#allocation4], 0
    %s15 = scalar_lea.sflag [#allocation4], 1
    %16 = vsyncpa %s15, 0
    loop: start=0, step=1, limit=4
    $region2: #{encoder_forward.1} parent=1 // loop_pre_header
      _
    $region3: #{encoder_forward.1} parent=1 // loop_header
      %s18 = sphi 0, %s22
      %p19 = scmp.ge.s32.totalorder %s18, 4
      %s28 = sphi 0, %s30
      %s31 = sphi 0, %s28
      %s32 = sphi 0, %s31
      %s48 = sphi 0, %s32
      %s52 = sphi 0, %s52
      %s54 = sphi 0, %s52
      %s55 = sphi 0, %s54
      %s69 = sphi 0, %s55
      %s73 = sphi 0, %s73
      %s75 = sphi 0, %s73
      %s76 = sphi 0, %s75
      %s90 = sphi 0, %s76
      %s94 = sphi 0, %s94
      %s96 = sphi 0, %s94
      %s97 = sphi 0, %s96
      %s111 = sphi 0, %s97
      %s115 = sphi 0, %s115
      %s117 = sphi 0, %s115
      %s118 = sphi 0, %s117
      %s132 = sphi 0, %s118
      %s136 = sphi 0, %s136
      %s138 = sphi 0, %s136
      %s139 = sphi 0, %s138
      %s153 = sphi 0, %s139
      %s157 = sphi 0, %s157
      %s159 = sphi 0, %s157
      %s160 = sphi 0, %s159
      %s174 = sphi 0, %s160
      %s178 = sphi 0, %s178
      %s180 = sphi 0, %s178
      %s181 = sphi 0, %s180
      %s195 = sphi 0, %s181
      %s199 = sphi 0, %s199
      %s201 = sphi 0, %s199
      %s202 = sphi 0, %s201
      %s216 = sphi 0, %s202
      %s222 = sphi 0, %s224
      %s225 = sphi 0, %s222
      %s226 = sphi 0, %s225
      %s242 = sphi 0, %s226
    $region4: #{encoder_forward.1} parent=1 // loop_header_branch
      %21 = sbr.rel (%p19) target = $region8
    $region5: #{encoder_forward.1} parent=1 // loop_body
      %s23 = ssub.s32 %s18, 1
      %s24 = ssub.s32 %s18, 2
      %s25 = sadd.s32 %s18, 1
      %s26 = ssub.s32 %s18, %s25
      %p27 = scmp.eq.s32.totalorder %s26, 0
      %s29 = sadd.s32 %s28, 1
      %s30 = scalar_select %p27, %s28, %s29
      %p33 = pneg %p27
      %p34 = scmp.eq.s32.totalorder %s18, 1
      %p35 = por %p33, %p34
      %p36 = scmp.ne.s32.totalorder %s28, %s31
      %p37 = scmp.eq.s32.totalorder %s18, 0
      %p38 = por %p36, %p37
      %p39 = scmp.ne.s32.totalorder %s28, %s31
      %p40 = scmp.eq.s32.totalorder %s23, 1
      %p41 = por %p39, %p40
      %p42 = scmp.ne.s32.totalorder %s31, %s32
      %p43 = scmp.eq.s32.totalorder %s23, 0
      %p44 = por %p42, %p43
      %p45 = scmp.ne.s32.totalorder %s31, %s32
      %p46 = scmp.eq.s32.totalorder %s24, 1
      %p47 = por %p45, %p46
      %p49 = scmp.ne.s32.totalorder %s32, %s48
      %p50 = scmp.eq.s32.totalorder %s24, 0
      %p51 = por %p49, %p50
      %s53 = sadd.s32 %s52, 1
      %p56 = scmp.eq.s32.totalorder %s18, 1
      %p57 = scmp.ne.s32.totalorder %s52, %s54
      %p58 = scmp.eq.s32.totalorder %s18, 0
      %p59 = por %p57, %p58
      %p60 = scmp.ne.s32.totalorder %s52, %s54
      %p61 = scmp.eq.s32.totalorder %s23, 1
      %p62 = por %p60, %p61
      %p63 = scmp.ne.s32.totalorder %s54, %s55
      %p64 = scmp.eq.s32.totalorder %s23, 0
      %p65 = por %p63, %p64
      %p66 = scmp.ne.s32.totalorder %s54, %s55
      %p67 = scmp.eq.s32.totalorder %s24, 1
      %p68 = por %p66, %p67
      %p70 = scmp.ne.s32.totalorder %s55, %s69
      %p71 = scmp.eq.s32.totalorder %s24, 0
      %p72 = por %p70, %p71
      %s74 = sadd.s32 %s73, 1
      %p77 = scmp.eq.s32.totalorder %s18, 1
      %p78 = scmp.ne.s32.totalorder %s73, %s75
      %p79 = scmp.eq.s32.totalorder %s18, 0
      %p80 = por %p78, %p79
      %p81 = scmp.ne.s32.totalorder %s73, %s75
      %p82 = scmp.eq.s32.totalorder %s23, 1
      %p83 = por %p81, %p82
      %p84 = scmp.ne.s32.totalorder %s75, %s76
      %p85 = scmp.eq.s32.totalorder %s23, 0
      %p86 = por %p84, %p85
      %p87 = scmp.ne.s32.totalorder %s75, %s76
      %p88 = scmp.eq.s32.totalorder %s24, 1
      %p89 = por %p87, %p88
      %p91 = scmp.ne.s32.totalorder %s76, %s90
      %p92 = scmp.eq.s32.totalorder %s24, 0
      %p93 = por %p91, %p92
      %s95 = sadd.s32 %s94, 1
      %p98 = scmp.eq.s32.totalorder %s18, 1
      %p99 = scmp.ne.s32.totalorder %s94, %s96
      %p100 = scmp.eq.s32.totalorder %s18, 0
      %p101 = por %p99, %p100
      %p102 = scmp.ne.s32.totalorder %s94, %s96
      %p103 = scmp.eq.s32.totalorder %s23, 1
      %p104 = por %p102, %p103
      %p105 = scmp.ne.s32.totalorder %s96, %s97
      %p106 = scmp.eq.s32.totalorder %s23, 0
      %p107 = por %p105, %p106
      %p108 = scmp.ne.s32.totalorder %s96, %s97
      %p109 = scmp.eq.s32.totalorder %s24, 1
      %p110 = por %p108, %p109
      %p112 = scmp.ne.s32.totalorder %s97, %s111
      %p113 = scmp.eq.s32.totalorder %s24, 0
      %p114 = por %p112, %p113
      %s116 = sadd.s32 %s115, 1
      %p119 = scmp.eq.s32.totalorder %s18, 1
      %p120 = scmp.ne.s32.totalorder %s115, %s117
      %p121 = scmp.eq.s32.totalorder %s18, 0
      %p122 = por %p120, %p121
      %p123 = scmp.ne.s32.totalorder %s115, %s117
      %p124 = scmp.eq.s32.totalorder %s23, 1
      %p125 = por %p123, %p124
      %p126 = scmp.ne.s32.totalorder %s117, %s118
      %p127 = scmp.eq.s32.totalorder %s23, 0
      %p128 = por %p126, %p127
      %p129 = scmp.ne.s32.totalorder %s117, %s118
      %p130 = scmp.eq.s32.totalorder %s24, 1
      %p131 = por %p129, %p130
      %p133 = scmp.ne.s32.totalorder %s118, %s132
      %p134 = scmp.eq.s32.totalorder %s24, 0
      %p135 = por %p133, %p134
      %s137 = sadd.s32 %s136, 1
      %p140 = scmp.eq.s32.totalorder %s18, 1
      %p141 = scmp.ne.s32.totalorder %s136, %s138
      %p142 = scmp.eq.s32.totalorder %s18, 0
      %p143 = por %p141, %p142
      %p144 = scmp.ne.s32.totalorder %s136, %s138
      %p145 = scmp.eq.s32.totalorder %s23, 1
      %p146 = por %p144, %p145
      %p147 = scmp.ne.s32.totalorder %s138, %s139
      %p148 = scmp.eq.s32.totalorder %s23, 0
      %p149 = por %p147, %p148
      %p150 = scmp.ne.s32.totalorder %s138, %s139
      %p151 = scmp.eq.s32.totalorder %s24, 1
      %p152 = por %p150, %p151
      %p154 = scmp.ne.s32.totalorder %s139, %s153
      %p155 = scmp.eq.s32.totalorder %s24, 0
      %p156 = por %p154, %p155
      %s158 = sadd.s32 %s157, 1
      %p161 = scmp.eq.s32.totalorder %s18, 1
      %p162 = scmp.ne.s32.totalorder %s157, %s159
      %p163 = scmp.eq.s32.totalorder %s18, 0
      %p164 = por %p162, %p163
      %p165 = scmp.ne.s32.totalorder %s157, %s159
      %p166 = scmp.eq.s32.totalorder %s23, 1
      %p167 = por %p165, %p166
      %p168 = scmp.ne.s32.totalorder %s159, %s160
      %p169 = scmp.eq.s32.totalorder %s23, 0
      %p170 = por %p168, %p169
      %p171 = scmp.ne.s32.totalorder %s159, %s160
      %p172 = scmp.eq.s32.totalorder %s24, 1
      %p173 = por %p171, %p172
      %p175 = scmp.ne.s32.totalorder %s160, %s174
      %p176 = scmp.eq.s32.totalorder %s24, 0
      %p177 = por %p175, %p176
      %s179 = sadd.s32 %s178, 1
      %p182 = scmp.eq.s32.totalorder %s18, 1
      %p183 = scmp.ne.s32.totalorder %s178, %s180
      %p184 = scmp.eq.s32.totalorder %s18, 0
      %p185 = por %p183, %p184
      %p186 = scmp.ne.s32.totalorder %s178, %s180
      %p187 = scmp.eq.s32.totalorder %s23, 1
      %p188 = por %p186, %p187
      %p189 = scmp.ne.s32.totalorder %s180, %s181
      %p190 = scmp.eq.s32.totalorder %s23, 0
      %p191 = por %p189, %p190
      %p192 = scmp.ne.s32.totalorder %s180, %s181
      %p193 = scmp.eq.s32.totalorder %s24, 1
      %p194 = por %p192, %p193
      %p196 = scmp.ne.s32.totalorder %s181, %s195
      %p197 = scmp.eq.s32.totalorder %s24, 0
      %p198 = por %p196, %p197
      %s200 = sadd.s32 %s199, 1
      %p203 = scmp.eq.s32.totalorder %s18, 1
      %p204 = scmp.ne.s32.totalorder %s199, %s201
      %p205 = scmp.eq.s32.totalorder %s18, 0
      %p206 = por %p204, %p205
      %p207 = scmp.ne.s32.totalorder %s199, %s201
      %p208 = scmp.eq.s32.totalorder %s23, 1
      %p209 = por %p207, %p208
      %p210 = scmp.ne.s32.totalorder %s201, %s202
      %p211 = scmp.eq.s32.totalorder %s23, 0
      %p212 = por %p210, %p211
      %p213 = scmp.ne.s32.totalorder %s201, %s202
      %p214 = scmp.eq.s32.totalorder %s24, 1
      %p215 = por %p213, %p214
      %p217 = scmp.ne.s32.totalorder %s202, %s216
      %p218 = scmp.eq.s32.totalorder %s24, 0
      %p219 = por %p217, %p218
      %s220 = ssub.s32 %s18, %s25
      %p221 = scmp.eq.s32.totalorder %s220, 0
      %s223 = sadd.s32 %s222, 1
      %s224 = scalar_select %p221, %s222, %s223
      %p227 = pneg %p221
      %p228 = scmp.eq.s32.totalorder %s18, 1
      %p229 = por %p227, %p228
      %p230 = scmp.ne.s32.totalorder %s222, %s225
      %p231 = scmp.eq.s32.totalorder %s18, 0
      %p232 = por %p230, %p231
      %p233 = scmp.ne.s32.totalorder %s222, %s225
      %p234 = scmp.eq.s32.totalorder %s23, 1
      %p235 = por %p233, %p234
      %p236 = scmp.ne.s32.totalorder %s225, %s226
      %p237 = scmp.eq.s32.totalorder %s23, 0
      %p238 = por %p236, %p237
      %p239 = scmp.ne.s32.totalorder %s225, %s226
      %p240 = scmp.eq.s32.totalorder %s24, 1
      %p241 = por %p239, %p240
      %p243 = scmp.ne.s32.totalorder %s226, %s242
      %p244 = scmp.eq.s32.totalorder %s24, 0
      %p245 = por %p243, %p244
      %p246 = scmp.le.s32.totalorder 1, %s18
      %p247 = scmp.lt.s32.totalorder %s18, 3
      %p248 = pnand %p246, %p247
      %p249 = pneg %p248
      // Predicated region
      $region9: #{encoder_forward.1} parent=5 // pred_check
        _
      $region10: #{encoder_forward.1} parent=5 // pred_check_branch
        %251 = sbr.rel (%p248) target = $region12
      $region11: #{encoder_forward.1} parent=5 // pred_region
        %s252 = ssub.s32 %s18, 1
        // Predicated region
        $region13: #{encoder_forward.1} parent=11 // pred_check
          %p253 = pneg %p65
        $region14: #{encoder_forward.1} parent=11 // pred_check_branch
          %255 = sbr.rel (%p253) target = $region16
        $region15: #{encoder_forward.1} parent=11 // pred_region
          _
        $region16: #{encoder_forward.1} parent=11 // pred_fallthru
          _
        // Predicated region
        $region17: #{encoder_forward.1} parent=11 // pred_check
          %p256 = pneg %p86
        $region18: #{encoder_forward.1} parent=11 // pred_check_branch
          %258 = sbr.rel (%p256) target = $region20
        $region19: #{encoder_forward.1} parent=11 // pred_region
          _
        $region20: #{encoder_forward.1} parent=11 // pred_fallthru
          _
        // Predicated region
        $region21: #{encoder_forward.1} parent=11 // pred_check
          %p259 = pneg %p107
        $region22: #{encoder_forward.1} parent=11 // pred_check_branch
          %261 = sbr.rel (%p259) target = $region24
        $region23: #{encoder_forward.1} parent=11 // pred_region
          _
        $region24: #{encoder_forward.1} parent=11 // pred_fallthru
          _
        // Predicated region
        $region25: #{encoder_forward.1} parent=11 // pred_check
          %p262 = pneg %p128
        $region26: #{encoder_forward.1} parent=11 // pred_check_branch
          %264 = sbr.rel (%p262) target = $region28
        $region27: #{encoder_forward.1} parent=11 // pred_region
          _
        $region28: #{encoder_forward.1} parent=11 // pred_fallthru
          _
        // Predicated region
        $region29: #{encoder_forward.1} parent=11 // pred_check
          %p265 = pneg %p149
        $region30: #{encoder_forward.1} parent=11 // pred_check_branch
          %267 = sbr.rel (%p265) target = $region32
        $region31: #{encoder_forward.1} parent=11 // pred_region
          _
        $region32: #{encoder_forward.1} parent=11 // pred_fallthru
          _
        // Predicated region
        $region33: #{encoder_forward.1} parent=11 // pred_check
          %p268 = pneg %p170
        $region34: #{encoder_forward.1} parent=11 // pred_check_branch
          %270 = sbr.rel (%p268) target = $region36
        $region35: #{encoder_forward.1} parent=11 // pred_region
          _
        $region36: #{encoder_forward.1} parent=11 // pred_fallthru
          _
        // Predicated region
        $region37: #{encoder_forward.1} parent=11 // pred_check
          %p271 = pneg %p191
        $region38: #{encoder_forward.1} parent=11 // pred_check_branch
          %273 = sbr.rel (%p271) target = $region40
        $region39: #{encoder_forward.1} parent=11 // pred_region
          _
        $region40: #{encoder_forward.1} parent=11 // pred_fallthru
          _
        // Predicated region
        $region41: #{encoder_forward.1} parent=11 // pred_check
          %p274 = pneg %p212
        $region42: #{encoder_forward.1} parent=11 // pred_check_branch
          %276 = sbr.rel (%p274) target = $region44
        $region43: #{encoder_forward.1} parent=11 // pred_region
          _
        $region44: #{encoder_forward.1} parent=11 // pred_fallthru
          _
      $region12: #{encoder_forward.1} parent=5 // pred_fallthru
        _
      %p277 = scmp.lt.s32.totalorder %s18, 2
      // Predicated region
      $region45: #{encoder_forward.1} parent=5 // pred_check
        %p278 = pneg %p277
      $region46: #{encoder_forward.1} parent=5 // pred_check_branch
        %280 = sbr.rel (%p278) target = $region48
      $region47: #{encoder_forward.1} parent=5 // pred_region
        // Predicated region
        $region49: #{encoder_forward.1} parent=47 // pred_check
          %p281 = pneg %p38
        $region50: #{encoder_forward.1} parent=47 // pred_check_branch
          %283 = sbr.rel (%p281) target = $region52
        $region51: #{encoder_forward.1} parent=47 // pred_region
          %p284 = scmp.lt.s32.totalorder %s18, 1
          %s285 = scalar_select %p284, %s18, 1
          %s286 = smul.addr %s285, 54
          %s287 = smul.addr %s286, 8
          %s288 = scalar_lea.vmem %s0, %s287
        $region52: #{encoder_forward.1} parent=47 // pred_fallthru
          _
      $region48: #{encoder_forward.1} parent=5 // pred_fallthru
        _
      %p289 = scmp.le.s32.totalorder 1, %s18
      %p290 = scmp.lt.s32.totalorder %s18, 3
      %p291 = pnand %p289, %p290
      %p292 = pneg %p291
      // Predicated region
      $region53: #{encoder_forward.1} parent=5 // pred_check
        _
      $region54: #{encoder_forward.1} parent=5 // pred_check_branch
        %294 = sbr.rel (%p291) target = $region56
      $region55: #{encoder_forward.1} parent=5 // pred_region
        %s295 = ssub.s32 %s18, 1
        %p296 = scmp.lt.s32.totalorder %s23, 1
        %s297 = scalar_select %p296, %s23, 1
        %s298 = smul.addr %s297, 54
        %s299 = smul.addr %s298, 8
        %s300 = scalar_lea.vmem %s0, %s299
        %p301 = pneg %p44
        %p302 = pneg %p41
        %p303 = pneg %p65
        %p304 = pneg %p62
        %p305 = pneg %p86
        %p306 = pneg %p83
        %p307 = pneg %p107
        %p308 = pneg %p104
        %p309 = pneg %p128
        %p310 = pneg %p125
        %p311 = pneg %p149
        %p312 = pneg %p146
        %p313 = pneg %p170
        %p314 = pneg %p167
        %p315 = pneg %p191
        %p316 = pneg %p188
        %p317 = pneg %p212
        %p318 = pneg %p209
        %p319 = pneg %p238
        %p320 = pneg %p235
        %s321 = sand.u32 %s225, 1
        %s322 = scalar_lea.sflag [#allocation4], %s321
        %s323 = sand.u32 %s225, 1
        %s324 = scalar_lea.vmem [#allocation3], %s323
        %p325 = scmp.lt.s32.totalorder %s23, 1
        %s326 = scalar_select %p325, %s23, 1
        %s327 = smul.addr %s326, 54
        %s328 = smul.addr %s327, 8
        %s329 = scalar_lea.vmem %s0, %s328
        %v330 = vld [vmem:[%s329] sm:$0xff]
        %v331 = vld [vmem:[%s329 + $0x8] sm:$0xff]
        %v332 = vld [vmem:[%s329 + $0x18] sm:$0xff]
        %v333 = vld [vmem:[%s329 + $0x20] sm:$0xff]
        %v334 = vld [vmem:[%s329 + $0x30] sm:$0xff]
        %v335 = vld [vmem:[%s329 + $0x38] sm:$0xff]
        %v336 = vld [vmem:[%s329 + $0x48] sm:$0xff]
        %v337 = vld [vmem:[%s329 + $0x50] sm:$0xff]
        %v338 = vld [vmem:[%s329 + $0x60] sm:$0xff]
        %v339 = vld [vmem:[%s329 + $0x68] sm:$0xff]
        %v340 = vld [vmem:[%s329 + $0x78] sm:$0xff]
        %v341 = vld [vmem:[%s329 + $0x80] sm:$0xff]
        %v342 = vld [vmem:[%s329 + $0x90] sm:$0xff]
        %v343 = vld [vmem:[%s329 + $0x98] sm:$0xff]
        %v344 = vld [vmem:[%s329 + $0xa8] sm:$0xff]
        %v345 = vld [vmem:[%s329 + $0xb0] sm:$0xff]
        %v346 = vld [vmem:[%s329 + $0xc0] sm:$0xff]
        %v347 = vld [vmem:[%s329 + $0xc8] sm:$0xff]
        %v348 = vld [vmem:[%s329 + $0xd8] sm:$0xff]
        %v349 = vld [vmem:[%s329 + $0xe0] sm:$0xff]
        %v350 = vld [vmem:[%s329 + $0xf0] sm:$0xff]
        %v351 = vld [vmem:[%s329 + $0xf8] sm:$0xff]
        %v352 = vld [vmem:[%s329 + $0x108] sm:$0xff]
        %v353 = vld [vmem:[%s329 + $0x110] sm:$0xff]
        %v354 = vld [vmem:[%s329 + $0x120] sm:$0xff]
        %v355 = vld [vmem:[%s329 + $0x128] sm:$0xff]
        %v356 = vld [vmem:[%s329 + $0x138] sm:$0xff]
        %v357 = vld [vmem:[%s329 + $0x140] sm:$0xff]
        %v358 = vld [vmem:[%s329 + $0x150] sm:$0xff]
        %v359 = vld [vmem:[%s329 + $0x158] sm:$0xff]
        %v360 = vld [vmem:[%s329 + $0x168] sm:$0xff]
        %v361 = vld [vmem:[%s329 + $0x170] sm:$0xff]
        %v362 = vld [vmem:[%s1] sm:$0xf]
        %v363 = vld [vmem:[%s329 + $0x1] sm:$0xff]
        %v364 = vld [vmem:[%s329 + $0x9] sm:$0xff]
        %v365 = vld [vmem:[%s329 + $0x19] sm:$0xff]
        %v366 = vld [vmem:[%s329 + $0x21] sm:$0xff]
        %v367 = vld [vmem:[%s329 + $0x31] sm:$0xff]
        %v368 = vld [vmem:[%s329 + $0x39] sm:$0xff]
        %v369 = vld [vmem:[%s329 + $0x49] sm:$0xff]
        %v370 = vld [vmem:[%s329 + $0x51] sm:$0xff]
        %v371 = vld [vmem:[%s329 + $0x61] sm:$0xff]
        %v372 = vld [vmem:[%s329 + $0x69] sm:$0xff]
        %v373 = vld [vmem:[%s329 + $0x79] sm:$0xff]
        %v374 = vld [vmem:[%s329 + $0x81] sm:$0xff]
        %v375 = vld [vmem:[%s329 + $0x91] sm:$0xff]
        %v376 = vld [vmem:[%s329 + $0x99] sm:$0xff]
        %v377 = vld [vmem:[%s329 + $0xa9] sm:$0xff]
        %v378 = vld [vmem:[%s329 + $0xb1] sm:$0xff]
        %v379 = vld [vmem:[%s329 + $0xc1] sm:$0xff]
        %v380 = vld [vmem:[%s329 + $0xc9] sm:$0xff]
        %v381 = vld [vmem:[%s329 + $0xd9] sm:$0xff]
        %v382 = vld [vmem:[%s329 + $0xe1] sm:$0xff]
        %v383 = vld [vmem:[%s329 + $0xf1] sm:$0xff]
        %v384 = vld [vmem:[%s329 + $0xf9] sm:$0xff]
        %v385 = vld [vmem:[%s329 + $0x109] sm:$0xff]
        %v386 = vld [vmem:[%s329 + $0x111] sm:$0xff]
        %v387 = vld [vmem:[%s329 + $0x121] sm:$0xff]
        %v388 = vld [vmem:[%s329 + $0x129] sm:$0xff]
        %v389 = vld [vmem:[%s329 + $0x139] sm:$0xff]
        %v390 = vld [vmem:[%s329 + $0x141] sm:$0xff]
        %v391 = vld [vmem:[%s329 + $0x151] sm:$0xff]
        %v392 = vld [vmem:[%s329 + $0x159] sm:$0xff]
        %v393 = vld [vmem:[%s329 + $0x169] sm:$0xff]
        %v394 = vld [vmem:[%s329 + $0x171] sm:$0xff]
        %s395 = scalar_lea.vmem %s1, 4
        %v396 = vld [vmem:[%s395] sm:$0xf]
        %vm397 = vcmask 31744
        %v399 = vsel %vm397, %v363, 0
        %v402 = vsel %vm397, %v364, 0
        %v405 = vsel %vm397, %v365, 0
        %v408 = vsel %vm397, %v366, 0
        %v411 = vsel %vm397, %v367, 0
        %v414 = vsel %vm397, %v368, 0
        %v417 = vsel %vm397, %v369, 0
        %v420 = vsel %vm397, %v370, 0
        %v423 = vsel %vm397, %v371, 0
        %v426 = vsel %vm397, %v372, 0
        %v429 = vsel %vm397, %v373, 0
        %v432 = vsel %vm397, %v374, 0
        %v435 = vsel %vm397, %v375, 0
        %v438 = vsel %vm397, %v376, 0
        %v441 = vsel %vm397, %v377, 0
        %v444 = vsel %vm397, %v378, 0
        %v447 = vsel %vm397, %v379, 0
        %v450 = vsel %vm397, %v380, 0
        %v453 = vsel %vm397, %v381, 0
        %v456 = vsel %vm397, %v382, 0
        %v459 = vsel %vm397, %v383, 0
        %v462 = vsel %vm397, %v384, 0
        %v465 = vsel %vm397, %v385, 0
        %v468 = vsel %vm397, %v386, 0
        %v471 = vsel %vm397, %v387, 0
        %v474 = vsel %vm397, %v388, 0
        %v477 = vsel %vm397, %v389, 0
        %v480 = vsel %vm397, %v390, 0
        %v483 = vsel %vm397, %v391, 0
        %v486 = vsel %vm397, %v392, 0
        %v489 = vsel %vm397, %v393, 0
        %v492 = vsel %vm397, %v394, 0
        %vm494 = vcmask 1043456
        %v496 = vsel %vm494, %v396, 0
        %498 = vmatpush.msra.mxu0 0.0
        %499 = vmatpush.msra.mxu0 0.0
        %500 = vmatpush.msra.mxu0 0.0
        %501 = vmatpush.msra.mxu0 0.0
        %502 = vmatpush.msra.mxu0 0.0
        %503 = vmatpush.msra.mxu0 0.0
        %504 = vmatpush.msra.mxu0 0.0
        %505 = vmatpush.msra.mxu0 0.0
        %506 = vmatpush.msra.mxu0 0.0
        %507 = vmatpush.msra.mxu0 0.0
        %508 = vmatpush.msra.mxu0 0.0
        %509 = vmatpush.msra.mxu0 0.0
        %510 = vmatpush.msra.mxu0 0.0
        %511 = vmatpush.msra.mxu0 0.0
        %512 = vmatpush.msra.mxu0 0.0
        %513 = vmatpush.msra.mxu0 %v496
        %514 = vmatmul.f32.gmra.mxu0 %v399
        %v515 = vpop.f32.mrf.mxu0
        %v516 = vadd.f32 0.0, %v515
        %517 = vmatmul.f32.gmra.mxu0 %v402
        %v518 = vpop.f32.mrf.mxu0
        %v519 = vadd.f32 0.0, %v518
        %520 = vmatmul.f32.gmra.mxu0 %v405
        %v521 = vpop.f32.mrf.mxu0
        %v522 = vadd.f32 0.0, %v521
        %523 = vmatmul.f32.gmra.mxu0 %v408
        %v524 = vpop.f32.mrf.mxu0
        %v525 = vadd.f32 0.0, %v524
        %526 = vmatmul.f32.gmra.mxu0 %v411
        %v527 = vpop.f32.mrf.mxu0
        %v528 = vadd.f32 0.0, %v527
        %529 = vmatmul.f32.gmra.mxu0 %v414
        %v530 = vpop.f32.mrf.mxu0
        %v531 = vadd.f32 0.0, %v530
        %532 = vmatmul.f32.gmra.mxu0 %v417
        %v533 = vpop.f32.mrf.mxu0
        %v534 = vadd.f32 0.0, %v533
        %535 = vmatmul.f32.gmra.mxu0 %v420
        %v536 = vpop.f32.mrf.mxu0
        %v537 = vadd.f32 0.0, %v536
        %538 = vmatmul.f32.gmra.mxu0 %v423
        %v539 = vpop.f32.mrf.mxu0
        %v540 = vadd.f32 0.0, %v539
        %541 = vmatmul.f32.gmra.mxu0 %v426
        %v542 = vpop.f32.mrf.mxu0
        %v543 = vadd.f32 0.0, %v542
        %544 = vmatmul.f32.gmra.mxu0 %v429
        %v545 = vpop.f32.mrf.mxu0
        %v546 = vadd.f32 0.0, %v545
        %547 = vmatmul.f32.gmra.mxu0 %v432
        %v548 = vpop.f32.mrf.mxu0
        %v549 = vadd.f32 0.0, %v548
        %550 = vmatmul.f32.gmra.mxu0 %v435
        %v551 = vpop.f32.mrf.mxu0
        %v552 = vadd.f32 0.0, %v551
        %553 = vmatmul.f32.gmra.mxu0 %v438
        %v554 = vpop.f32.mrf.mxu0
        %v555 = vadd.f32 0.0, %v554
        %556 = vmatmul.f32.gmra.mxu0 %v441
        %v557 = vpop.f32.mrf.mxu0
        %v558 = vadd.f32 0.0, %v557
        %559 = vmatmul.f32.gmra.mxu0 %v444
        %v560 = vpop.f32.mrf.mxu0
        %v561 = vadd.f32 0.0, %v560
        %562 = vmatmul.f32.gmra.mxu0 %v447
        %v563 = vpop.f32.mrf.mxu0
        %v564 = vadd.f32 0.0, %v563
        %565 = vmatmul.f32.gmra.mxu0 %v450
        %v566 = vpop.f32.mrf.mxu0
        %v567 = vadd.f32 0.0, %v566
        %568 = vmatmul.f32.gmra.mxu0 %v453
        %v569 = vpop.f32.mrf.mxu0
        %v570 = vadd.f32 0.0, %v569
        %571 = vmatmul.f32.gmra.mxu0 %v456
        %v572 = vpop.f32.mrf.mxu0
        %v573 = vadd.f32 0.0, %v572
        %574 = vmatmul.f32.gmra.mxu0 %v459
        %v575 = vpop.f32.mrf.mxu0
        %v576 = vadd.f32 0.0, %v575
        %577 = vmatmul.f32.gmra.mxu0 %v462
        %v578 = vpop.f32.mrf.mxu0
        %v579 = vadd.f32 0.0, %v578
        %580 = vmatmul.f32.gmra.mxu0 %v465
        %v581 = vpop.f32.mrf.mxu0
        %v582 = vadd.f32 0.0, %v581
        %583 = vmatmul.f32.gmra.mxu0 %v468
        %v584 = vpop.f32.mrf.mxu0
        %v585 = vadd.f32 0.0, %v584
        %586 = vmatmul.f32.gmra.mxu0 %v471
        %v587 = vpop.f32.mrf.mxu0
        %v588 = vadd.f32 0.0, %v587
        %589 = vmatmul.f32.gmra.mxu0 %v474
        %v590 = vpop.f32.mrf.mxu0
        %v591 = vadd.f32 0.0, %v590
        %592 = vmatmul.f32.gmra.mxu0 %v477
        %v593 = vpop.f32.mrf.mxu0
        %v594 = vadd.f32 0.0, %v593
        %595 = vmatmul.f32.gmra.mxu0 %v480
        %v596 = vpop.f32.mrf.mxu0
        %v597 = vadd.f32 0.0, %v596
        %598 = vmatmul.f32.gmra.mxu0 %v483
        %v599 = vpop.f32.mrf.mxu0
        %v600 = vadd.f32 0.0, %v599
        %601 = vmatmul.f32.gmra.mxu0 %v486
        %v602 = vpop.f32.mrf.mxu0
        %v603 = vadd.f32 0.0, %v602
        %604 = vmatmul.f32.gmra.mxu0 %v489
        %v605 = vpop.f32.mrf.mxu0
        %v606 = vadd.f32 0.0, %v605
        %607 = vmatmul.f32.gmra.mxu0 %v492
        %v608 = vpop.f32.mrf.mxu0
        %v609 = vadd.f32 0.0, %v608
        %610 = vdwg.mxu0
        %v612 = vsel %vm397, %v330, 0
        %v615 = vsel %vm397, %v331, 0
        %v618 = vsel %vm397, %v332, 0
        %v621 = vsel %vm397, %v333, 0
        %v624 = vsel %vm397, %v334, 0
        %v627 = vsel %vm397, %v335, 0
        %v630 = vsel %vm397, %v336, 0
        %v633 = vsel %vm397, %v337, 0
        %v636 = vsel %vm397, %v338, 0
        %v639 = vsel %vm397, %v339, 0
        %v642 = vsel %vm397, %v340, 0
        %v645 = vsel %vm397, %v341, 0
        %v648 = vsel %vm397, %v342, 0
        %v651 = vsel %vm397, %v343, 0
        %v654 = vsel %vm397, %v344, 0
        %v657 = vsel %vm397, %v345, 0
        %v660 = vsel %vm397, %v346, 0
        %v663 = vsel %vm397, %v347, 0
        %v666 = vsel %vm397, %v348, 0
        %v669 = vsel %vm397, %v349, 0
        %v672 = vsel %vm397, %v350, 0
        %v675 = vsel %vm397, %v351, 0
        %v678 = vsel %vm397, %v352, 0
        %v681 = vsel %vm397, %v353, 0
        %v684 = vsel %vm397, %v354, 0
        %v687 = vsel %vm397, %v355, 0
        %v690 = vsel %vm397, %v356, 0
        %v693 = vsel %vm397, %v357, 0
        %v696 = vsel %vm397, %v358, 0
        %v699 = vsel %vm397, %v359, 0
        %v702 = vsel %vm397, %v360, 0
        %v705 = vsel %vm397, %v361, 0
        %v708 = vsel %vm494, %v362, 0
        %710 = vmatpush.msra.mxu0 0.0
        %711 = vmatpush.msra.mxu0 0.0
        %712 = vmatpush.msra.mxu0 0.0
        %713 = vmatpush.msra.mxu0 0.0
        %714 = vmatpush.msra.mxu0 0.0
        %715 = vmatpush.msra.mxu0 0.0
        %716 = vmatpush.msra.mxu0 0.0
        %717 = vmatpush.msra.mxu0 0.0
        %718 = vmatpush.msra.mxu0 0.0
        %719 = vmatpush.msra.mxu0 0.0
        %720 = vmatpush.msra.mxu0 0.0
        %721 = vmatpush.msra.mxu0 0.0
        %722 = vmatpush.msra.mxu0 0.0
        %723 = vmatpush.msra.mxu0 0.0
        %724 = vmatpush.msra.mxu0 0.0
        %725 = vmatpush.msra.mxu0 %v708
        %726 = vmatmul.f32.gmra.mxu0 %v612
        %v727 = vpop.f32.mrf.mxu0
        %v728 = vadd.f32 %v516, %v727
        %729 = vmatmul.f32.gmra.mxu0 %v615
        %v730 = vpop.f32.mrf.mxu0
        %v731 = vadd.f32 %v519, %v730
        %732 = vmatmul.f32.gmra.mxu0 %v618
        %v733 = vpop.f32.mrf.mxu0
        %v734 = vadd.f32 %v522, %v733
        %735 = vmatmul.f32.gmra.mxu0 %v621
        %v736 = vpop.f32.mrf.mxu0
        %v737 = vadd.f32 %v525, %v736
        %738 = vmatmul.f32.gmra.mxu0 %v624
        %v739 = vpop.f32.mrf.mxu0
        %v740 = vadd.f32 %v528, %v739
        %741 = vmatmul.f32.gmra.mxu0 %v627
        %v742 = vpop.f32.mrf.mxu0
        %v743 = vadd.f32 %v531, %v742
        %744 = vmatmul.f32.gmra.mxu0 %v630
        %v745 = vpop.f32.mrf.mxu0
        %v746 = vadd.f32 %v534, %v745
        %747 = vmatmul.f32.gmra.mxu0 %v633
        %v748 = vpop.f32.mrf.mxu0
        %v749 = vadd.f32 %v537, %v748
        %750 = vmatmul.f32.gmra.mxu0 %v636
        %v751 = vpop.f32.mrf.mxu0
        %v752 = vadd.f32 %v540, %v751
        %753 = vmatmul.f32.gmra.mxu0 %v639
        %v754 = vpop.f32.mrf.mxu0
        %v755 = vadd.f32 %v543, %v754
        %756 = vmatmul.f32.gmra.mxu0 %v642
        %v757 = vpop.f32.mrf.mxu0
        %v758 = vadd.f32 %v546, %v757
        %759 = vmatmul.f32.gmra.mxu0 %v645
        %v760 = vpop.f32.mrf.mxu0
        %v761 = vadd.f32 %v549, %v760
        %762 = vmatmul.f32.gmra.mxu0 %v648
        %v763 = vpop.f32.mrf.mxu0
        %v764 = vadd.f32 %v552, %v763
        %765 = vmatmul.f32.gmra.mxu0 %v651
        %v766 = vpop.f32.mrf.mxu0
        %v767 = vadd.f32 %v555, %v766
        %768 = vmatmul.f32.gmra.mxu0 %v654
        %v769 = vpop.f32.mrf.mxu0
        %v770 = vadd.f32 %v558, %v769
        %771 = vmatmul.f32.gmra.mxu0 %v657
        %v772 = vpop.f32.mrf.mxu0
        %v773 = vadd.f32 %v561, %v772
        %774 = vmatmul.f32.gmra.mxu0 %v660
        %v775 = vpop.f32.mrf.mxu0
        %v776 = vadd.f32 %v564, %v775
        %777 = vmatmul.f32.gmra.mxu0 %v663
        %v778 = vpop.f32.mrf.mxu0
        %v779 = vadd.f32 %v567, %v778
        %780 = vmatmul.f32.gmra.mxu0 %v666
        %v781 = vpop.f32.mrf.mxu0
        %v782 = vadd.f32 %v570, %v781
        %783 = vmatmul.f32.gmra.mxu0 %v669
        %v784 = vpop.f32.mrf.mxu0
        %v785 = vadd.f32 %v573, %v784
        %786 = vmatmul.f32.gmra.mxu0 %v672
        %v787 = vpop.f32.mrf.mxu0
        %v788 = vadd.f32 %v576, %v787
        %789 = vmatmul.f32.gmra.mxu0 %v675
        %v790 = vpop.f32.mrf.mxu0
        %v791 = vadd.f32 %v579, %v790
        %792 = vmatmul.f32.gmra.mxu0 %v678
        %v793 = vpop.f32.mrf.mxu0
        %v794 = vadd.f32 %v582, %v793
        %795 = vmatmul.f32.gmra.mxu0 %v681
        %v796 = vpop.f32.mrf.mxu0
        %v797 = vadd.f32 %v585, %v796
        %798 = vmatmul.f32.gmra.mxu0 %v684
        %v799 = vpop.f32.mrf.mxu0
        %v800 = vadd.f32 %v588, %v799
        %801 = vmatmul.f32.gmra.mxu0 %v687
        %v802 = vpop.f32.mrf.mxu0
        %v803 = vadd.f32 %v591, %v802
        %804 = vmatmul.f32.gmra.mxu0 %v690
        %v805 = vpop.f32.mrf.mxu0
        %v806 = vadd.f32 %v594, %v805
        %807 = vmatmul.f32.gmra.mxu0 %v693
        %v808 = vpop.f32.mrf.mxu0
        %v809 = vadd.f32 %v597, %v808
        %810 = vmatmul.f32.gmra.mxu0 %v696
        %v811 = vpop.f32.mrf.mxu0
        %v812 = vadd.f32 %v600, %v811
        %813 = vmatmul.f32.gmra.mxu0 %v699
        %v814 = vpop.f32.mrf.mxu0
        %v815 = vadd.f32 %v603, %v814
        %816 = vmatmul.f32.gmra.mxu0 %v702
        %v817 = vpop.f32.mrf.mxu0
        %v818 = vadd.f32 %v606, %v817
        %819 = vmatmul.f32.gmra.mxu0 %v705
        %v820 = vpop.f32.mrf.mxu0
        %v821 = vadd.f32 %v609, %v820
        %822 = vdwg.mxu0
        %v823 = vld [vmem:[%s329 + $0x2] sm:$0xff]
        %v824 = vld [vmem:[%s329 + $0xa] sm:$0xff]
        %v825 = vld [vmem:[%s329 + $0x1a] sm:$0xff]
        %v826 = vld [vmem:[%s329 + $0x22] sm:$0xff]
        %v827 = vld [vmem:[%s329 + $0x32] sm:$0xff]
        %v828 = vld [vmem:[%s329 + $0x3a] sm:$0xff]
        %v829 = vld [vmem:[%s329 + $0x4a] sm:$0xff]
        %v830 = vld [vmem:[%s329 + $0x52] sm:$0xff]
        %v831 = vld [vmem:[%s329 + $0x62] sm:$0xff]
        %v832 = vld [vmem:[%s329 + $0x6a] sm:$0xff]
        %v833 = vld [vmem:[%s329 + $0x7a] sm:$0xff]
        %v834 = vld [vmem:[%s329 + $0x82] sm:$0xff]
        %v835 = vld [vmem:[%s329 + $0x92] sm:$0xff]
        %v836 = vld [vmem:[%s329 + $0x9a] sm:$0xff]
        %v837 = vld [vmem:[%s329 + $0xaa] sm:$0xff]
        %v838 = vld [vmem:[%s329 + $0xb2] sm:$0xff]
        %v839 = vld [vmem:[%s329 + $0xc2] sm:$0xff]
        %v840 = vld [vmem:[%s329 + $0xca] sm:$0xff]
        %v841 = vld [vmem:[%s329 + $0xda] sm:$0xff]
        %v842 = vld [vmem:[%s329 + $0xe2] sm:$0xff]
        %v843 = vld [vmem:[%s329 + $0xf2] sm:$0xff]
        %v844 = vld [vmem:[%s329 + $0xfa] sm:$0xff]
        %v845 = vld [vmem:[%s329 + $0x10a] sm:$0xff]
        %v846 = vld [vmem:[%s329 + $0x112] sm:$0xff]
        %v847 = vld [vmem:[%s329 + $0x122] sm:$0xff]
        %v848 = vld [vmem:[%s329 + $0x12a] sm:$0xff]
        %v849 = vld [vmem:[%s329 + $0x13a] sm:$0xff]
        %v850 = vld [vmem:[%s329 + $0x142] sm:$0xff]
        %v851 = vld [vmem:[%s329 + $0x152] sm:$0xff]
        %v852 = vld [vmem:[%s329 + $0x15a] sm:$0xff]
        %v853 = vld [vmem:[%s329 + $0x16a] sm:$0xff]
        %v854 = vld [vmem:[%s329 + $0x172] sm:$0xff]
        %s855 = scalar_lea.vmem %s1, 8
        %v856 = vld [vmem:[%s855] sm:$0xf]
        %v858 = vsel %vm397, %v823, 0
        %v861 = vsel %vm397, %v824, 0
        %v864 = vsel %vm397, %v825, 0
        %v867 = vsel %vm397, %v826, 0
        %v870 = vsel %vm397, %v827, 0
        %v873 = vsel %vm397, %v828, 0
        %v876 = vsel %vm397, %v829, 0
        %v879 = vsel %vm397, %v830, 0
        %v882 = vsel %vm397, %v831, 0
        %v885 = vsel %vm397, %v832, 0
        %v888 = vsel %vm397, %v833, 0
        %v891 = vsel %vm397, %v834, 0
        %v894 = vsel %vm397, %v835, 0
        %v897 = vsel %vm397, %v836, 0
        %v900 = vsel %vm397, %v837, 0
        %v903 = vsel %vm397, %v838, 0
        %v906 = vsel %vm397, %v839, 0
        %v909 = vsel %vm397, %v840, 0
        %v912 = vsel %vm397, %v841, 0
        %v915 = vsel %vm397, %v842, 0
        %v918 = vsel %vm397, %v843, 0
        %v921 = vsel %vm397, %v844, 0
        %v924 = vsel %vm397, %v845, 0
        %v927 = vsel %vm397, %v846, 0
        %v930 = vsel %vm397, %v847, 0
        %v933 = vsel %vm397, %v848, 0
        %v936 = vsel %vm397, %v849, 0
        %v939 = vsel %vm397, %v850, 0
        %v942 = vsel %vm397, %v851, 0
        %v945 = vsel %vm397, %v852, 0
        %v948 = vsel %vm397, %v853, 0
        %v951 = vsel %vm397, %v854, 0
        %v954 = vsel %vm494, %v856, 0
        %956 = vmatpush.msra.mxu0 0.0
        %957 = vmatpush.msra.mxu0 0.0
        %958 = vmatpush.msra.mxu0 0.0
        %959 = vmatpush.msra.mxu0 0.0
        %960 = vmatpush.msra.mxu0 0.0
        %961 = vmatpush.msra.mxu0 0.0
        %962 = vmatpush.msra.mxu0 0.0
        %963 = vmatpush.msra.mxu0 0.0
        %964 = vmatpush.msra.mxu0 0.0
        %965 = vmatpush.msra.mxu0 0.0
        %966 = vmatpush.msra.mxu0 0.0
        %967 = vmatpush.msra.mxu0 0.0
        %968 = vmatpush.msra.mxu0 0.0
        %969 = vmatpush.msra.mxu0 0.0
        %970 = vmatpush.msra.mxu0 0.0
        %971 = vmatpush.msra.mxu0 %v954
        %972 = vmatmul.f32.gmra.mxu0 %v858
        %v973 = vpop.f32.mrf.mxu0
        %v974 = vadd.f32 0.0, %v973
        %975 = vmatmul.f32.gmra.mxu0 %v861
        %v976 = vpop.f32.mrf.mxu0
        %v977 = vadd.f32 0.0, %v976
        %978 = vmatmul.f32.gmra.mxu0 %v864
        %v979 = vpop.f32.mrf.mxu0
        %v980 = vadd.f32 0.0, %v979
        %981 = vmatmul.f32.gmra.mxu0 %v867
        %v982 = vpop.f32.mrf.mxu0
        %v983 = vadd.f32 0.0, %v982
        %984 = vmatmul.f32.gmra.mxu0 %v870
        %v985 = vpop.f32.mrf.mxu0
        %v986 = vadd.f32 0.0, %v985
        %987 = vmatmul.f32.gmra.mxu0 %v873
        %v988 = vpop.f32.mrf.mxu0
        %v989 = vadd.f32 0.0, %v988
        %990 = vmatmul.f32.gmra.mxu0 %v876
        %v991 = vpop.f32.mrf.mxu0
        %v992 = vadd.f32 0.0, %v991
        %993 = vmatmul.f32.gmra.mxu0 %v879
        %v994 = vpop.f32.mrf.mxu0
        %v995 = vadd.f32 0.0, %v994
        %996 = vmatmul.f32.gmra.mxu0 %v882
        %v997 = vpop.f32.mrf.mxu0
        %v998 = vadd.f32 0.0, %v997
        %999 = vmatmul.f32.gmra.mxu0 %v885
        %v1000 = vpop.f32.mrf.mxu0
        %v1001 = vadd.f32 0.0, %v1000
        %1002 = vmatmul.f32.gmra.mxu0 %v888
        %v1003 = vpop.f32.mrf.mxu0
        %v1004 = vadd.f32 0.0, %v1003
        %1005 = vmatmul.f32.gmra.mxu0 %v891
        %v1006 = vpop.f32.mrf.mxu0
        %v1007 = vadd.f32 0.0, %v1006
        %1008 = vmatmul.f32.gmra.mxu0 %v894
        %v1009 = vpop.f32.mrf.mxu0
        %v1010 = vadd.f32 0.0, %v1009
        %1011 = vmatmul.f32.gmra.mxu0 %v897
        %v1012 = vpop.f32.mrf.mxu0
        %v1013 = vadd.f32 0.0, %v1012
        %1014 = vmatmul.f32.gmra.mxu0 %v900
        %v1015 = vpop.f32.mrf.mxu0
        %v1016 = vadd.f32 0.0, %v1015
        %1017 = vmatmul.f32.gmra.mxu0 %v903
        %v1018 = vpop.f32.mrf.mxu0
        %v1019 = vadd.f32 0.0, %v1018
        %1020 = vmatmul.f32.gmra.mxu0 %v906
        %v1021 = vpop.f32.mrf.mxu0
        %v1022 = vadd.f32 0.0, %v1021
        %1023 = vmatmul.f32.gmra.mxu0 %v909
        %v1024 = vpop.f32.mrf.mxu0
        %v1025 = vadd.f32 0.0, %v1024
        %1026 = vmatmul.f32.gmra.mxu0 %v912
        %v1027 = vpop.f32.mrf.mxu0
        %v1028 = vadd.f32 0.0, %v1027
        %1029 = vmatmul.f32.gmra.mxu0 %v915
        %v1030 = vpop.f32.mrf.mxu0
        %v1031 = vadd.f32 0.0, %v1030
        %1032 = vmatmul.f32.gmra.mxu0 %v918
        %v1033 = vpop.f32.mrf.mxu0
        %v1034 = vadd.f32 0.0, %v1033
        %1035 = vmatmul.f32.gmra.mxu0 %v921
        %v1036 = vpop.f32.mrf.mxu0
        %v1037 = vadd.f32 0.0, %v1036
        %1038 = vmatmul.f32.gmra.mxu0 %v924
        %v1039 = vpop.f32.mrf.mxu0
        %v1040 = vadd.f32 0.0, %v1039
        %1041 = vmatmul.f32.gmra.mxu0 %v927
        %v1042 = vpop.f32.mrf.mxu0
        %v1043 = vadd.f32 0.0, %v1042
        %1044 = vmatmul.f32.gmra.mxu0 %v930
        %v1045 = vpop.f32.mrf.mxu0
        %v1046 = vadd.f32 0.0, %v1045
        %1047 = vmatmul.f32.gmra.mxu0 %v933
        %v1048 = vpop.f32.mrf.mxu0
        %v1049 = vadd.f32 0.0, %v1048
        %1050 = vmatmul.f32.gmra.mxu0 %v936
        %v1051 = vpop.f32.mrf.mxu0
        %v1052 = vadd.f32 0.0, %v1051
        %1053 = vmatmul.f32.gmra.mxu0 %v939
        %v1054 = vpop.f32.mrf.mxu0
        %v1055 = vadd.f32 0.0, %v1054
        %1056 = vmatmul.f32.gmra.mxu0 %v942
        %v1057 = vpop.f32.mrf.mxu0
        %v1058 = vadd.f32 0.0, %v1057
        %1059 = vmatmul.f32.gmra.mxu0 %v945
        %v1060 = vpop.f32.mrf.mxu0
        %v1061 = vadd.f32 0.0, %v1060
        %1062 = vmatmul.f32.gmra.mxu0 %v948
        %v1063 = vpop.f32.mrf.mxu0
        %v1064 = vadd.f32 0.0, %v1063
        %1065 = vmatmul.f32.gmra.mxu0 %v951
        %v1066 = vpop.f32.mrf.mxu0
        %v1067 = vadd.f32 0.0, %v1066
        %1068 = vdwg.mxu0
        %v1069 = vadd.f32 %v728, %v974
        %v1070 = vadd.f32 %v731, %v977
        %v1071 = vadd.f32 %v734, %v980
        %v1072 = vadd.f32 %v737, %v983
        %v1073 = vadd.f32 %v740, %v986
        %v1074 = vadd.f32 %v743, %v989
        %v1075 = vadd.f32 %v746, %v992
        %v1076 = vadd.f32 %v749, %v995
        %v1077 = vadd.f32 %v752, %v998
        %v1078 = vadd.f32 %v755, %v1001
        %v1079 = vadd.f32 %v758, %v1004
        %v1080 = vadd.f32 %v761, %v1007
        %v1081 = vadd.f32 %v764, %v1010
        %v1082 = vadd.f32 %v767, %v1013
        %v1083 = vadd.f32 %v770, %v1016
        %v1084 = vadd.f32 %v773, %v1019
        %v1085 = vadd.f32 %v776, %v1022
        %v1086 = vadd.f32 %v779, %v1025
        %v1087 = vadd.f32 %v782, %v1028
        %v1088 = vadd.f32 %v785, %v1031
        %v1089 = vadd.f32 %v788, %v1034
        %v1090 = vadd.f32 %v791, %v1037
        %v1091 = vadd.f32 %v794, %v1040
        %v1092 = vadd.f32 %v797, %v1043
        %v1093 = vadd.f32 %v800, %v1046
        %v1094 = vadd.f32 %v803, %v1049
        %v1095 = vadd.f32 %v806, %v1052
        %v1096 = vadd.f32 %v809, %v1055
        %v1097 = vadd.f32 %v812, %v1058
        %v1098 = vadd.f32 %v815, %v1061
        %v1099 = vadd.f32 %v818, %v1064
        %v1100 = vadd.f32 %v821, %v1067
        %s1101 = scalar_lea.vmem %s329, 24
        %v1102 = vld [vmem:[%s1101] sm:$0xff]
        %v1103 = vld [vmem:[%s1101 + $0x8] sm:$0xff]
        %v1104 = vld [vmem:[%s1101 + $0x18] sm:$0xff]
        %v1105 = vld [vmem:[%s1101 + $0x20] sm:$0xff]
        %v1106 = vld [vmem:[%s1101 + $0x30] sm:$0xff]
        %v1107 = vld [vmem:[%s1101 + $0x38] sm:$0xff]
        %v1108 = vld [vmem:[%s1101 + $0x48] sm:$0xff]
        %v1109 = vld [vmem:[%s1101 + $0x50] sm:$0xff]
        %v1110 = vld [vmem:[%s1101 + $0x60] sm:$0xff]
        %v1111 = vld [vmem:[%s1101 + $0x68] sm:$0xff]
        %v1112 = vld [vmem:[%s1101 + $0x78] sm:$0xff]
        %v1113 = vld [vmem:[%s1101 + $0x80] sm:$0xff]
        %v1114 = vld [vmem:[%s1101 + $0x90] sm:$0xff]
        %v1115 = vld [vmem:[%s1101 + $0x98] sm:$0xff]
        %v1116 = vld [vmem:[%s1101 + $0xa8] sm:$0xff]
        %v1117 = vld [vmem:[%s1101 + $0xb0] sm:$0xff]
        %v1118 = vld [vmem:[%s1101 + $0xc0] sm:$0xff]
        %v1119 = vld [vmem:[%s1101 + $0xc8] sm:$0xff]
        %v1120 = vld [vmem:[%s1101 + $0xd8] sm:$0xff]
        %v1121 = vld [vmem:[%s1101 + $0xe0] sm:$0xff]
        %v1122 = vld [vmem:[%s1101 + $0xf0] sm:$0xff]
        %v1123 = vld [vmem:[%s1101 + $0xf8] sm:$0xff]
        %v1124 = vld [vmem:[%s1101 + $0x108] sm:$0xff]
        %v1125 = vld [vmem:[%s1101 + $0x110] sm:$0xff]
        %v1126 = vld [vmem:[%s1101 + $0x120] sm:$0xff]
        %v1127 = vld [vmem:[%s1101 + $0x128] sm:$0xff]
        %v1128 = vld [vmem:[%s1101 + $0x138] sm:$0xff]
        %v1129 = vld [vmem:[%s1101 + $0x140] sm:$0xff]
        %v1130 = vld [vmem:[%s1101 + $0x150] sm:$0xff]
        %v1131 = vld [vmem:[%s1101 + $0x158] sm:$0xff]
        %v1132 = vld [vmem:[%s1101 + $0x168] sm:$0xff]
        %v1133 = vld [vmem:[%s1101 + $0x170] sm:$0xff]
        %s1134 = scalar_lea.vmem %s1, 12
        %v1135 = vld [vmem:[%s1134] sm:$0xf]
        %v1137 = vsel %vm397, %v1102, 0
        %v1140 = vsel %vm397, %v1103, 0
        %v1143 = vsel %vm397, %v1104, 0
        %v1146 = vsel %vm397, %v1105, 0
        %v1149 = vsel %vm397, %v1106, 0
        %v1152 = vsel %vm397, %v1107, 0
        %v1155 = vsel %vm397, %v1108, 0
        %v1158 = vsel %vm397, %v1109, 0
        %v1161 = vsel %vm397, %v1110, 0
        %v1164 = vsel %vm397, %v1111, 0
        %v1167 = vsel %vm397, %v1112, 0
        %v1170 = vsel %vm397, %v1113, 0
        %v1173 = vsel %vm397, %v1114, 0
        %v1176 = vsel %vm397, %v1115, 0
        %v1179 = vsel %vm397, %v1116, 0
        %v1182 = vsel %vm397, %v1117, 0
        %v1185 = vsel %vm397, %v1118, 0
        %v1188 = vsel %vm397, %v1119, 0
        %v1191 = vsel %vm397, %v1120, 0
        %v1194 = vsel %vm397, %v1121, 0
        %v1197 = vsel %vm397, %v1122, 0
        %v1200 = vsel %vm397, %v1123, 0
        %v1203 = vsel %vm397, %v1124, 0
        %v1206 = vsel %vm397, %v1125, 0
        %v1209 = vsel %vm397, %v1126, 0
        %v1212 = vsel %vm397, %v1127, 0
        %v1215 = vsel %vm397, %v1128, 0
        %v1218 = vsel %vm397, %v1129, 0
        %v1221 = vsel %vm397, %v1130, 0
        %v1224 = vsel %vm397, %v1131, 0
        %v1227 = vsel %vm397, %v1132, 0
        %v1230 = vsel %vm397, %v1133, 0
        %v1233 = vsel %vm494, %v1135, 0
        %1235 = vmatpush.msra.mxu0 0.0
        %1236 = vmatpush.msra.mxu0 0.0
        %1237 = vmatpush.msra.mxu0 0.0
        %1238 = vmatpush.msra.mxu0 0.0
        %1239 = vmatpush.msra.mxu0 0.0
        %1240 = vmatpush.msra.mxu0 0.0
        %1241 = vmatpush.msra.mxu0 0.0
        %1242 = vmatpush.msra.mxu0 0.0
        %1243 = vmatpush.msra.mxu0 0.0
        %1244 = vmatpush.msra.mxu0 0.0
        %1245 = vmatpush.msra.mxu0 0.0
        %1246 = vmatpush.msra.mxu0 0.0
        %1247 = vmatpush.msra.mxu0 0.0
        %1248 = vmatpush.msra.mxu0 0.0
        %1249 = vmatpush.msra.mxu0 0.0
        %1250 = vmatpush.msra.mxu0 %v1233
        %1251 = vmatmul.f32.gmra.mxu0 %v1137
        %v1252 = vpop.f32.mrf.mxu0
        %v1253 = vadd.f32 0.0, %v1252
        %1254 = vmatmul.f32.gmra.mxu0 %v1140
        %v1255 = vpop.f32.mrf.mxu0
        %v1256 = vadd.f32 0.0, %v1255
        %1257 = vmatmul.f32.gmra.mxu0 %v1143
        %v1258 = vpop.f32.mrf.mxu0
        %v1259 = vadd.f32 0.0, %v1258
        %1260 = vmatmul.f32.gmra.mxu0 %v1146
        %v1261 = vpop.f32.mrf.mxu0
        %v1262 = vadd.f32 0.0, %v1261
        %1263 = vmatmul.f32.gmra.mxu0 %v1149
        %v1264 = vpop.f32.mrf.mxu0
        %v1265 = vadd.f32 0.0, %v1264
        %1266 = vmatmul.f32.gmra.mxu0 %v1152
        %v1267 = vpop.f32.mrf.mxu0
        %v1268 = vadd.f32 0.0, %v1267
        %1269 = vmatmul.f32.gmra.mxu0 %v1155
        %v1270 = vpop.f32.mrf.mxu0
        %v1271 = vadd.f32 0.0, %v1270
        %1272 = vmatmul.f32.gmra.mxu0 %v1158
        %v1273 = vpop.f32.mrf.mxu0
        %v1274 = vadd.f32 0.0, %v1273
        %1275 = vmatmul.f32.gmra.mxu0 %v1161
        %v1276 = vpop.f32.mrf.mxu0
        %v1277 = vadd.f32 0.0, %v1276
        %1278 = vmatmul.f32.gmra.mxu0 %v1164
        %v1279 = vpop.f32.mrf.mxu0
        %v1280 = vadd.f32 0.0, %v1279
        %1281 = vmatmul.f32.gmra.mxu0 %v1167
        %v1282 = vpop.f32.mrf.mxu0
        %v1283 = vadd.f32 0.0, %v1282
        %1284 = vmatmul.f32.gmra.mxu0 %v1170
        %v1285 = vpop.f32.mrf.mxu0
        %v1286 = vadd.f32 0.0, %v1285
        %1287 = vmatmul.f32.gmra.mxu0 %v1173
        %v1288 = vpop.f32.mrf.mxu0
        %v1289 = vadd.f32 0.0, %v1288
        %1290 = vmatmul.f32.gmra.mxu0 %v1176
        %v1291 = vpop.f32.mrf.mxu0
        %v1292 = vadd.f32 0.0, %v1291
        %1293 = vmatmul.f32.gmra.mxu0 %v1179
        %v1294 = vpop.f32.mrf.mxu0
        %v1295 = vadd.f32 0.0, %v1294
        %1296 = vmatmul.f32.gmra.mxu0 %v1182
        %v1297 = vpop.f32.mrf.mxu0
        %v1298 = vadd.f32 0.0, %v1297
        %1299 = vmatmul.f32.gmra.mxu0 %v1185
        %v1300 = vpop.f32.mrf.mxu0
        %v1301 = vadd.f32 0.0, %v1300
        %1302 = vmatmul.f32.gmra.mxu0 %v1188
        %v1303 = vpop.f32.mrf.mxu0
        %v1304 = vadd.f32 0.0, %v1303
        %1305 = vmatmul.f32.gmra.mxu0 %v1191
        %v1306 = vpop.f32.mrf.mxu0
        %v1307 = vadd.f32 0.0, %v1306
        %1308 = vmatmul.f32.gmra.mxu0 %v1194
        %v1309 = vpop.f32.mrf.mxu0
        %v1310 = vadd.f32 0.0, %v1309
        %1311 = vmatmul.f32.gmra.mxu0 %v1197
        %v1312 = vpop.f32.mrf.mxu0
        %v1313 = vadd.f32 0.0, %v1312
        %1314 = vmatmul.f32.gmra.mxu0 %v1200
        %v1315 = vpop.f32.mrf.mxu0
        %v1316 = vadd.f32 0.0, %v1315
        %1317 = vmatmul.f32.gmra.mxu0 %v1203
        %v1318 = vpop.f32.mrf.mxu0
        %v1319 = vadd.f32 0.0, %v1318
        %1320 = vmatmul.f32.gmra.mxu0 %v1206
        %v1321 = vpop.f32.mrf.mxu0
        %v1322 = vadd.f32 0.0, %v1321
        %1323 = vmatmul.f32.gmra.mxu0 %v1209
        %v1324 = vpop.f32.mrf.mxu0
        %v1325 = vadd.f32 0.0, %v1324
        %1326 = vmatmul.f32.gmra.mxu0 %v1212
        %v1327 = vpop.f32.mrf.mxu0
        %v1328 = vadd.f32 0.0, %v1327
        %1329 = vmatmul.f32.gmra.mxu0 %v1215
        %v1330 = vpop.f32.mrf.mxu0
        %v1331 = vadd.f32 0.0, %v1330
        %1332 = vmatmul.f32.gmra.mxu0 %v1218
        %v1333 = vpop.f32.mrf.mxu0
        %v1334 = vadd.f32 0.0, %v1333
        %1335 = vmatmul.f32.gmra.mxu0 %v1221
        %v1336 = vpop.f32.mrf.mxu0
        %v1337 = vadd.f32 0.0, %v1336
        %1338 = vmatmul.f32.gmra.mxu0 %v1224
        %v1339 = vpop.f32.mrf.mxu0
        %v1340 = vadd.f32 0.0, %v1339
        %1341 = vmatmul.f32.gmra.mxu0 %v1227
        %v1342 = vpop.f32.mrf.mxu0
        %v1343 = vadd.f32 0.0, %v1342
        %1344 = vmatmul.f32.gmra.mxu0 %v1230
        %v1345 = vpop.f32.mrf.mxu0
        %v1346 = vadd.f32 0.0, %v1345
        %1347 = vdwg.mxu0
        %v1348 = vadd.f32 %v1069, %v1253
        %v1349 = vadd.f32 %v1070, %v1256
        %v1350 = vadd.f32 %v1071, %v1259
        %v1351 = vadd.f32 %v1072, %v1262
        %v1352 = vadd.f32 %v1073, %v1265
        %v1353 = vadd.f32 %v1074, %v1268
        %v1354 = vadd.f32 %v1075, %v1271
        %v1355 = vadd.f32 %v1076, %v1274
        %v1356 = vadd.f32 %v1077, %v1277
        %v1357 = vadd.f32 %v1078, %v1280
        %v1358 = vadd.f32 %v1079, %v1283
        %v1359 = vadd.f32 %v1080, %v1286
        %v1360 = vadd.f32 %v1081, %v1289
        %v1361 = vadd.f32 %v1082, %v1292
        %v1362 = vadd.f32 %v1083, %v1295
        %v1363 = vadd.f32 %v1084, %v1298
        %v1364 = vadd.f32 %v1085, %v1301
        %v1365 = vadd.f32 %v1086, %v1304
        %v1366 = vadd.f32 %v1087, %v1307
        %v1367 = vadd.f32 %v1088, %v1310
        %v1368 = vadd.f32 %v1089, %v1313
        %v1369 = vadd.f32 %v1090, %v1316
        %v1370 = vadd.f32 %v1091, %v1319
        %v1371 = vadd.f32 %v1092, %v1322
        %v1372 = vadd.f32 %v1093, %v1325
        %v1373 = vadd.f32 %v1094, %v1328
        %v1374 = vadd.f32 %v1095, %v1331
        %v1375 = vadd.f32 %v1096, %v1334
        %v1376 = vadd.f32 %v1097, %v1337
        %v1377 = vadd.f32 %v1098, %v1340
        %v1378 = vadd.f32 %v1099, %v1343
        %v1379 = vadd.f32 %v1100, %v1346
        %v1380 = vld [vmem:[%s1101 + $0x1] sm:$0xff]
        %v1381 = vld [vmem:[%s1101 + $0x9] sm:$0xff]
        %v1382 = vld [vmem:[%s1101 + $0x19] sm:$0xff]
        %v1383 = vld [vmem:[%s1101 + $0x21] sm:$0xff]
        %v1384 = vld [vmem:[%s1101 + $0x31] sm:$0xff]
        %v1385 = vld [vmem:[%s1101 + $0x39] sm:$0xff]
        %v1386 = vld [vmem:[%s1101 + $0x49] sm:$0xff]
        %v1387 = vld [vmem:[%s1101 + $0x51] sm:$0xff]
        %v1388 = vld [vmem:[%s1101 + $0x61] sm:$0xff]
        %v1389 = vld [vmem:[%s1101 + $0x69] sm:$0xff]
        %v1390 = vld [vmem:[%s1101 + $0x79] sm:$0xff]
        %v1391 = vld [vmem:[%s1101 + $0x81] sm:$0xff]
        %v1392 = vld [vmem:[%s1101 + $0x91] sm:$0xff]
        %v1393 = vld [vmem:[%s1101 + $0x99] sm:$0xff]
        %v1394 = vld [vmem:[%s1101 + $0xa9] sm:$0xff]
        %v1395 = vld [vmem:[%s1101 + $0xb1] sm:$0xff]
        %v1396 = vld [vmem:[%s1101 + $0xc1] sm:$0xff]
        %v1397 = vld [vmem:[%s1101 + $0xc9] sm:$0xff]
        %v1398 = vld [vmem:[%s1101 + $0xd9] sm:$0xff]
        %v1399 = vld [vmem:[%s1101 + $0xe1] sm:$0xff]
        %v1400 = vld [vmem:[%s1101 + $0xf1] sm:$0xff]
        %v1401 = vld [vmem:[%s1101 + $0xf9] sm:$0xff]
        %v1402 = vld [vmem:[%s1101 + $0x109] sm:$0xff]
        %v1403 = vld [vmem:[%s1101 + $0x111] sm:$0xff]
        %v1404 = vld [vmem:[%s1101 + $0x121] sm:$0xff]
        %v1405 = vld [vmem:[%s1101 + $0x129] sm:$0xff]
        %v1406 = vld [vmem:[%s1101 + $0x139] sm:$0xff]
        %v1407 = vld [vmem:[%s1101 + $0x141] sm:$0xff]
        %v1408 = vld [vmem:[%s1101 + $0x151] sm:$0xff]
        %v1409 = vld [vmem:[%s1101 + $0x159] sm:$0xff]
        %v1410 = vld [vmem:[%s1101 + $0x169] sm:$0xff]
        %v1411 = vld [vmem:[%s1101 + $0x171] sm:$0xff]
        %s1412 = scalar_lea.vmem %s1, 16
        %v1413 = vld [vmem:[%s1412] sm:$0xf]
        %v1415 = vsel %vm397, %v1380, 0
        %v1418 = vsel %vm397, %v1381, 0
        %v1421 = vsel %vm397, %v1382, 0
        %v1424 = vsel %vm397, %v1383, 0
        %v1427 = vsel %vm397, %v1384, 0
        %v1430 = vsel %vm397, %v1385, 0
        %v1433 = vsel %vm397, %v1386, 0
        %v1436 = vsel %vm397, %v1387, 0
        %v1439 = vsel %vm397, %v1388, 0
        %v1442 = vsel %vm397, %v1389, 0
        %v1445 = vsel %vm397, %v1390, 0
        %v1448 = vsel %vm397, %v1391, 0
        %v1451 = vsel %vm397, %v1392, 0
        %v1454 = vsel %vm397, %v1393, 0
        %v1457 = vsel %vm397, %v1394, 0
        %v1460 = vsel %vm397, %v1395, 0
        %v1463 = vsel %vm397, %v1396, 0
        %v1466 = vsel %vm397, %v1397, 0
        %v1469 = vsel %vm397, %v1398, 0
        %v1472 = vsel %vm397, %v1399, 0
        %v1475 = vsel %vm397, %v1400, 0
        %v1478 = vsel %vm397, %v1401, 0
        %v1481 = vsel %vm397, %v1402, 0
        %v1484 = vsel %vm397, %v1403, 0
        %v1487 = vsel %vm397, %v1404, 0
        %v1490 = vsel %vm397, %v1405, 0
        %v1493 = vsel %vm397, %v1406, 0
        %v1496 = vsel %vm397, %v1407, 0
        %v1499 = vsel %vm397, %v1408, 0
        %v1502 = vsel %vm397, %v1409, 0
        %v1505 = vsel %vm397, %v1410, 0
        %v1508 = vsel %vm397, %v1411, 0
        %v1511 = vsel %vm494, %v1413, 0
        %1513 = vmatpush.msra.mxu0 0.0
        %1514 = vmatpush.msra.mxu0 0.0
        %1515 = vmatpush.msra.mxu0 0.0
        %1516 = vmatpush.msra.mxu0 0.0
        %1517 = vmatpush.msra.mxu0 0.0
        %1518 = vmatpush.msra.mxu0 0.0
        %1519 = vmatpush.msra.mxu0 0.0
        %1520 = vmatpush.msra.mxu0 0.0
        %1521 = vmatpush.msra.mxu0 0.0
        %1522 = vmatpush.msra.mxu0 0.0
        %1523 = vmatpush.msra.mxu0 0.0
        %1524 = vmatpush.msra.mxu0 0.0
        %1525 = vmatpush.msra.mxu0 0.0
        %1526 = vmatpush.msra.mxu0 0.0
        %1527 = vmatpush.msra.mxu0 0.0
        %1528 = vmatpush.msra.mxu0 %v1511
        %1529 = vmatmul.f32.gmra.mxu0 %v1415
        %v1530 = vpop.f32.mrf.mxu0
        %v1531 = vadd.f32 0.0, %v1530
        %1532 = vmatmul.f32.gmra.mxu0 %v1418
        %v1533 = vpop.f32.mrf.mxu0
        %v1534 = vadd.f32 0.0, %v1533
        %1535 = vmatmul.f32.gmra.mxu0 %v1421
        %v1536 = vpop.f32.mrf.mxu0
        %v1537 = vadd.f32 0.0, %v1536
        %1538 = vmatmul.f32.gmra.mxu0 %v1424
        %v1539 = vpop.f32.mrf.mxu0
        %v1540 = vadd.f32 0.0, %v1539
        %1541 = vmatmul.f32.gmra.mxu0 %v1427
        %v1542 = vpop.f32.mrf.mxu0
        %v1543 = vadd.f32 0.0, %v1542
        %1544 = vmatmul.f32.gmra.mxu0 %v1430
        %v1545 = vpop.f32.mrf.mxu0
        %v1546 = vadd.f32 0.0, %v1545
        %1547 = vmatmul.f32.gmra.mxu0 %v1433
        %v1548 = vpop.f32.mrf.mxu0
        %v1549 = vadd.f32 0.0, %v1548
        %1550 = vmatmul.f32.gmra.mxu0 %v1436
        %v1551 = vpop.f32.mrf.mxu0
        %v1552 = vadd.f32 0.0, %v1551
        %1553 = vmatmul.f32.gmra.mxu0 %v1439
        %v1554 = vpop.f32.mrf.mxu0
        %v1555 = vadd.f32 0.0, %v1554
        %1556 = vmatmul.f32.gmra.mxu0 %v1442
        %v1557 = vpop.f32.mrf.mxu0
        %v1558 = vadd.f32 0.0, %v1557
        %1559 = vmatmul.f32.gmra.mxu0 %v1445
        %v1560 = vpop.f32.mrf.mxu0
        %v1561 = vadd.f32 0.0, %v1560
        %1562 = vmatmul.f32.gmra.mxu0 %v1448
        %v1563 = vpop.f32.mrf.mxu0
        %v1564 = vadd.f32 0.0, %v1563
        %1565 = vmatmul.f32.gmra.mxu0 %v1451
        %v1566 = vpop.f32.mrf.mxu0
        %v1567 = vadd.f32 0.0, %v1566
        %1568 = vmatmul.f32.gmra.mxu0 %v1454
        %v1569 = vpop.f32.mrf.mxu0
        %v1570 = vadd.f32 0.0, %v1569
        %1571 = vmatmul.f32.gmra.mxu0 %v1457
        %v1572 = vpop.f32.mrf.mxu0
        %v1573 = vadd.f32 0.0, %v1572
        %1574 = vmatmul.f32.gmra.mxu0 %v1460
        %v1575 = vpop.f32.mrf.mxu0
        %v1576 = vadd.f32 0.0, %v1575
        %1577 = vmatmul.f32.gmra.mxu0 %v1463
        %v1578 = vpop.f32.mrf.mxu0
        %v1579 = vadd.f32 0.0, %v1578
        %1580 = vmatmul.f32.gmra.mxu0 %v1466
        %v1581 = vpop.f32.mrf.mxu0
        %v1582 = vadd.f32 0.0, %v1581
        %1583 = vmatmul.f32.gmra.mxu0 %v1469
        %v1584 = vpop.f32.mrf.mxu0
        %v1585 = vadd.f32 0.0, %v1584
        %1586 = vmatmul.f32.gmra.mxu0 %v1472
        %v1587 = vpop.f32.mrf.mxu0
        %v1588 = vadd.f32 0.0, %v1587
        %1589 = vmatmul.f32.gmra.mxu0 %v1475
        %v1590 = vpop.f32.mrf.mxu0
        %v1591 = vadd.f32 0.0, %v1590
        %1592 = vmatmul.f32.gmra.mxu0 %v1478
        %v1593 = vpop.f32.mrf.mxu0
        %v1594 = vadd.f32 0.0, %v1593
        %1595 = vmatmul.f32.gmra.mxu0 %v1481
        %v1596 = vpop.f32.mrf.mxu0
        %v1597 = vadd.f32 0.0, %v1596
        %1598 = vmatmul.f32.gmra.mxu0 %v1484
        %v1599 = vpop.f32.mrf.mxu0
        %v1600 = vadd.f32 0.0, %v1599
        %1601 = vmatmul.f32.gmra.mxu0 %v1487
        %v1602 = vpop.f32.mrf.mxu0
        %v1603 = vadd.f32 0.0, %v1602
        %1604 = vmatmul.f32.gmra.mxu0 %v1490
        %v1605 = vpop.f32.mrf.mxu0
        %v1606 = vadd.f32 0.0, %v1605
        %1607 = vmatmul.f32.gmra.mxu0 %v1493
        %v1608 = vpop.f32.mrf.mxu0
        %v1609 = vadd.f32 0.0, %v1608
        %1610 = vmatmul.f32.gmra.mxu0 %v1496
        %v1611 = vpop.f32.mrf.mxu0
        %v1612 = vadd.f32 0.0, %v1611
        %1613 = vmatmul.f32.gmra.mxu0 %v1499
        %v1614 = vpop.f32.mrf.mxu0
        %v1615 = vadd.f32 0.0, %v1614
        %1616 = vmatmul.f32.gmra.mxu0 %v1502
        %v1617 = vpop.f32.mrf.mxu0
        %v1618 = vadd.f32 0.0, %v1617
        %1619 = vmatmul.f32.gmra.mxu0 %v1505
        %v1620 = vpop.f32.mrf.mxu0
        %v1621 = vadd.f32 0.0, %v1620
        %1622 = vmatmul.f32.gmra.mxu0 %v1508
        %v1623 = vpop.f32.mrf.mxu0
        %v1624 = vadd.f32 0.0, %v1623
        %1625 = vdwg.mxu0
        %v1626 = vadd.f32 %v1348, %v1531
        %v1627 = vadd.f32 %v1349, %v1534
        %v1628 = vadd.f32 %v1350, %v1537
        %v1629 = vadd.f32 %v1351, %v1540
        %v1630 = vadd.f32 %v1352, %v1543
        %v1631 = vadd.f32 %v1353, %v1546
        %v1632 = vadd.f32 %v1354, %v1549
        %v1633 = vadd.f32 %v1355, %v1552
        %v1634 = vadd.f32 %v1356, %v1555
        %v1635 = vadd.f32 %v1357, %v1558
        %v1636 = vadd.f32 %v1358, %v1561
        %v1637 = vadd.f32 %v1359, %v1564
        %v1638 = vadd.f32 %v1360, %v1567
        %v1639 = vadd.f32 %v1361, %v1570
        %v1640 = vadd.f32 %v1362, %v1573
        %v1641 = vadd.f32 %v1363, %v1576
        %v1642 = vadd.f32 %v1364, %v1579
        %v1643 = vadd.f32 %v1365, %v1582
        %v1644 = vadd.f32 %v1366, %v1585
        %v1645 = vadd.f32 %v1367, %v1588
        %v1646 = vadd.f32 %v1368, %v1591
        %v1647 = vadd.f32 %v1369, %v1594
        %v1648 = vadd.f32 %v1370, %v1597
        %v1649 = vadd.f32 %v1371, %v1600
        %v1650 = vadd.f32 %v1372, %v1603
        %v1651 = vadd.f32 %v1373, %v1606
        %v1652 = vadd.f32 %v1374, %v1609
        %v1653 = vadd.f32 %v1375, %v1612
        %v1654 = vadd.f32 %v1376, %v1615
        %v1655 = vadd.f32 %v1377, %v1618
        %v1656 = vadd.f32 %v1378, %v1621
        %v1657 = vadd.f32 %v1379, %v1624
        %v1658 = vld [vmem:[%s1101 + $0x2] sm:$0xff]
        %v1659 = vld [vmem:[%s1101 + $0xa] sm:$0xff]
        %v1660 = vld [vmem:[%s1101 + $0x1a] sm:$0xff]
        %v1661 = vld [vmem:[%s1101 + $0x22] sm:$0xff]
        %v1662 = vld [vmem:[%s1101 + $0x32] sm:$0xff]
        %v1663 = vld [vmem:[%s1101 + $0x3a] sm:$0xff]
        %v1664 = vld [vmem:[%s1101 + $0x4a] sm:$0xff]
        %v1665 = vld [vmem:[%s1101 + $0x52] sm:$0xff]
        %v1666 = vld [vmem:[%s1101 + $0x62] sm:$0xff]
        %v1667 = vld [vmem:[%s1101 + $0x6a] sm:$0xff]
        %v1668 = vld [vmem:[%s1101 + $0x7a] sm:$0xff]
        %v1669 = vld [vmem:[%s1101 + $0x82] sm:$0xff]
        %v1670 = vld [vmem:[%s1101 + $0x92] sm:$0xff]
        %v1671 = vld [vmem:[%s1101 + $0x9a] sm:$0xff]
        %v1672 = vld [vmem:[%s1101 + $0xaa] sm:$0xff]
        %v1673 = vld [vmem:[%s1101 + $0xb2] sm:$0xff]
        %v1674 = vld [vmem:[%s1101 + $0xc2] sm:$0xff]
        %v1675 = vld [vmem:[%s1101 + $0xca] sm:$0xff]
        %v1676 = vld [vmem:[%s1101 + $0xda] sm:$0xff]
        %v1677 = vld [vmem:[%s1101 + $0xe2] sm:$0xff]
        %v1678 = vld [vmem:[%s1101 + $0xf2] sm:$0xff]
        %v1679 = vld [vmem:[%s1101 + $0xfa] sm:$0xff]
        %v1680 = vld [vmem:[%s1101 + $0x10a] sm:$0xff]
        %v1681 = vld [vmem:[%s1101 + $0x112] sm:$0xff]
        %v1682 = vld [vmem:[%s1101 + $0x122] sm:$0xff]
        %v1683 = vld [vmem:[%s1101 + $0x12a] sm:$0xff]
        %v1684 = vld [vmem:[%s1101 + $0x13a] sm:$0xff]
        %v1685 = vld [vmem:[%s1101 + $0x142] sm:$0xff]
        %v1686 = vld [vmem:[%s1101 + $0x152] sm:$0xff]
        %v1687 = vld [vmem:[%s1101 + $0x15a] sm:$0xff]
        %v1688 = vld [vmem:[%s1101 + $0x16a] sm:$0xff]
        %v1689 = vld [vmem:[%s1101 + $0x172] sm:$0xff]
        %s1690 = scalar_lea.vmem %s1, 20
        %v1691 = vld [vmem:[%s1690] sm:$0xf]
        %v1693 = vsel %vm397, %v1658, 0
        %v1696 = vsel %vm397, %v1659, 0
        %v1699 = vsel %vm397, %v1660, 0
        %v1702 = vsel %vm397, %v1661, 0
        %v1705 = vsel %vm397, %v1662, 0
        %v1708 = vsel %vm397, %v1663, 0
        %v1711 = vsel %vm397, %v1664, 0
        %v1714 = vsel %vm397, %v1665, 0
        %v1717 = vsel %vm397, %v1666, 0
        %v1720 = vsel %vm397, %v1667, 0
        %v1723 = vsel %vm397, %v1668, 0
        %v1726 = vsel %vm397, %v1669, 0
        %v1729 = vsel %vm397, %v1670, 0
        %v1732 = vsel %vm397, %v1671, 0
        %v1735 = vsel %vm397, %v1672, 0
        %v1738 = vsel %vm397, %v1673, 0
        %v1741 = vsel %vm397, %v1674, 0
        %v1744 = vsel %vm397, %v1675, 0
        %v1747 = vsel %vm397, %v1676, 0
        %v1750 = vsel %vm397, %v1677, 0
        %v1753 = vsel %vm397, %v1678, 0
        %v1756 = vsel %vm397, %v1679, 0
        %v1759 = vsel %vm397, %v1680, 0
        %v1762 = vsel %vm397, %v1681, 0
        %v1765 = vsel %vm397, %v1682, 0
        %v1768 = vsel %vm397, %v1683, 0
        %v1771 = vsel %vm397, %v1684, 0
        %v1774 = vsel %vm397, %v1685, 0
        %v1777 = vsel %vm397, %v1686, 0
        %v1780 = vsel %vm397, %v1687, 0
        %v1783 = vsel %vm397, %v1688, 0
        %v1786 = vsel %vm397, %v1689, 0
        %v1789 = vsel %vm494, %v1691, 0
        %1791 = vmatpush.msra.mxu0 0.0
        %1792 = vmatpush.msra.mxu0 0.0
        %1793 = vmatpush.msra.mxu0 0.0
        %1794 = vmatpush.msra.mxu0 0.0
        %1795 = vmatpush.msra.mxu0 0.0
        %1796 = vmatpush.msra.mxu0 0.0
        %1797 = vmatpush.msra.mxu0 0.0
        %1798 = vmatpush.msra.mxu0 0.0
        %1799 = vmatpush.msra.mxu0 0.0
        %1800 = vmatpush.msra.mxu0 0.0
        %1801 = vmatpush.msra.mxu0 0.0
        %1802 = vmatpush.msra.mxu0 0.0
        %1803 = vmatpush.msra.mxu0 0.0
        %1804 = vmatpush.msra.mxu0 0.0
        %1805 = vmatpush.msra.mxu0 0.0
        %1806 = vmatpush.msra.mxu0 %v1789
        %1807 = vmatmul.f32.gmra.mxu0 %v1693
        %v1808 = vpop.f32.mrf.mxu0
        %v1809 = vadd.f32 0.0, %v1808
        %1810 = vmatmul.f32.gmra.mxu0 %v1696
        %v1811 = vpop.f32.mrf.mxu0
        %v1812 = vadd.f32 0.0, %v1811
        %1813 = vmatmul.f32.gmra.mxu0 %v1699
        %v1814 = vpop.f32.mrf.mxu0
        %v1815 = vadd.f32 0.0, %v1814
        %1816 = vmatmul.f32.gmra.mxu0 %v1702
        %v1817 = vpop.f32.mrf.mxu0
        %v1818 = vadd.f32 0.0, %v1817
        %1819 = vmatmul.f32.gmra.mxu0 %v1705
        %v1820 = vpop.f32.mrf.mxu0
        %v1821 = vadd.f32 0.0, %v1820
        %1822 = vmatmul.f32.gmra.mxu0 %v1708
        %v1823 = vpop.f32.mrf.mxu0
        %v1824 = vadd.f32 0.0, %v1823
        %1825 = vmatmul.f32.gmra.mxu0 %v1711
        %v1826 = vpop.f32.mrf.mxu0
        %v1827 = vadd.f32 0.0, %v1826
        %1828 = vmatmul.f32.gmra.mxu0 %v1714
        %v1829 = vpop.f32.mrf.mxu0
        %v1830 = vadd.f32 0.0, %v1829
        %1831 = vmatmul.f32.gmra.mxu0 %v1717
        %v1832 = vpop.f32.mrf.mxu0
        %v1833 = vadd.f32 0.0, %v1832
        %1834 = vmatmul.f32.gmra.mxu0 %v1720
        %v1835 = vpop.f32.mrf.mxu0
        %v1836 = vadd.f32 0.0, %v1835
        %1837 = vmatmul.f32.gmra.mxu0 %v1723
        %v1838 = vpop.f32.mrf.mxu0
        %v1839 = vadd.f32 0.0, %v1838
        %1840 = vmatmul.f32.gmra.mxu0 %v1726
        %v1841 = vpop.f32.mrf.mxu0
        %v1842 = vadd.f32 0.0, %v1841
        %1843 = vmatmul.f32.gmra.mxu0 %v1729
        %v1844 = vpop.f32.mrf.mxu0
        %v1845 = vadd.f32 0.0, %v1844
        %1846 = vmatmul.f32.gmra.mxu0 %v1732
        %v1847 = vpop.f32.mrf.mxu0
        %v1848 = vadd.f32 0.0, %v1847
        %1849 = vmatmul.f32.gmra.mxu0 %v1735
        %v1850 = vpop.f32.mrf.mxu0
        %v1851 = vadd.f32 0.0, %v1850
        %1852 = vmatmul.f32.gmra.mxu0 %v1738
        %v1853 = vpop.f32.mrf.mxu0
        %v1854 = vadd.f32 0.0, %v1853
        %1855 = vmatmul.f32.gmra.mxu0 %v1741
        %v1856 = vpop.f32.mrf.mxu0
        %v1857 = vadd.f32 0.0, %v1856
        %1858 = vmatmul.f32.gmra.mxu0 %v1744
        %v1859 = vpop.f32.mrf.mxu0
        %v1860 = vadd.f32 0.0, %v1859
        %1861 = vmatmul.f32.gmra.mxu0 %v1747
        %v1862 = vpop.f32.mrf.mxu0
        %v1863 = vadd.f32 0.0, %v1862
        %1864 = vmatmul.f32.gmra.mxu0 %v1750
        %v1865 = vpop.f32.mrf.mxu0
        %v1866 = vadd.f32 0.0, %v1865
        %1867 = vmatmul.f32.gmra.mxu0 %v1753
        %v1868 = vpop.f32.mrf.mxu0
        %v1869 = vadd.f32 0.0, %v1868
        %1870 = vmatmul.f32.gmra.mxu0 %v1756
        %v1871 = vpop.f32.mrf.mxu0
        %v1872 = vadd.f32 0.0, %v1871
        %1873 = vmatmul.f32.gmra.mxu0 %v1759
        %v1874 = vpop.f32.mrf.mxu0
        %v1875 = vadd.f32 0.0, %v1874
        %1876 = vmatmul.f32.gmra.mxu0 %v1762
        %v1877 = vpop.f32.mrf.mxu0
        %v1878 = vadd.f32 0.0, %v1877
        %1879 = vmatmul.f32.gmra.mxu0 %v1765
        %v1880 = vpop.f32.mrf.mxu0
        %v1881 = vadd.f32 0.0, %v1880
        %1882 = vmatmul.f32.gmra.mxu0 %v1768
        %v1883 = vpop.f32.mrf.mxu0
        %v1884 = vadd.f32 0.0, %v1883
        %1885 = vmatmul.f32.gmra.mxu0 %v1771
        %v1886 = vpop.f32.mrf.mxu0
        %v1887 = vadd.f32 0.0, %v1886
        %1888 = vmatmul.f32.gmra.mxu0 %v1774
        %v1889 = vpop.f32.mrf.mxu0
        %v1890 = vadd.f32 0.0, %v1889
        %1891 = vmatmul.f32.gmra.mxu0 %v1777
        %v1892 = vpop.f32.mrf.mxu0
        %v1893 = vadd.f32 0.0, %v1892
        %1894 = vmatmul.f32.gmra.mxu0 %v1780
        %v1895 = vpop.f32.mrf.mxu0
        %v1896 = vadd.f32 0.0, %v1895
        %1897 = vmatmul.f32.gmra.mxu0 %v1783
        %v1898 = vpop.f32.mrf.mxu0
        %v1899 = vadd.f32 0.0, %v1898
        %1900 = vmatmul.f32.gmra.mxu0 %v1786
        %v1901 = vpop.f32.mrf.mxu0
        %v1902 = vadd.f32 0.0, %v1901
        %1903 = vdwg.mxu0
        %v1904 = vadd.f32 %v1626, %v1809
        %v1905 = vadd.f32 %v1627, %v1812
        %v1906 = vadd.f32 %v1628, %v1815
        %v1907 = vadd.f32 %v1629, %v1818
        %v1908 = vadd.f32 %v1630, %v1821
        %v1909 = vadd.f32 %v1631, %v1824
        %v1910 = vadd.f32 %v1632, %v1827
        %v1911 = vadd.f32 %v1633, %v1830
        %v1912 = vadd.f32 %v1634, %v1833
        %v1913 = vadd.f32 %v1635, %v1836
        %v1914 = vadd.f32 %v1636, %v1839
        %v1915 = vadd.f32 %v1637, %v1842
        %v1916 = vadd.f32 %v1638, %v1845
        %v1917 = vadd.f32 %v1639, %v1848
        %v1918 = vadd.f32 %v1640, %v1851
        %v1919 = vadd.f32 %v1641, %v1854
        %v1920 = vadd.f32 %v1642, %v1857
        %v1921 = vadd.f32 %v1643, %v1860
        %v1922 = vadd.f32 %v1644, %v1863
        %v1923 = vadd.f32 %v1645, %v1866
        %v1924 = vadd.f32 %v1646, %v1869
        %v1925 = vadd.f32 %v1647, %v1872
        %v1926 = vadd.f32 %v1648, %v1875
        %v1927 = vadd.f32 %v1649, %v1878
        %v1928 = vadd.f32 %v1650, %v1881
        %v1929 = vadd.f32 %v1651, %v1884
        %v1930 = vadd.f32 %v1652, %v1887
        %v1931 = vadd.f32 %v1653, %v1890
        %v1932 = vadd.f32 %v1654, %v1893
        %v1933 = vadd.f32 %v1655, %v1896
        %v1934 = vadd.f32 %v1656, %v1899
        %v1935 = vadd.f32 %v1657, %v1902
        %s1936 = scalar_lea.vmem %s329, 48
        %v1937 = vld [vmem:[%s1936] sm:$0xff]
        %v1938 = vld [vmem:[%s1936 + $0x8] sm:$0xff]
        %v1939 = vld [vmem:[%s1936 + $0x18] sm:$0xff]
        %v1940 = vld [vmem:[%s1936 + $0x20] sm:$0xff]
        %v1941 = vld [vmem:[%s1936 + $0x30] sm:$0xff]
        %v1942 = vld [vmem:[%s1936 + $0x38] sm:$0xff]
        %v1943 = vld [vmem:[%s1936 + $0x48] sm:$0xff]
        %v1944 = vld [vmem:[%s1936 + $0x50] sm:$0xff]
        %v1945 = vld [vmem:[%s1936 + $0x60] sm:$0xff]
        %v1946 = vld [vmem:[%s1936 + $0x68] sm:$0xff]
        %v1947 = vld [vmem:[%s1936 + $0x78] sm:$0xff]
        %v1948 = vld [vmem:[%s1936 + $0x80] sm:$0xff]
        %v1949 = vld [vmem:[%s1936 + $0x90] sm:$0xff]
        %v1950 = vld [vmem:[%s1936 + $0x98] sm:$0xff]
        %v1951 = vld [vmem:[%s1936 + $0xa8] sm:$0xff]
        %v1952 = vld [vmem:[%s1936 + $0xb0] sm:$0xff]
        %v1953 = vld [vmem:[%s1936 + $0xc0] sm:$0xff]
        %v1954 = vld [vmem:[%s1936 + $0xc8] sm:$0xff]
        %v1955 = vld [vmem:[%s1936 + $0xd8] sm:$0xff]
        %v1956 = vld [vmem:[%s1936 + $0xe0] sm:$0xff]
        %v1957 = vld [vmem:[%s1936 + $0xf0] sm:$0xff]
        %v1958 = vld [vmem:[%s1936 + $0xf8] sm:$0xff]
        %v1959 = vld [vmem:[%s1936 + $0x108] sm:$0xff]
        %v1960 = vld [vmem:[%s1936 + $0x110] sm:$0xff]
        %v1961 = vld [vmem:[%s1936 + $0x120] sm:$0xff]
        %v1962 = vld [vmem:[%s1936 + $0x128] sm:$0xff]
        %v1963 = vld [vmem:[%s1936 + $0x138] sm:$0xff]
        %v1964 = vld [vmem:[%s1936 + $0x140] sm:$0xff]
        %v1965 = vld [vmem:[%s1936 + $0x150] sm:$0xff]
        %v1966 = vld [vmem:[%s1936 + $0x158] sm:$0xff]
        %v1967 = vld [vmem:[%s1936 + $0x168] sm:$0xff]
        %v1968 = vld [vmem:[%s1936 + $0x170] sm:$0xff]
        %s1969 = scalar_lea.vmem %s1, 24
        %v1970 = vld [vmem:[%s1969] sm:$0xf]
        %v1972 = vsel %vm397, %v1937, 0
        %v1975 = vsel %vm397, %v1938, 0
        %v1978 = vsel %vm397, %v1939, 0
        %v1981 = vsel %vm397, %v1940, 0
        %v1984 = vsel %vm397, %v1941, 0
        %v1987 = vsel %vm397, %v1942, 0
        %v1990 = vsel %vm397, %v1943, 0
        %v1993 = vsel %vm397, %v1944, 0
        %v1996 = vsel %vm397, %v1945, 0
        %v1999 = vsel %vm397, %v1946, 0
        %v2002 = vsel %vm397, %v1947, 0
        %v2005 = vsel %vm397, %v1948, 0
        %v2008 = vsel %vm397, %v1949, 0
        %v2011 = vsel %vm397, %v1950, 0
        %v2014 = vsel %vm397, %v1951, 0
        %v2017 = vsel %vm397, %v1952, 0
        %v2020 = vsel %vm397, %v1953, 0
        %v2023 = vsel %vm397, %v1954, 0
        %v2026 = vsel %vm397, %v1955, 0
        %v2029 = vsel %vm397, %v1956, 0
        %v2032 = vsel %vm397, %v1957, 0
        %v2035 = vsel %vm397, %v1958, 0
        %v2038 = vsel %vm397, %v1959, 0
        %v2041 = vsel %vm397, %v1960, 0
        %v2044 = vsel %vm397, %v1961, 0
        %v2047 = vsel %vm397, %v1962, 0
        %v2050 = vsel %vm397, %v1963, 0
        %v2053 = vsel %vm397, %v1964, 0
        %v2056 = vsel %vm397, %v1965, 0
        %v2059 = vsel %vm397, %v1966, 0
        %v2062 = vsel %vm397, %v1967, 0
        %v2065 = vsel %vm397, %v1968, 0
        %v2068 = vsel %vm494, %v1970, 0
        %2070 = vmatpush.msra.mxu0 0.0
        %2071 = vmatpush.msra.mxu0 0.0
        %2072 = vmatpush.msra.mxu0 0.0
        %2073 = vmatpush.msra.mxu0 0.0
        %2074 = vmatpush.msra.mxu0 0.0
        %2075 = vmatpush.msra.mxu0 0.0
        %2076 = vmatpush.msra.mxu0 0.0
        %2077 = vmatpush.msra.mxu0 0.0
        %2078 = vmatpush.msra.mxu0 0.0
        %2079 = vmatpush.msra.mxu0 0.0
        %2080 = vmatpush.msra.mxu0 0.0
        %2081 = vmatpush.msra.mxu0 0.0
        %2082 = vmatpush.msra.mxu0 0.0
        %2083 = vmatpush.msra.mxu0 0.0
        %2084 = vmatpush.msra.mxu0 0.0
        %2085 = vmatpush.msra.mxu0 %v2068
        %2086 = vmatmul.f32.gmra.mxu0 %v1972
        %v2087 = vpop.f32.mrf.mxu0
        %v2088 = vadd.f32 0.0, %v2087
        %2089 = vmatmul.f32.gmra.mxu0 %v1975
        %v2090 = vpop.f32.mrf.mxu0
        %v2091 = vadd.f32 0.0, %v2090
        %2092 = vmatmul.f32.gmra.mxu0 %v1978
        %v2093 = vpop.f32.mrf.mxu0
        %v2094 = vadd.f32 0.0, %v2093
        %2095 = vmatmul.f32.gmra.mxu0 %v1981
        %v2096 = vpop.f32.mrf.mxu0
        %v2097 = vadd.f32 0.0, %v2096
        %2098 = vmatmul.f32.gmra.mxu0 %v1984
        %v2099 = vpop.f32.mrf.mxu0
        %v2100 = vadd.f32 0.0, %v2099
        %2101 = vmatmul.f32.gmra.mxu0 %v1987
        %v2102 = vpop.f32.mrf.mxu0
        %v2103 = vadd.f32 0.0, %v2102
        %2104 = vmatmul.f32.gmra.mxu0 %v1990
        %v2105 = vpop.f32.mrf.mxu0
        %v2106 = vadd.f32 0.0, %v2105
        %2107 = vmatmul.f32.gmra.mxu0 %v1993
        %v2108 = vpop.f32.mrf.mxu0
        %v2109 = vadd.f32 0.0, %v2108
        %2110 = vmatmul.f32.gmra.mxu0 %v1996
        %v2111 = vpop.f32.mrf.mxu0
        %v2112 = vadd.f32 0.0, %v2111
        %2113 = vmatmul.f32.gmra.mxu0 %v1999
        %v2114 = vpop.f32.mrf.mxu0
        %v2115 = vadd.f32 0.0, %v2114
        %2116 = vmatmul.f32.gmra.mxu0 %v2002
        %v2117 = vpop.f32.mrf.mxu0
        %v2118 = vadd.f32 0.0, %v2117
        %2119 = vmatmul.f32.gmra.mxu0 %v2005
        %v2120 = vpop.f32.mrf.mxu0
        %v2121 = vadd.f32 0.0, %v2120
        %2122 = vmatmul.f32.gmra.mxu0 %v2008
        %v2123 = vpop.f32.mrf.mxu0
        %v2124 = vadd.f32 0.0, %v2123
        %2125 = vmatmul.f32.gmra.mxu0 %v2011
        %v2126 = vpop.f32.mrf.mxu0
        %v2127 = vadd.f32 0.0, %v2126
        %2128 = vmatmul.f32.gmra.mxu0 %v2014
        %v2129 = vpop.f32.mrf.mxu0
        %v2130 = vadd.f32 0.0, %v2129
        %2131 = vmatmul.f32.gmra.mxu0 %v2017
        %v2132 = vpop.f32.mrf.mxu0
        %v2133 = vadd.f32 0.0, %v2132
        %2134 = vmatmul.f32.gmra.mxu0 %v2020
        %v2135 = vpop.f32.mrf.mxu0
        %v2136 = vadd.f32 0.0, %v2135
        %2137 = vmatmul.f32.gmra.mxu0 %v2023
        %v2138 = vpop.f32.mrf.mxu0
        %v2139 = vadd.f32 0.0, %v2138
        %2140 = vmatmul.f32.gmra.mxu0 %v2026
        %v2141 = vpop.f32.mrf.mxu0
        %v2142 = vadd.f32 0.0, %v2141
        %2143 = vmatmul.f32.gmra.mxu0 %v2029
        %v2144 = vpop.f32.mrf.mxu0
        %v2145 = vadd.f32 0.0, %v2144
        %2146 = vmatmul.f32.gmra.mxu0 %v2032
        %v2147 = vpop.f32.mrf.mxu0
        %v2148 = vadd.f32 0.0, %v2147
        %2149 = vmatmul.f32.gmra.mxu0 %v2035
        %v2150 = vpop.f32.mrf.mxu0
        %v2151 = vadd.f32 0.0, %v2150
        %2152 = vmatmul.f32.gmra.mxu0 %v2038
        %v2153 = vpop.f32.mrf.mxu0
        %v2154 = vadd.f32 0.0, %v2153
        %2155 = vmatmul.f32.gmra.mxu0 %v2041
        %v2156 = vpop.f32.mrf.mxu0
        %v2157 = vadd.f32 0.0, %v2156
        %2158 = vmatmul.f32.gmra.mxu0 %v2044
        %v2159 = vpop.f32.mrf.mxu0
        %v2160 = vadd.f32 0.0, %v2159
        %2161 = vmatmul.f32.gmra.mxu0 %v2047
        %v2162 = vpop.f32.mrf.mxu0
        %v2163 = vadd.f32 0.0, %v2162
        %2164 = vmatmul.f32.gmra.mxu0 %v2050
        %v2165 = vpop.f32.mrf.mxu0
        %v2166 = vadd.f32 0.0, %v2165
        %2167 = vmatmul.f32.gmra.mxu0 %v2053
        %v2168 = vpop.f32.mrf.mxu0
        %v2169 = vadd.f32 0.0, %v2168
        %2170 = vmatmul.f32.gmra.mxu0 %v2056
        %v2171 = vpop.f32.mrf.mxu0
        %v2172 = vadd.f32 0.0, %v2171
        %2173 = vmatmul.f32.gmra.mxu0 %v2059
        %v2174 = vpop.f32.mrf.mxu0
        %v2175 = vadd.f32 0.0, %v2174
        %2176 = vmatmul.f32.gmra.mxu0 %v2062
        %v2177 = vpop.f32.mrf.mxu0
        %v2178 = vadd.f32 0.0, %v2177
        %2179 = vmatmul.f32.gmra.mxu0 %v2065
        %v2180 = vpop.f32.mrf.mxu0
        %v2181 = vadd.f32 0.0, %v2180
        %2182 = vdwg.mxu0
        %v2183 = vadd.f32 %v1904, %v2088
        %v2184 = vadd.f32 %v1905, %v2091
        %v2185 = vadd.f32 %v1906, %v2094
        %v2186 = vadd.f32 %v1907, %v2097
        %v2187 = vadd.f32 %v1908, %v2100
        %v2188 = vadd.f32 %v1909, %v2103
        %v2189 = vadd.f32 %v1910, %v2106
        %v2190 = vadd.f32 %v1911, %v2109
        %v2191 = vadd.f32 %v1912, %v2112
        %v2192 = vadd.f32 %v1913, %v2115
        %v2193 = vadd.f32 %v1914, %v2118
        %v2194 = vadd.f32 %v1915, %v2121
        %v2195 = vadd.f32 %v1916, %v2124
        %v2196 = vadd.f32 %v1917, %v2127
        %v2197 = vadd.f32 %v1918, %v2130
        %v2198 = vadd.f32 %v1919, %v2133
        %v2199 = vadd.f32 %v1920, %v2136
        %v2200 = vadd.f32 %v1921, %v2139
        %v2201 = vadd.f32 %v1922, %v2142
        %v2202 = vadd.f32 %v1923, %v2145
        %v2203 = vadd.f32 %v1924, %v2148
        %v2204 = vadd.f32 %v1925, %v2151
        %v2205 = vadd.f32 %v1926, %v2154
        %v2206 = vadd.f32 %v1927, %v2157
        %v2207 = vadd.f32 %v1928, %v2160
        %v2208 = vadd.f32 %v1929, %v2163
        %v2209 = vadd.f32 %v1930, %v2166
        %v2210 = vadd.f32 %v1931, %v2169
        %v2211 = vadd.f32 %v1932, %v2172
        %v2212 = vadd.f32 %v1933, %v2175
        %v2213 = vadd.f32 %v1934, %v2178
        %v2214 = vadd.f32 %v1935, %v2181
        %v2215 = vld [vmem:[%s1936 + $0x1] sm:$0xff]
        %v2216 = vld [vmem:[%s1936 + $0x9] sm:$0xff]
        %v2217 = vld [vmem:[%s1936 + $0x19] sm:$0xff]
        %v2218 = vld [vmem:[%s1936 + $0x21] sm:$0xff]
        %v2219 = vld [vmem:[%s1936 + $0x31] sm:$0xff]
        %v2220 = vld [vmem:[%s1936 + $0x39] sm:$0xff]
        %v2221 = vld [vmem:[%s1936 + $0x49] sm:$0xff]
        %v2222 = vld [vmem:[%s1936 + $0x51] sm:$0xff]
        %v2223 = vld [vmem:[%s1936 + $0x61] sm:$0xff]
        %v2224 = vld [vmem:[%s1936 + $0x69] sm:$0xff]
        %v2225 = vld [vmem:[%s1936 + $0x79] sm:$0xff]
        %v2226 = vld [vmem:[%s1936 + $0x81] sm:$0xff]
        %v2227 = vld [vmem:[%s1936 + $0x91] sm:$0xff]
        %v2228 = vld [vmem:[%s1936 + $0x99] sm:$0xff]
        %v2229 = vld [vmem:[%s1936 + $0xa9] sm:$0xff]
        %v2230 = vld [vmem:[%s1936 + $0xb1] sm:$0xff]
        %v2231 = vld [vmem:[%s1936 + $0xc1] sm:$0xff]
        %v2232 = vld [vmem:[%s1936 + $0xc9] sm:$0xff]
        %v2233 = vld [vmem:[%s1936 + $0xd9] sm:$0xff]
        %v2234 = vld [vmem:[%s1936 + $0xe1] sm:$0xff]
        %v2235 = vld [vmem:[%s1936 + $0xf1] sm:$0xff]
        %v2236 = vld [vmem:[%s1936 + $0xf9] sm:$0xff]
        %v2237 = vld [vmem:[%s1936 + $0x109] sm:$0xff]
        %v2238 = vld [vmem:[%s1936 + $0x111] sm:$0xff]
        %v2239 = vld [vmem:[%s1936 + $0x121] sm:$0xff]
        %v2240 = vld [vmem:[%s1936 + $0x129] sm:$0xff]
        %v2241 = vld [vmem:[%s1936 + $0x139] sm:$0xff]
        %v2242 = vld [vmem:[%s1936 + $0x141] sm:$0xff]
        %v2243 = vld [vmem:[%s1936 + $0x151] sm:$0xff]
        %v2244 = vld [vmem:[%s1936 + $0x159] sm:$0xff]
        %v2245 = vld [vmem:[%s1936 + $0x169] sm:$0xff]
        %v2246 = vld [vmem:[%s1936 + $0x171] sm:$0xff]
        %s2247 = scalar_lea.vmem %s1, 28
        %v2248 = vld [vmem:[%s2247] sm:$0xf]
        %v2250 = vsel %vm397, %v2215, 0
        %v2253 = vsel %vm397, %v2216, 0
        %v2256 = vsel %vm397, %v2217, 0
        %v2259 = vsel %vm397, %v2218, 0
        %v2262 = vsel %vm397, %v2219, 0
        %v2265 = vsel %vm397, %v2220, 0
        %v2268 = vsel %vm397, %v2221, 0
        %v2271 = vsel %vm397, %v2222, 0
        %v2274 = vsel %vm397, %v2223, 0
        %v2277 = vsel %vm397, %v2224, 0
        %v2280 = vsel %vm397, %v2225, 0
        %v2283 = vsel %vm397, %v2226, 0
        %v2286 = vsel %vm397, %v2227, 0
        %v2289 = vsel %vm397, %v2228, 0
        %v2292 = vsel %vm397, %v2229, 0
        %v2295 = vsel %vm397, %v2230, 0
        %v2298 = vsel %vm397, %v2231, 0
        %v2301 = vsel %vm397, %v2232, 0
        %v2304 = vsel %vm397, %v2233, 0
        %v2307 = vsel %vm397, %v2234, 0
        %v2310 = vsel %vm397, %v2235, 0
        %v2313 = vsel %vm397, %v2236, 0
        %v2316 = vsel %vm397, %v2237, 0
        %v2319 = vsel %vm397, %v2238, 0
        %v2322 = vsel %vm397, %v2239, 0
        %v2325 = vsel %vm397, %v2240, 0
        %v2328 = vsel %vm397, %v2241, 0
        %v2331 = vsel %vm397, %v2242, 0
        %v2334 = vsel %vm397, %v2243, 0
        %v2337 = vsel %vm397, %v2244, 0
        %v2340 = vsel %vm397, %v2245, 0
        %v2343 = vsel %vm397, %v2246, 0
        %v2346 = vsel %vm494, %v2248, 0
        %2348 = vmatpush.msra.mxu0 0.0
        %2349 = vmatpush.msra.mxu0 0.0
        %2350 = vmatpush.msra.mxu0 0.0
        %2351 = vmatpush.msra.mxu0 0.0
        %2352 = vmatpush.msra.mxu0 0.0
        %2353 = vmatpush.msra.mxu0 0.0
        %2354 = vmatpush.msra.mxu0 0.0
        %2355 = vmatpush.msra.mxu0 0.0
        %2356 = vmatpush.msra.mxu0 0.0
        %2357 = vmatpush.msra.mxu0 0.0
        %2358 = vmatpush.msra.mxu0 0.0
        %2359 = vmatpush.msra.mxu0 0.0
        %2360 = vmatpush.msra.mxu0 0.0
        %2361 = vmatpush.msra.mxu0 0.0
        %2362 = vmatpush.msra.mxu0 0.0
        %2363 = vmatpush.msra.mxu0 %v2346
        %2364 = vmatmul.f32.gmra.mxu0 %v2250
        %v2365 = vpop.f32.mrf.mxu0
        %v2366 = vadd.f32 0.0, %v2365
        %2367 = vmatmul.f32.gmra.mxu0 %v2253
        %v2368 = vpop.f32.mrf.mxu0
        %v2369 = vadd.f32 0.0, %v2368
        %2370 = vmatmul.f32.gmra.mxu0 %v2256
        %v2371 = vpop.f32.mrf.mxu0
        %v2372 = vadd.f32 0.0, %v2371
        %2373 = vmatmul.f32.gmra.mxu0 %v2259
        %v2374 = vpop.f32.mrf.mxu0
        %v2375 = vadd.f32 0.0, %v2374
        %2376 = vmatmul.f32.gmra.mxu0 %v2262
        %v2377 = vpop.f32.mrf.mxu0
        %v2378 = vadd.f32 0.0, %v2377
        %2379 = vmatmul.f32.gmra.mxu0 %v2265
        %v2380 = vpop.f32.mrf.mxu0
        %v2381 = vadd.f32 0.0, %v2380
        %2382 = vmatmul.f32.gmra.mxu0 %v2268
        %v2383 = vpop.f32.mrf.mxu0
        %v2384 = vadd.f32 0.0, %v2383
        %2385 = vmatmul.f32.gmra.mxu0 %v2271
        %v2386 = vpop.f32.mrf.mxu0
        %v2387 = vadd.f32 0.0, %v2386
        %2388 = vmatmul.f32.gmra.mxu0 %v2274
        %v2389 = vpop.f32.mrf.mxu0
        %v2390 = vadd.f32 0.0, %v2389
        %2391 = vmatmul.f32.gmra.mxu0 %v2277
        %v2392 = vpop.f32.mrf.mxu0
        %v2393 = vadd.f32 0.0, %v2392
        %2394 = vmatmul.f32.gmra.mxu0 %v2280
        %v2395 = vpop.f32.mrf.mxu0
        %v2396 = vadd.f32 0.0, %v2395
        %2397 = vmatmul.f32.gmra.mxu0 %v2283
        %v2398 = vpop.f32.mrf.mxu0
        %v2399 = vadd.f32 0.0, %v2398
        %2400 = vmatmul.f32.gmra.mxu0 %v2286
        %v2401 = vpop.f32.mrf.mxu0
        %v2402 = vadd.f32 0.0, %v2401
        %2403 = vmatmul.f32.gmra.mxu0 %v2289
        %v2404 = vpop.f32.mrf.mxu0
        %v2405 = vadd.f32 0.0, %v2404
        %2406 = vmatmul.f32.gmra.mxu0 %v2292
        %v2407 = vpop.f32.mrf.mxu0
        %v2408 = vadd.f32 0.0, %v2407
        %2409 = vmatmul.f32.gmra.mxu0 %v2295
        %v2410 = vpop.f32.mrf.mxu0
        %v2411 = vadd.f32 0.0, %v2410
        %2412 = vmatmul.f32.gmra.mxu0 %v2298
        %v2413 = vpop.f32.mrf.mxu0
        %v2414 = vadd.f32 0.0, %v2413
        %2415 = vmatmul.f32.gmra.mxu0 %v2301
        %v2416 = vpop.f32.mrf.mxu0
        %v2417 = vadd.f32 0.0, %v2416
        %2418 = vmatmul.f32.gmra.mxu0 %v2304
        %v2419 = vpop.f32.mrf.mxu0
        %v2420 = vadd.f32 0.0, %v2419
        %2421 = vmatmul.f32.gmra.mxu0 %v2307
        %v2422 = vpop.f32.mrf.mxu0
        %v2423 = vadd.f32 0.0, %v2422
        %2424 = vmatmul.f32.gmra.mxu0 %v2310
        %v2425 = vpop.f32.mrf.mxu0
        %v2426 = vadd.f32 0.0, %v2425
        %2427 = vmatmul.f32.gmra.mxu0 %v2313
        %v2428 = vpop.f32.mrf.mxu0
        %v2429 = vadd.f32 0.0, %v2428
        %2430 = vmatmul.f32.gmra.mxu0 %v2316
        %v2431 = vpop.f32.mrf.mxu0
        %v2432 = vadd.f32 0.0, %v2431
        %2433 = vmatmul.f32.gmra.mxu0 %v2319
        %v2434 = vpop.f32.mrf.mxu0
        %v2435 = vadd.f32 0.0, %v2434
        %2436 = vmatmul.f32.gmra.mxu0 %v2322
        %v2437 = vpop.f32.mrf.mxu0
        %v2438 = vadd.f32 0.0, %v2437
        %2439 = vmatmul.f32.gmra.mxu0 %v2325
        %v2440 = vpop.f32.mrf.mxu0
        %v2441 = vadd.f32 0.0, %v2440
        %2442 = vmatmul.f32.gmra.mxu0 %v2328
        %v2443 = vpop.f32.mrf.mxu0
        %v2444 = vadd.f32 0.0, %v2443
        %2445 = vmatmul.f32.gmra.mxu0 %v2331
        %v2446 = vpop.f32.mrf.mxu0
        %v2447 = vadd.f32 0.0, %v2446
        %2448 = vmatmul.f32.gmra.mxu0 %v2334
        %v2449 = vpop.f32.mrf.mxu0
        %v2450 = vadd.f32 0.0, %v2449
        %2451 = vmatmul.f32.gmra.mxu0 %v2337
        %v2452 = vpop.f32.mrf.mxu0
        %v2453 = vadd.f32 0.0, %v2452
        %2454 = vmatmul.f32.gmra.mxu0 %v2340
        %v2455 = vpop.f32.mrf.mxu0
        %v2456 = vadd.f32 0.0, %v2455
        %2457 = vmatmul.f32.gmra.mxu0 %v2343
        %v2458 = vpop.f32.mrf.mxu0
        %v2459 = vadd.f32 0.0, %v2458
        %2460 = vdwg.mxu0
        %v2461 = vadd.f32 %v2183, %v2366
        %v2462 = vadd.f32 %v2184, %v2369
        %v2463 = vadd.f32 %v2185, %v2372
        %v2464 = vadd.f32 %v2186, %v2375
        %v2465 = vadd.f32 %v2187, %v2378
        %v2466 = vadd.f32 %v2188, %v2381
        %v2467 = vadd.f32 %v2189, %v2384
        %v2468 = vadd.f32 %v2190, %v2387
        %v2469 = vadd.f32 %v2191, %v2390
        %v2470 = vadd.f32 %v2192, %v2393
        %v2471 = vadd.f32 %v2193, %v2396
        %v2472 = vadd.f32 %v2194, %v2399
        %v2473 = vadd.f32 %v2195, %v2402
        %v2474 = vadd.f32 %v2196, %v2405
        %v2475 = vadd.f32 %v2197, %v2408
        %v2476 = vadd.f32 %v2198, %v2411
        %v2477 = vadd.f32 %v2199, %v2414
        %v2478 = vadd.f32 %v2200, %v2417
        %v2479 = vadd.f32 %v2201, %v2420
        %v2480 = vadd.f32 %v2202, %v2423
        %v2481 = vadd.f32 %v2203, %v2426
        %v2482 = vadd.f32 %v2204, %v2429
        %v2483 = vadd.f32 %v2205, %v2432
        %v2484 = vadd.f32 %v2206, %v2435
        %v2485 = vadd.f32 %v2207, %v2438
        %v2486 = vadd.f32 %v2208, %v2441
        %v2487 = vadd.f32 %v2209, %v2444
        %v2488 = vadd.f32 %v2210, %v2447
        %v2489 = vadd.f32 %v2211, %v2450
        %v2490 = vadd.f32 %v2212, %v2453
        %v2491 = vadd.f32 %v2213, %v2456
        %v2492 = vadd.f32 %v2214, %v2459
        %v2493 = vld [vmem:[%s1936 + $0x2] sm:$0xff]
        %v2494 = vld [vmem:[%s1936 + $0xa] sm:$0xff]
        %v2495 = vld [vmem:[%s1936 + $0x1a] sm:$0xff]
        %v2496 = vld [vmem:[%s1936 + $0x22] sm:$0xff]
        %v2497 = vld [vmem:[%s1936 + $0x32] sm:$0xff]
        %v2498 = vld [vmem:[%s1936 + $0x3a] sm:$0xff]
        %v2499 = vld [vmem:[%s1936 + $0x4a] sm:$0xff]
        %v2500 = vld [vmem:[%s1936 + $0x52] sm:$0xff]
        %v2501 = vld [vmem:[%s1936 + $0x62] sm:$0xff]
        %v2502 = vld [vmem:[%s1936 + $0x6a] sm:$0xff]
        %v2503 = vld [vmem:[%s1936 + $0x7a] sm:$0xff]
        %v2504 = vld [vmem:[%s1936 + $0x82] sm:$0xff]
        %v2505 = vld [vmem:[%s1936 + $0x92] sm:$0xff]
        %v2506 = vld [vmem:[%s1936 + $0x9a] sm:$0xff]
        %v2507 = vld [vmem:[%s1936 + $0xaa] sm:$0xff]
        %v2508 = vld [vmem:[%s1936 + $0xb2] sm:$0xff]
        %v2509 = vld [vmem:[%s1936 + $0xc2] sm:$0xff]
        %v2510 = vld [vmem:[%s1936 + $0xca] sm:$0xff]
        %v2511 = vld [vmem:[%s1936 + $0xda] sm:$0xff]
        %v2512 = vld [vmem:[%s1936 + $0xe2] sm:$0xff]
        %v2513 = vld [vmem:[%s1936 + $0xf2] sm:$0xff]
        %v2514 = vld [vmem:[%s1936 + $0xfa] sm:$0xff]
        %v2515 = vld [vmem:[%s1936 + $0x10a] sm:$0xff]
        %v2516 = vld [vmem:[%s1936 + $0x112] sm:$0xff]
        %v2517 = vld [vmem:[%s1936 + $0x122] sm:$0xff]
        %v2518 = vld [vmem:[%s1936 + $0x12a] sm:$0xff]
        %v2519 = vld [vmem:[%s1936 + $0x13a] sm:$0xff]
        %v2520 = vld [vmem:[%s1936 + $0x142] sm:$0xff]
        %v2521 = vld [vmem:[%s1936 + $0x152] sm:$0xff]
        %v2522 = vld [vmem:[%s1936 + $0x15a] sm:$0xff]
        %v2523 = vld [vmem:[%s1936 + $0x16a] sm:$0xff]
        %v2524 = vld [vmem:[%s1936 + $0x172] sm:$0xff]
        %s2525 = scalar_lea.vmem %s1, 32
        %v2526 = vld [vmem:[%s2525] sm:$0xf]
        %v2528 = vsel %vm397, %v2493, 0
        %v2531 = vsel %vm397, %v2494, 0
        %v2534 = vsel %vm397, %v2495, 0
        %v2537 = vsel %vm397, %v2496, 0
        %v2540 = vsel %vm397, %v2497, 0
        %v2543 = vsel %vm397, %v2498, 0
        %v2546 = vsel %vm397, %v2499, 0
        %v2549 = vsel %vm397, %v2500, 0
        %v2552 = vsel %vm397, %v2501, 0
        %v2555 = vsel %vm397, %v2502, 0
        %v2558 = vsel %vm397, %v2503, 0
        %v2561 = vsel %vm397, %v2504, 0
        %v2564 = vsel %vm397, %v2505, 0
        %v2567 = vsel %vm397, %v2506, 0
        %v2570 = vsel %vm397, %v2507, 0
        %v2573 = vsel %vm397, %v2508, 0
        %v2576 = vsel %vm397, %v2509, 0
        %v2579 = vsel %vm397, %v2510, 0
        %v2582 = vsel %vm397, %v2511, 0
        %v2585 = vsel %vm397, %v2512, 0
        %v2588 = vsel %vm397, %v2513, 0
        %v2591 = vsel %vm397, %v2514, 0
        %v2594 = vsel %vm397, %v2515, 0
        %v2597 = vsel %vm397, %v2516, 0
        %v2600 = vsel %vm397, %v2517, 0
        %v2603 = vsel %vm397, %v2518, 0
        %v2606 = vsel %vm397, %v2519, 0
        %v2609 = vsel %vm397, %v2520, 0
        %v2612 = vsel %vm397, %v2521, 0
        %v2615 = vsel %vm397, %v2522, 0
        %v2618 = vsel %vm397, %v2523, 0
        %v2621 = vsel %vm397, %v2524, 0
        %v2624 = vsel %vm494, %v2526, 0
        %2626 = vmatpush.msra.mxu0 0.0
        %2627 = vmatpush.msra.mxu0 0.0
        %2628 = vmatpush.msra.mxu0 0.0
        %2629 = vmatpush.msra.mxu0 0.0
        %2630 = vmatpush.msra.mxu0 0.0
        %2631 = vmatpush.msra.mxu0 0.0
        %2632 = vmatpush.msra.mxu0 0.0
        %2633 = vmatpush.msra.mxu0 0.0
        %2634 = vmatpush.msra.mxu0 0.0
        %2635 = vmatpush.msra.mxu0 0.0
        %2636 = vmatpush.msra.mxu0 0.0
        %2637 = vmatpush.msra.mxu0 0.0
        %2638 = vmatpush.msra.mxu0 0.0
        %2639 = vmatpush.msra.mxu0 0.0
        %2640 = vmatpush.msra.mxu0 0.0
        %2641 = vmatpush.msra.mxu0 %v2624
        %2642 = vmatmul.f32.gmra.mxu0 %v2528
        %v2643 = vpop.f32.mrf.mxu0
        %v2644 = vadd.f32 0.0, %v2643
        %2645 = vmatmul.f32.gmra.mxu0 %v2531
        %v2646 = vpop.f32.mrf.mxu0
        %v2647 = vadd.f32 0.0, %v2646
        %2648 = vmatmul.f32.gmra.mxu0 %v2534
        %v2649 = vpop.f32.mrf.mxu0
        %v2650 = vadd.f32 0.0, %v2649
        %2651 = vmatmul.f32.gmra.mxu0 %v2537
        %v2652 = vpop.f32.mrf.mxu0
        %v2653 = vadd.f32 0.0, %v2652
        %2654 = vmatmul.f32.gmra.mxu0 %v2540
        %v2655 = vpop.f32.mrf.mxu0
        %v2656 = vadd.f32 0.0, %v2655
        %2657 = vmatmul.f32.gmra.mxu0 %v2543
        %v2658 = vpop.f32.mrf.mxu0
        %v2659 = vadd.f32 0.0, %v2658
        %2660 = vmatmul.f32.gmra.mxu0 %v2546
        %v2661 = vpop.f32.mrf.mxu0
        %v2662 = vadd.f32 0.0, %v2661
        %2663 = vmatmul.f32.gmra.mxu0 %v2549
        %v2664 = vpop.f32.mrf.mxu0
        %v2665 = vadd.f32 0.0, %v2664
        %2666 = vmatmul.f32.gmra.mxu0 %v2552
        %v2667 = vpop.f32.mrf.mxu0
        %v2668 = vadd.f32 0.0, %v2667
        %2669 = vmatmul.f32.gmra.mxu0 %v2555
        %v2670 = vpop.f32.mrf.mxu0
        %v2671 = vadd.f32 0.0, %v2670
        %2672 = vmatmul.f32.gmra.mxu0 %v2558
        %v2673 = vpop.f32.mrf.mxu0
        %v2674 = vadd.f32 0.0, %v2673
        %2675 = vmatmul.f32.gmra.mxu0 %v2561
        %v2676 = vpop.f32.mrf.mxu0
        %v2677 = vadd.f32 0.0, %v2676
        %2678 = vmatmul.f32.gmra.mxu0 %v2564
        %v2679 = vpop.f32.mrf.mxu0
        %v2680 = vadd.f32 0.0, %v2679
        %2681 = vmatmul.f32.gmra.mxu0 %v2567
        %v2682 = vpop.f32.mrf.mxu0
        %v2683 = vadd.f32 0.0, %v2682
        %2684 = vmatmul.f32.gmra.mxu0 %v2570
        %v2685 = vpop.f32.mrf.mxu0
        %v2686 = vadd.f32 0.0, %v2685
        %2687 = vmatmul.f32.gmra.mxu0 %v2573
        %v2688 = vpop.f32.mrf.mxu0
        %v2689 = vadd.f32 0.0, %v2688
        %2690 = vmatmul.f32.gmra.mxu0 %v2576
        %v2691 = vpop.f32.mrf.mxu0
        %v2692 = vadd.f32 0.0, %v2691
        %2693 = vmatmul.f32.gmra.mxu0 %v2579
        %v2694 = vpop.f32.mrf.mxu0
        %v2695 = vadd.f32 0.0, %v2694
        %2696 = vmatmul.f32.gmra.mxu0 %v2582
        %v2697 = vpop.f32.mrf.mxu0
        %v2698 = vadd.f32 0.0, %v2697
        %2699 = vmatmul.f32.gmra.mxu0 %v2585
        %v2700 = vpop.f32.mrf.mxu0
        %v2701 = vadd.f32 0.0, %v2700
        %2702 = vmatmul.f32.gmra.mxu0 %v2588
        %v2703 = vpop.f32.mrf.mxu0
        %v2704 = vadd.f32 0.0, %v2703
        %2705 = vmatmul.f32.gmra.mxu0 %v2591
        %v2706 = vpop.f32.mrf.mxu0
        %v2707 = vadd.f32 0.0, %v2706
        %2708 = vmatmul.f32.gmra.mxu0 %v2594
        %v2709 = vpop.f32.mrf.mxu0
        %v2710 = vadd.f32 0.0, %v2709
        %2711 = vmatmul.f32.gmra.mxu0 %v2597
        %v2712 = vpop.f32.mrf.mxu0
        %v2713 = vadd.f32 0.0, %v2712
        %2714 = vmatmul.f32.gmra.mxu0 %v2600
        %v2715 = vpop.f32.mrf.mxu0
        %v2716 = vadd.f32 0.0, %v2715
        %2717 = vmatmul.f32.gmra.mxu0 %v2603
        %v2718 = vpop.f32.mrf.mxu0
        %v2719 = vadd.f32 0.0, %v2718
        %2720 = vmatmul.f32.gmra.mxu0 %v2606
        %v2721 = vpop.f32.mrf.mxu0
        %v2722 = vadd.f32 0.0, %v2721
        %2723 = vmatmul.f32.gmra.mxu0 %v2609
        %v2724 = vpop.f32.mrf.mxu0
        %v2725 = vadd.f32 0.0, %v2724
        %2726 = vmatmul.f32.gmra.mxu0 %v2612
        %v2727 = vpop.f32.mrf.mxu0
        %v2728 = vadd.f32 0.0, %v2727
        %2729 = vmatmul.f32.gmra.mxu0 %v2615
        %v2730 = vpop.f32.mrf.mxu0
        %v2731 = vadd.f32 0.0, %v2730
        %2732 = vmatmul.f32.gmra.mxu0 %v2618
        %v2733 = vpop.f32.mrf.mxu0
        %v2734 = vadd.f32 0.0, %v2733
        %2735 = vmatmul.f32.gmra.mxu0 %v2621
        %v2736 = vpop.f32.mrf.mxu0
        %v2737 = vadd.f32 0.0, %v2736
        %2738 = vdwg.mxu0
        %v2739 = vadd.f32 %v2461, %v2644
        %v2740 = vadd.f32 %v2462, %v2647
        %v2741 = vadd.f32 %v2463, %v2650
        %v2742 = vadd.f32 %v2464, %v2653
        %v2743 = vadd.f32 %v2465, %v2656
        %v2744 = vadd.f32 %v2466, %v2659
        %v2745 = vadd.f32 %v2467, %v2662
        %v2746 = vadd.f32 %v2468, %v2665
        %v2747 = vadd.f32 %v2469, %v2668
        %v2748 = vadd.f32 %v2470, %v2671
        %v2749 = vadd.f32 %v2471, %v2674
        %v2750 = vadd.f32 %v2472, %v2677
        %v2751 = vadd.f32 %v2473, %v2680
        %v2752 = vadd.f32 %v2474, %v2683
        %v2753 = vadd.f32 %v2475, %v2686
        %v2754 = vadd.f32 %v2476, %v2689
        %v2755 = vadd.f32 %v2477, %v2692
        %v2756 = vadd.f32 %v2478, %v2695
        %v2757 = vadd.f32 %v2479, %v2698
        %v2758 = vadd.f32 %v2480, %v2701
        %v2759 = vadd.f32 %v2481, %v2704
        %v2760 = vadd.f32 %v2482, %v2707
        %v2761 = vadd.f32 %v2483, %v2710
        %v2762 = vadd.f32 %v2484, %v2713
        %v2763 = vadd.f32 %v2485, %v2716
        %v2764 = vadd.f32 %v2486, %v2719
        %v2765 = vadd.f32 %v2487, %v2722
        %v2766 = vadd.f32 %v2488, %v2725
        %v2767 = vadd.f32 %v2489, %v2728
        %v2768 = vadd.f32 %v2490, %v2731
        %v2769 = vadd.f32 %v2491, %v2734
        %v2770 = vadd.f32 %v2492, %v2737
        %v2771 = vld [vmem:[%s5] sm:$0xff]
        %v2772 = vld [vmem:[%s5 + $0x8] sm:$0xff]
        %v2773 = vld [vmem:[%s5 + $0x10] sm:$0xff]
        %v2774 = vld [vmem:[%s5 + $0x18] sm:$0xff]
        %v2775 = vld [vmem:[%s5 + $0x20] sm:$0xff]
        %v2776 = vld [vmem:[%s5 + $0x28] sm:$0xff]
        %v2777 = vld [vmem:[%s5 + $0x30] sm:$0xff]
        %v2778 = vld [vmem:[%s5 + $0x38] sm:$0xff]
        %v2779 = vld [vmem:[%s5 + $0x40] sm:$0xff]
        %v2780 = vld [vmem:[%s5 + $0x48] sm:$0xff]
        %v2781 = vld [vmem:[%s5 + $0x50] sm:$0xff]
        %v2782 = vld [vmem:[%s5 + $0x58] sm:$0xff]
        %v2783 = vld [vmem:[%s5 + $0x60] sm:$0xff]
        %v2784 = vld [vmem:[%s5 + $0x68] sm:$0xff]
        %v2785 = vld [vmem:[%s5 + $0x70] sm:$0xff]
        %v2786 = vld [vmem:[%s5 + $0x78] sm:$0xff]
        %v2787 = vld [vmem:[%s2] sm:$0x1]
        %v2789 = vperm.slane %v2787, 0
        %2791 = vmatpush.msra.mxu0 %v2754
        %2792 = vmatpush.msra.mxu0 %v2753
        %2793 = vmatpush.msra.mxu0 %v2752
        %2794 = vmatpush.msra.mxu0 %v2751
        %2795 = vmatpush.msra.mxu0 %v2750
        %2796 = vmatpush.msra.mxu0 %v2749
        %2797 = vmatpush.msra.mxu0 %v2748
        %2798 = vmatpush.msra.mxu0 %v2747
        %2799 = vmatpush.msra.mxu0 %v2746
        %2800 = vmatpush.msra.mxu0 %v2745
        %2801 = vmatpush.msra.mxu0 %v2744
        %2802 = vmatpush.msra.mxu0 %v2743
        %2803 = vmatpush.msra.mxu0 %v2742
        %2804 = vmatpush.msra.mxu0 %v2741
        %2805 = vmatpush.msra.mxu0 %v2740
        %2806 = vmatpush.msra.mxu0 %v2739
        %2807 = vmatmul.f32.gmra.mxu0 %v2771
        %v2808 = vpop.f32.mrf.mxu0
        %v2809 = vadd.f32 %v2789, %v2808
        %2810 = vmatmul.f32.gmra.mxu0 %v2773
        %v2811 = vpop.f32.mrf.mxu0
        %v2812 = vadd.f32 %v2789, %v2811
        %2813 = vmatmul.f32.gmra.mxu0 %v2775
        %v2814 = vpop.f32.mrf.mxu0
        %v2815 = vadd.f32 %v2789, %v2814
        %2816 = vmatmul.f32.gmra.mxu0 %v2777
        %v2817 = vpop.f32.mrf.mxu0
        %v2818 = vadd.f32 %v2789, %v2817
        %2819 = vmatmul.f32.gmra.mxu0 %v2779
        %v2820 = vpop.f32.mrf.mxu0
        %v2821 = vadd.f32 %v2789, %v2820
        %2822 = vmatmul.f32.gmra.mxu0 %v2781
        %v2823 = vpop.f32.mrf.mxu0
        %v2824 = vadd.f32 %v2789, %v2823
        %2825 = vmatmul.f32.gmra.mxu0 %v2783
        %v2826 = vpop.f32.mrf.mxu0
        %v2827 = vadd.f32 %v2789, %v2826
        %2828 = vmatmul.f32.gmra.mxu0 %v2785
        %v2829 = vpop.f32.mrf.mxu0
        %v2830 = vadd.f32 %v2789, %v2829
        %2831 = vdwg.mxu0
        %2832 = vmatpush.msra.mxu0 %v2770
        %2833 = vmatpush.msra.mxu0 %v2769
        %2834 = vmatpush.msra.mxu0 %v2768
        %2835 = vmatpush.msra.mxu0 %v2767
        %2836 = vmatpush.msra.mxu0 %v2766
        %2837 = vmatpush.msra.mxu0 %v2765
        %2838 = vmatpush.msra.mxu0 %v2764
        %2839 = vmatpush.msra.mxu0 %v2763
        %2840 = vmatpush.msra.mxu0 %v2762
        %2841 = vmatpush.msra.mxu0 %v2761
        %2842 = vmatpush.msra.mxu0 %v2760
        %2843 = vmatpush.msra.mxu0 %v2759
        %2844 = vmatpush.msra.mxu0 %v2758
        %2845 = vmatpush.msra.mxu0 %v2757
        %2846 = vmatpush.msra.mxu0 %v2756
        %2847 = vmatpush.msra.mxu0 %v2755
        %2848 = vmatmul.f32.gmra.mxu0 %v2772
        %v2849 = vpop.f32.mrf.mxu0
        %v2850 = vadd.f32 %v2809, %v2849
        %2851 = vmatmul.f32.gmra.mxu0 %v2774
        %v2852 = vpop.f32.mrf.mxu0
        %v2853 = vadd.f32 %v2812, %v2852
        %2854 = vmatmul.f32.gmra.mxu0 %v2776
        %v2855 = vpop.f32.mrf.mxu0
        %v2856 = vadd.f32 %v2815, %v2855
        %2857 = vmatmul.f32.gmra.mxu0 %v2778
        %v2858 = vpop.f32.mrf.mxu0
        %v2859 = vadd.f32 %v2818, %v2858
        %2860 = vmatmul.f32.gmra.mxu0 %v2780
        %v2861 = vpop.f32.mrf.mxu0
        %v2862 = vadd.f32 %v2821, %v2861
        %2863 = vmatmul.f32.gmra.mxu0 %v2782
        %v2864 = vpop.f32.mrf.mxu0
        %v2865 = vadd.f32 %v2824, %v2864
        %2866 = vmatmul.f32.gmra.mxu0 %v2784
        %v2867 = vpop.f32.mrf.mxu0
        %v2868 = vadd.f32 %v2827, %v2867
        %2869 = vmatmul.f32.gmra.mxu0 %v2786
        %v2870 = vpop.f32.mrf.mxu0
        %v2871 = vadd.f32 %v2830, %v2870
        %2872 = vdwg.mxu0
        %v2873 = vmax.f32 %v2850, 0.0
        %v2874 = vmax.f32 %v2853, 0.0
        %v2875 = vmax.f32 %v2856, 0.0
        %v2876 = vmax.f32 %v2859, 0.0
        %v2877 = vmax.f32 %v2862, 0.0
        %v2878 = vmax.f32 %v2865, 0.0
        %v2879 = vmax.f32 %v2868, 0.0
        %v2880 = vmax.f32 %v2871, 0.0
        %vm2881 = vcmask 261120
        %2882 = vst.msk [vmem:[#allocation2] sm:$0xff] %vm2881, 0.0
        %vm2883 = vcmask 254976
        %2884 = vst.msk [vmem:[#allocation2 + $0x8] sm:$0x3] %vm2883, 0.0
        %2885 = vst.msk [vmem:[#allocation2 + $0x10] sm:$0xff] %vm2881, 0.0
        %2886 = vst.msk [vmem:[#allocation2 + $0x18] sm:$0x3] %vm2883, 0.0
        %2887 = vst.msk [vmem:[#allocation2 + $0x20] sm:$0xff] %vm2881, 0.0
        %2888 = vst.msk [vmem:[#allocation2 + $0x28] sm:$0x3] %vm2883, 0.0
        %2889 = vst.msk [vmem:[#allocation2 + $0x30] sm:$0xff] %vm2881, 0.0
        %2890 = vst.msk [vmem:[#allocation2 + $0x38] sm:$0x3] %vm2883, 0.0
        %2891 = vst.msk [vmem:[#allocation2 + $0x40] sm:$0xff] %vm2881, 0.0
        %2892 = vst.msk [vmem:[#allocation2 + $0x48] sm:$0x3] %vm2883, 0.0
        %2893 = vst.msk [vmem:[#allocation2 + $0x50] sm:$0xff] %vm2881, 0.0
        %2894 = vst.msk [vmem:[#allocation2 + $0x58] sm:$0x3] %vm2883, 0.0
        %2895 = vst.msk [vmem:[#allocation2 + $0x60] sm:$0xff] %vm2881, 0.0
        %2896 = vst.msk [vmem:[#allocation2 + $0x68] sm:$0x3] %vm2883, 0.0
        %2897 = vst.msk [vmem:[#allocation2 + $0x70] sm:$0xff] %vm2881, 0.0
        %2898 = vst.msk [vmem:[#allocation2 + $0x78] sm:$0x3] %vm2883, 0.0
        %2899 = vst.msk [vmem:[#allocation2 + $0x80] sm:$0xff] %vm2881, 0.0
        %2900 = vst.msk [vmem:[#allocation2 + $0x88] sm:$0x3] %vm2883, 0.0
        %2901 = vst.msk [vmem:[#allocation2 + $0x90] sm:$0xff] %vm2881, 0.0
        %2902 = vst.msk [vmem:[#allocation2 + $0x98] sm:$0x3] %vm2883, 0.0
        %s2903 = scalar_lea.vmem [#allocation2], 16
        %2904 = vst.msk [vmem:[%s2903 + $0x1] sm:$0xff] %vm2881, %v2873
        %2905 = vst.msk [vmem:[%s2903 + $0x11] sm:$0xff] %vm2881, %v2874
        %2906 = vst.msk [vmem:[%s2903 + $0x21] sm:$0xff] %vm2881, %v2875
        %2907 = vst.msk [vmem:[%s2903 + $0x31] sm:$0xff] %vm2881, %v2876
        %2908 = vst.msk [vmem:[%s2903 + $0x41] sm:$0xff] %vm2881, %v2877
        %2909 = vst.msk [vmem:[%s2903 + $0x51] sm:$0xff] %vm2881, %v2878
        %2910 = vst.msk [vmem:[%s2903 + $0x61] sm:$0xff] %vm2881, %v2879
        %2911 = vst.msk [vmem:[%s2903 + $0x71] sm:$0xff] %vm2881, %v2880
        %v2912 = vld [vmem:[#allocation2] sm:$0xff]
        %v2913 = vld [vmem:[#allocation2 + $0x10] sm:$0xff]
        %v2914 = vld [vmem:[#allocation2 + $0x20] sm:$0xff]
        %v2915 = vld [vmem:[#allocation2 + $0x30] sm:$0xff]
        %v2916 = vld [vmem:[#allocation2 + $0x40] sm:$0xff]
        %v2917 = vld [vmem:[#allocation2 + $0x50] sm:$0xff]
        %v2918 = vld [vmem:[#allocation2 + $0x60] sm:$0xff]
        %v2919 = vld [vmem:[#allocation2 + $0x70] sm:$0xff]
        %v2920 = vld [vmem:[%s3] sm:$0xff]
        %v2921 = vld [vmem:[%s3 + $0x8] sm:$0xff]
        %v2922 = vld [vmem:[%s3 + $0x10] sm:$0xff]
        %v2923 = vld [vmem:[%s3 + $0x18] sm:$0xff]
        %v2924 = vld [vmem:[#allocation2 + $0x1] sm:$0xff]
        %v2925 = vld [vmem:[#allocation2 + $0x11] sm:$0xff]
        %v2926 = vld [vmem:[#allocation2 + $0x21] sm:$0xff]
        %v2927 = vld [vmem:[#allocation2 + $0x31] sm:$0xff]
        %v2928 = vld [vmem:[#allocation2 + $0x41] sm:$0xff]
        %v2929 = vld [vmem:[#allocation2 + $0x51] sm:$0xff]
        %v2930 = vld [vmem:[#allocation2 + $0x61] sm:$0xff]
        %v2931 = vld [vmem:[#allocation2 + $0x71] sm:$0xff]
        %s2932 = scalar_lea.vmem %s3, 32
        %v2933 = vld [vmem:[%s2932] sm:$0xff]
        %v2934 = vld [vmem:[%s2932 + $0x8] sm:$0xff]
        %v2935 = vld [vmem:[%s2932 + $0x10] sm:$0xff]
        %v2936 = vld [vmem:[%s2932 + $0x18] sm:$0xff]
        %v2938 = vsel %vm2881, %v2924, 0
        %v2941 = vsel %vm2881, %v2925, 0
        %v2944 = vsel %vm2881, %v2926, 0
        %v2947 = vsel %vm2881, %v2927, 0
        %v2950 = vsel %vm2881, %v2928, 0
        %v2953 = vsel %vm2881, %v2929, 0
        %v2956 = vsel %vm2881, %v2930, 0
        %v2959 = vsel %vm2881, %v2931, 0
        %2961 = vmatpush.msra.mxu0 0.0
        %2962 = vmatpush.msra.mxu0 0.0
        %2963 = vmatpush.msra.mxu0 0.0
        %2964 = vmatpush.msra.mxu0 0.0
        %2965 = vmatpush.msra.mxu0 0.0
        %2966 = vmatpush.msra.mxu0 0.0
        %2967 = vmatpush.msra.mxu0 0.0
        %2968 = vmatpush.msra.mxu0 0.0
        %2969 = vmatpush.msra.mxu0 0.0
        %2970 = vmatpush.msra.mxu0 0.0
        %2971 = vmatpush.msra.mxu0 0.0
        %2972 = vmatpush.msra.mxu0 0.0
        %2973 = vmatpush.msra.mxu0 %v2936
        %2974 = vmatpush.msra.mxu0 %v2935
        %2975 = vmatpush.msra.mxu0 %v2934
        %2976 = vmatpush.msra.mxu0 %v2933
        %2977 = vmatmul.f32.gmra.mxu0 %v2938
        %v2978 = vpop.f32.mrf.mxu0
        %v2979 = vadd.f32 0.0, %v2978
        %2980 = vmatmul.f32.gmra.mxu0 %v2941
        %v2981 = vpop.f32.mrf.mxu0
        %v2982 = vadd.f32 0.0, %v2981
        %2983 = vmatmul.f32.gmra.mxu0 %v2944
        %v2984 = vpop.f32.mrf.mxu0
        %v2985 = vadd.f32 0.0, %v2984
        %2986 = vmatmul.f32.gmra.mxu0 %v2947
        %v2987 = vpop.f32.mrf.mxu0
        %v2988 = vadd.f32 0.0, %v2987
        %2989 = vmatmul.f32.gmra.mxu0 %v2950
        %v2990 = vpop.f32.mrf.mxu0
        %v2991 = vadd.f32 0.0, %v2990
        %2992 = vmatmul.f32.gmra.mxu0 %v2953
        %v2993 = vpop.f32.mrf.mxu0
        %v2994 = vadd.f32 0.0, %v2993
        %2995 = vmatmul.f32.gmra.mxu0 %v2956
        %v2996 = vpop.f32.mrf.mxu0
        %v2997 = vadd.f32 0.0, %v2996
        %2998 = vmatmul.f32.gmra.mxu0 %v2959
        %v2999 = vpop.f32.mrf.mxu0
        %v3000 = vadd.f32 0.0, %v2999
        %3001 = vdwg.mxu0
        %v3003 = vsel %vm2881, %v2912, 0
        %v3006 = vsel %vm2881, %v2913, 0
        %v3009 = vsel %vm2881, %v2914, 0
        %v3012 = vsel %vm2881, %v2915, 0
        %v3015 = vsel %vm2881, %v2916, 0
        %v3018 = vsel %vm2881, %v2917, 0
        %v3021 = vsel %vm2881, %v2918, 0
        %v3024 = vsel %vm2881, %v2919, 0
        %3026 = vmatpush.msra.mxu0 0.0
        %3027 = vmatpush.msra.mxu0 0.0
        %3028 = vmatpush.msra.mxu0 0.0
        %3029 = vmatpush.msra.mxu0 0.0
        %3030 = vmatpush.msra.mxu0 0.0
        %3031 = vmatpush.msra.mxu0 0.0
        %3032 = vmatpush.msra.mxu0 0.0
        %3033 = vmatpush.msra.mxu0 0.0
        %3034 = vmatpush.msra.mxu0 0.0
        %3035 = vmatpush.msra.mxu0 0.0
        %3036 = vmatpush.msra.mxu0 0.0
        %3037 = vmatpush.msra.mxu0 0.0
        %3038 = vmatpush.msra.mxu0 %v2923
        %3039 = vmatpush.msra.mxu0 %v2922
        %3040 = vmatpush.msra.mxu0 %v2921
        %3041 = vmatpush.msra.mxu0 %v2920
        %3042 = vmatmul.f32.gmra.mxu0 %v3003
        %v3043 = vpop.f32.mrf.mxu0
        %v3044 = vadd.f32 %v2979, %v3043
        %3045 = vmatmul.f32.gmra.mxu0 %v3006
        %v3046 = vpop.f32.mrf.mxu0
        %v3047 = vadd.f32 %v2982, %v3046
        %3048 = vmatmul.f32.gmra.mxu0 %v3009
        %v3049 = vpop.f32.mrf.mxu0
        %v3050 = vadd.f32 %v2985, %v3049
        %3051 = vmatmul.f32.gmra.mxu0 %v3012
        %v3052 = vpop.f32.mrf.mxu0
        %v3053 = vadd.f32 %v2988, %v3052
        %3054 = vmatmul.f32.gmra.mxu0 %v3015
        %v3055 = vpop.f32.mrf.mxu0
        %v3056 = vadd.f32 %v2991, %v3055
        %3057 = vmatmul.f32.gmra.mxu0 %v3018
        %v3058 = vpop.f32.mrf.mxu0
        %v3059 = vadd.f32 %v2994, %v3058
        %3060 = vmatmul.f32.gmra.mxu0 %v3021
        %v3061 = vpop.f32.mrf.mxu0
        %v3062 = vadd.f32 %v2997, %v3061
        %3063 = vmatmul.f32.gmra.mxu0 %v3024
        %v3064 = vpop.f32.mrf.mxu0
        %v3065 = vadd.f32 %v3000, %v3064
        %3066 = vdwg.mxu0
        %v3067 = vld [vmem:[#allocation2 + $0x2] sm:$0xff]
        %v3068 = vld [vmem:[#allocation2 + $0x12] sm:$0xff]
        %v3069 = vld [vmem:[#allocation2 + $0x22] sm:$0xff]
        %v3070 = vld [vmem:[#allocation2 + $0x32] sm:$0xff]
        %v3071 = vld [vmem:[#allocation2 + $0x42] sm:$0xff]
        %v3072 = vld [vmem:[#allocation2 + $0x52] sm:$0xff]
        %v3073 = vld [vmem:[#allocation2 + $0x62] sm:$0xff]
        %v3074 = vld [vmem:[#allocation2 + $0x72] sm:$0xff]
        %s3075 = scalar_lea.vmem %s3, 64
        %v3076 = vld [vmem:[%s3075] sm:$0xff]
        %v3077 = vld [vmem:[%s3075 + $0x8] sm:$0xff]
        %v3078 = vld [vmem:[%s3075 + $0x10] sm:$0xff]
        %v3079 = vld [vmem:[%s3075 + $0x18] sm:$0xff]
        %v3081 = vsel %vm2881, %v3067, 0
        %v3084 = vsel %vm2881, %v3068, 0
        %v3087 = vsel %vm2881, %v3069, 0
        %v3090 = vsel %vm2881, %v3070, 0
        %v3093 = vsel %vm2881, %v3071, 0
        %v3096 = vsel %vm2881, %v3072, 0
        %v3099 = vsel %vm2881, %v3073, 0
        %v3102 = vsel %vm2881, %v3074, 0
        %3104 = vmatpush.msra.mxu0 0.0
        %3105 = vmatpush.msra.mxu0 0.0
        %3106 = vmatpush.msra.mxu0 0.0
        %3107 = vmatpush.msra.mxu0 0.0
        %3108 = vmatpush.msra.mxu0 0.0
        %3109 = vmatpush.msra.mxu0 0.0
        %3110 = vmatpush.msra.mxu0 0.0
        %3111 = vmatpush.msra.mxu0 0.0
        %3112 = vmatpush.msra.mxu0 0.0
        %3113 = vmatpush.msra.mxu0 0.0
        %3114 = vmatpush.msra.mxu0 0.0
        %3115 = vmatpush.msra.mxu0 0.0
        %3116 = vmatpush.msra.mxu0 %v3079
        %3117 = vmatpush.msra.mxu0 %v3078
        %3118 = vmatpush.msra.mxu0 %v3077
        %3119 = vmatpush.msra.mxu0 %v3076
        %3120 = vmatmul.f32.gmra.mxu0 %v3081
        %v3121 = vpop.f32.mrf.mxu0
        %v3122 = vadd.f32 0.0, %v3121
        %3123 = vmatmul.f32.gmra.mxu0 %v3084
        %v3124 = vpop.f32.mrf.mxu0
        %v3125 = vadd.f32 0.0, %v3124
        %3126 = vmatmul.f32.gmra.mxu0 %v3087
        %v3127 = vpop.f32.mrf.mxu0
        %v3128 = vadd.f32 0.0, %v3127
        %3129 = vmatmul.f32.gmra.mxu0 %v3090
        %v3130 = vpop.f32.mrf.mxu0
        %v3131 = vadd.f32 0.0, %v3130
        %3132 = vmatmul.f32.gmra.mxu0 %v3093
        %v3133 = vpop.f32.mrf.mxu0
        %v3134 = vadd.f32 0.0, %v3133
        %3135 = vmatmul.f32.gmra.mxu0 %v3096
        %v3136 = vpop.f32.mrf.mxu0
        %v3137 = vadd.f32 0.0, %v3136
        %3138 = vmatmul.f32.gmra.mxu0 %v3099
        %v3139 = vpop.f32.mrf.mxu0
        %v3140 = vadd.f32 0.0, %v3139
        %3141 = vmatmul.f32.gmra.mxu0 %v3102
        %v3142 = vpop.f32.mrf.mxu0
        %v3143 = vadd.f32 0.0, %v3142
        %3144 = vdwg.mxu0
        %v3145 = vadd.f32 %v3044, %v3122
        %v3146 = vadd.f32 %v3047, %v3125
        %v3147 = vadd.f32 %v3050, %v3128
        %v3148 = vadd.f32 %v3053, %v3131
        %v3149 = vadd.f32 %v3056, %v3134
        %v3150 = vadd.f32 %v3059, %v3137
        %v3151 = vadd.f32 %v3062, %v3140
        %v3152 = vadd.f32 %v3065, %v3143
        %v3153 = vld [vmem:[%s2903] sm:$0xff]
        %v3154 = vld [vmem:[%s2903 + $0x10] sm:$0xff]
        %v3155 = vld [vmem:[%s2903 + $0x20] sm:$0xff]
        %v3156 = vld [vmem:[%s2903 + $0x30] sm:$0xff]
        %v3157 = vld [vmem:[%s2903 + $0x40] sm:$0xff]
        %v3158 = vld [vmem:[%s2903 + $0x50] sm:$0xff]
        %v3159 = vld [vmem:[%s2903 + $0x60] sm:$0xff]
        %v3160 = vld [vmem:[%s2903 + $0x70] sm:$0xff]
        %s3161 = scalar_lea.vmem %s3, 96
        %v3162 = vld [vmem:[%s3161] sm:$0xff]
        %v3163 = vld [vmem:[%s3161 + $0x8] sm:$0xff]
        %v3164 = vld [vmem:[%s3161 + $0x10] sm:$0xff]
        %v3165 = vld [vmem:[%s3161 + $0x18] sm:$0xff]
        %v3167 = vsel %vm2881, %v3153, 0
        %v3170 = vsel %vm2881, %v3154, 0
        %v3173 = vsel %vm2881, %v3155, 0
        %v3176 = vsel %vm2881, %v3156, 0
        %v3179 = vsel %vm2881, %v3157, 0
        %v3182 = vsel %vm2881, %v3158, 0
        %v3185 = vsel %vm2881, %v3159, 0
        %v3188 = vsel %vm2881, %v3160, 0
        %3190 = vmatpush.msra.mxu0 0.0
        %3191 = vmatpush.msra.mxu0 0.0
        %3192 = vmatpush.msra.mxu0 0.0
        %3193 = vmatpush.msra.mxu0 0.0
        %3194 = vmatpush.msra.mxu0 0.0
        %3195 = vmatpush.msra.mxu0 0.0
        %3196 = vmatpush.msra.mxu0 0.0
        %3197 = vmatpush.msra.mxu0 0.0
        %3198 = vmatpush.msra.mxu0 0.0
        %3199 = vmatpush.msra.mxu0 0.0
        %3200 = vmatpush.msra.mxu0 0.0
        %3201 = vmatpush.msra.mxu0 0.0
        %3202 = vmatpush.msra.mxu0 %v3165
        %3203 = vmatpush.msra.mxu0 %v3164
        %3204 = vmatpush.msra.mxu0 %v3163
        %3205 = vmatpush.msra.mxu0 %v3162
        %3206 = vmatmul.f32.gmra.mxu0 %v3167
        %v3207 = vpop.f32.mrf.mxu0
        %v3208 = vadd.f32 0.0, %v3207
        %3209 = vmatmul.f32.gmra.mxu0 %v3170
        %v3210 = vpop.f32.mrf.mxu0
        %v3211 = vadd.f32 0.0, %v3210
        %3212 = vmatmul.f32.gmra.mxu0 %v3173
        %v3213 = vpop.f32.mrf.mxu0
        %v3214 = vadd.f32 0.0, %v3213
        %3215 = vmatmul.f32.gmra.mxu0 %v3176
        %v3216 = vpop.f32.mrf.mxu0
        %v3217 = vadd.f32 0.0, %v3216
        %3218 = vmatmul.f32.gmra.mxu0 %v3179
        %v3219 = vpop.f32.mrf.mxu0
        %v3220 = vadd.f32 0.0, %v3219
        %3221 = vmatmul.f32.gmra.mxu0 %v3182
        %v3222 = vpop.f32.mrf.mxu0
        %v3223 = vadd.f32 0.0, %v3222
        %3224 = vmatmul.f32.gmra.mxu0 %v3185
        %v3225 = vpop.f32.mrf.mxu0
        %v3226 = vadd.f32 0.0, %v3225
        %3227 = vmatmul.f32.gmra.mxu0 %v3188
        %v3228 = vpop.f32.mrf.mxu0
        %v3229 = vadd.f32 0.0, %v3228
        %3230 = vdwg.mxu0
        %v3231 = vadd.f32 %v3145, %v3208
        %v3232 = vadd.f32 %v3146, %v3211
        %v3233 = vadd.f32 %v3147, %v3214
        %v3234 = vadd.f32 %v3148, %v3217
        %v3235 = vadd.f32 %v3149, %v3220
        %v3236 = vadd.f32 %v3150, %v3223
        %v3237 = vadd.f32 %v3151, %v3226
        %v3238 = vadd.f32 %v3152, %v3229
        %v3239 = vld [vmem:[%s2903 + $0x1] sm:$0xff]
        %v3240 = vld [vmem:[%s2903 + $0x11] sm:$0xff]
        %v3241 = vld [vmem:[%s2903 + $0x21] sm:$0xff]
        %v3242 = vld [vmem:[%s2903 + $0x31] sm:$0xff]
        %v3243 = vld [vmem:[%s2903 + $0x41] sm:$0xff]
        %v3244 = vld [vmem:[%s2903 + $0x51] sm:$0xff]
        %v3245 = vld [vmem:[%s2903 + $0x61] sm:$0xff]
        %v3246 = vld [vmem:[%s2903 + $0x71] sm:$0xff]
        %s3247 = scalar_lea.vmem %s3, 128
        %v3248 = vld [vmem:[%s3247] sm:$0xff]
        %v3249 = vld [vmem:[%s3247 + $0x8] sm:$0xff]
        %v3250 = vld [vmem:[%s3247 + $0x10] sm:$0xff]
        %v3251 = vld [vmem:[%s3247 + $0x18] sm:$0xff]
        %v3253 = vsel %vm2881, %v3239, 0
        %v3256 = vsel %vm2881, %v3240, 0
        %v3259 = vsel %vm2881, %v3241, 0
        %v3262 = vsel %vm2881, %v3242, 0
        %v3265 = vsel %vm2881, %v3243, 0
        %v3268 = vsel %vm2881, %v3244, 0
        %v3271 = vsel %vm2881, %v3245, 0
        %v3274 = vsel %vm2881, %v3246, 0
        %3276 = vmatpush.msra.mxu0 0.0
        %3277 = vmatpush.msra.mxu0 0.0
        %3278 = vmatpush.msra.mxu0 0.0
        %3279 = vmatpush.msra.mxu0 0.0
        %3280 = vmatpush.msra.mxu0 0.0
        %3281 = vmatpush.msra.mxu0 0.0
        %3282 = vmatpush.msra.mxu0 0.0
        %3283 = vmatpush.msra.mxu0 0.0
        %3284 = vmatpush.msra.mxu0 0.0
        %3285 = vmatpush.msra.mxu0 0.0
        %3286 = vmatpush.msra.mxu0 0.0
        %3287 = vmatpush.msra.mxu0 0.0
        %3288 = vmatpush.msra.mxu0 %v3251
        %3289 = vmatpush.msra.mxu0 %v3250
        %3290 = vmatpush.msra.mxu0 %v3249
        %3291 = vmatpush.msra.mxu0 %v3248
        %3292 = vmatmul.f32.gmra.mxu0 %v3253
        %v3293 = vpop.f32.mrf.mxu0
        %v3294 = vadd.f32 0.0, %v3293
        %3295 = vmatmul.f32.gmra.mxu0 %v3256
        %v3296 = vpop.f32.mrf.mxu0
        %v3297 = vadd.f32 0.0, %v3296
        %3298 = vmatmul.f32.gmra.mxu0 %v3259
        %v3299 = vpop.f32.mrf.mxu0
        %v3300 = vadd.f32 0.0, %v3299
        %3301 = vmatmul.f32.gmra.mxu0 %v3262
        %v3302 = vpop.f32.mrf.mxu0
        %v3303 = vadd.f32 0.0, %v3302
        %3304 = vmatmul.f32.gmra.mxu0 %v3265
        %v3305 = vpop.f32.mrf.mxu0
        %v3306 = vadd.f32 0.0, %v3305
        %3307 = vmatmul.f32.gmra.mxu0 %v3268
        %v3308 = vpop.f32.mrf.mxu0
        %v3309 = vadd.f32 0.0, %v3308
        %3310 = vmatmul.f32.gmra.mxu0 %v3271
        %v3311 = vpop.f32.mrf.mxu0
        %v3312 = vadd.f32 0.0, %v3311
        %3313 = vmatmul.f32.gmra.mxu0 %v3274
        %v3314 = vpop.f32.mrf.mxu0
        %v3315 = vadd.f32 0.0, %v3314
        %3316 = vdwg.mxu0
        %v3317 = vadd.f32 %v3231, %v3294
        %v3318 = vadd.f32 %v3232, %v3297
        %v3319 = vadd.f32 %v3233, %v3300
        %v3320 = vadd.f32 %v3234, %v3303
        %v3321 = vadd.f32 %v3235, %v3306
        %v3322 = vadd.f32 %v3236, %v3309
        %v3323 = vadd.f32 %v3237, %v3312
        %v3324 = vadd.f32 %v3238, %v3315
        %v3325 = vld [vmem:[%s2903 + $0x2] sm:$0xff]
        %v3326 = vld [vmem:[%s2903 + $0x12] sm:$0xff]
        %v3327 = vld [vmem:[%s2903 + $0x22] sm:$0xff]
        %v3328 = vld [vmem:[%s2903 + $0x32] sm:$0xff]
        %v3329 = vld [vmem:[%s2903 + $0x42] sm:$0xff]
        %v3330 = vld [vmem:[%s2903 + $0x52] sm:$0xff]
        %v3331 = vld [vmem:[%s2903 + $0x62] sm:$0xff]
        %v3332 = vld [vmem:[%s2903 + $0x72] sm:$0xff]
        %s3333 = scalar_lea.vmem %s3, 160
        %v3334 = vld [vmem:[%s3333] sm:$0xff]
        %v3335 = vld [vmem:[%s3333 + $0x8] sm:$0xff]
        %v3336 = vld [vmem:[%s3333 + $0x10] sm:$0xff]
        %v3337 = vld [vmem:[%s3333 + $0x18] sm:$0xff]
        %v3339 = vsel %vm2881, %v3325, 0
        %v3342 = vsel %vm2881, %v3326, 0
        %v3345 = vsel %vm2881, %v3327, 0
        %v3348 = vsel %vm2881, %v3328, 0
        %v3351 = vsel %vm2881, %v3329, 0
        %v3354 = vsel %vm2881, %v3330, 0
        %v3357 = vsel %vm2881, %v3331, 0
        %v3360 = vsel %vm2881, %v3332, 0
        %3362 = vmatpush.msra.mxu0 0.0
        %3363 = vmatpush.msra.mxu0 0.0
        %3364 = vmatpush.msra.mxu0 0.0
        %3365 = vmatpush.msra.mxu0 0.0
        %3366 = vmatpush.msra.mxu0 0.0
        %3367 = vmatpush.msra.mxu0 0.0
        %3368 = vmatpush.msra.mxu0 0.0
        %3369 = vmatpush.msra.mxu0 0.0
        %3370 = vmatpush.msra.mxu0 0.0
        %3371 = vmatpush.msra.mxu0 0.0
        %3372 = vmatpush.msra.mxu0 0.0
        %3373 = vmatpush.msra.mxu0 0.0
        %3374 = vmatpush.msra.mxu0 %v3337
        %3375 = vmatpush.msra.mxu0 %v3336
        %3376 = vmatpush.msra.mxu0 %v3335
        %3377 = vmatpush.msra.mxu0 %v3334
        %3378 = vmatmul.f32.gmra.mxu0 %v3339
        %v3379 = vpop.f32.mrf.mxu0
        %v3380 = vadd.f32 0.0, %v3379
        %3381 = vmatmul.f32.gmra.mxu0 %v3342
        %v3382 = vpop.f32.mrf.mxu0
        %v3383 = vadd.f32 0.0, %v3382
        %3384 = vmatmul.f32.gmra.mxu0 %v3345
        %v3385 = vpop.f32.mrf.mxu0
        %v3386 = vadd.f32 0.0, %v3385
        %3387 = vmatmul.f32.gmra.mxu0 %v3348
        %v3388 = vpop.f32.mrf.mxu0
        %v3389 = vadd.f32 0.0, %v3388
        %3390 = vmatmul.f32.gmra.mxu0 %v3351
        %v3391 = vpop.f32.mrf.mxu0
        %v3392 = vadd.f32 0.0, %v3391
        %3393 = vmatmul.f32.gmra.mxu0 %v3354
        %v3394 = vpop.f32.mrf.mxu0
        %v3395 = vadd.f32 0.0, %v3394
        %3396 = vmatmul.f32.gmra.mxu0 %v3357
        %v3397 = vpop.f32.mrf.mxu0
        %v3398 = vadd.f32 0.0, %v3397
        %3399 = vmatmul.f32.gmra.mxu0 %v3360
        %v3400 = vpop.f32.mrf.mxu0
        %v3401 = vadd.f32 0.0, %v3400
        %3402 = vdwg.mxu0
        %v3403 = vadd.f32 %v3317, %v3380
        %v3404 = vadd.f32 %v3318, %v3383
        %v3405 = vadd.f32 %v3319, %v3386
        %v3406 = vadd.f32 %v3320, %v3389
        %v3407 = vadd.f32 %v3321, %v3392
        %v3408 = vadd.f32 %v3322, %v3395
        %v3409 = vadd.f32 %v3323, %v3398
        %v3410 = vadd.f32 %v3324, %v3401
        %s3411 = scalar_lea.vmem [#allocation2], 32
        %v3412 = vld [vmem:[%s3411] sm:$0xff]
        %v3413 = vld [vmem:[%s3411 + $0x10] sm:$0xff]
        %v3414 = vld [vmem:[%s3411 + $0x20] sm:$0xff]
        %v3415 = vld [vmem:[%s3411 + $0x30] sm:$0xff]
        %v3416 = vld [vmem:[%s3411 + $0x40] sm:$0xff]
        %v3417 = vld [vmem:[%s3411 + $0x50] sm:$0xff]
        %v3418 = vld [vmem:[%s3411 + $0x60] sm:$0xff]
        %v3419 = vld [vmem:[%s3411 + $0x70] sm:$0xff]
        %s3420 = scalar_lea.vmem %s3, 192
        %v3421 = vld [vmem:[%s3420] sm:$0xff]
        %v3422 = vld [vmem:[%s3420 + $0x8] sm:$0xff]
        %v3423 = vld [vmem:[%s3420 + $0x10] sm:$0xff]
        %v3424 = vld [vmem:[%s3420 + $0x18] sm:$0xff]
        %v3426 = vsel %vm2881, %v3412, 0
        %v3429 = vsel %vm2881, %v3413, 0
        %v3432 = vsel %vm2881, %v3414, 0
        %v3435 = vsel %vm2881, %v3415, 0
        %v3438 = vsel %vm2881, %v3416, 0
        %v3441 = vsel %vm2881, %v3417, 0
        %v3444 = vsel %vm2881, %v3418, 0
        %v3447 = vsel %vm2881, %v3419, 0
        %3449 = vmatpush.msra.mxu0 0.0
        %3450 = vmatpush.msra.mxu0 0.0
        %3451 = vmatpush.msra.mxu0 0.0
        %3452 = vmatpush.msra.mxu0 0.0
        %3453 = vmatpush.msra.mxu0 0.0
        %3454 = vmatpush.msra.mxu0 0.0
        %3455 = vmatpush.msra.mxu0 0.0
        %3456 = vmatpush.msra.mxu0 0.0
        %3457 = vmatpush.msra.mxu0 0.0
        %3458 = vmatpush.msra.mxu0 0.0
        %3459 = vmatpush.msra.mxu0 0.0
        %3460 = vmatpush.msra.mxu0 0.0
        %3461 = vmatpush.msra.mxu0 %v3424
        %3462 = vmatpush.msra.mxu0 %v3423
        %3463 = vmatpush.msra.mxu0 %v3422
        %3464 = vmatpush.msra.mxu0 %v3421
        %3465 = vmatmul.f32.gmra.mxu0 %v3426
        %v3466 = vpop.f32.mrf.mxu0
        %v3467 = vadd.f32 0.0, %v3466
        %3468 = vmatmul.f32.gmra.mxu0 %v3429
        %v3469 = vpop.f32.mrf.mxu0
        %v3470 = vadd.f32 0.0, %v3469
        %3471 = vmatmul.f32.gmra.mxu0 %v3432
        %v3472 = vpop.f32.mrf.mxu0
        %v3473 = vadd.f32 0.0, %v3472
        %3474 = vmatmul.f32.gmra.mxu0 %v3435
        %v3475 = vpop.f32.mrf.mxu0
        %v3476 = vadd.f32 0.0, %v3475
        %3477 = vmatmul.f32.gmra.mxu0 %v3438
        %v3478 = vpop.f32.mrf.mxu0
        %v3479 = vadd.f32 0.0, %v3478
        %3480 = vmatmul.f32.gmra.mxu0 %v3441
        %v3481 = vpop.f32.mrf.mxu0
        %v3482 = vadd.f32 0.0, %v3481
        %3483 = vmatmul.f32.gmra.mxu0 %v3444
        %v3484 = vpop.f32.mrf.mxu0
        %v3485 = vadd.f32 0.0, %v3484
        %3486 = vmatmul.f32.gmra.mxu0 %v3447
        %v3487 = vpop.f32.mrf.mxu0
        %v3488 = vadd.f32 0.0, %v3487
        %3489 = vdwg.mxu0
        %v3490 = vadd.f32 %v3403, %v3467
        %v3491 = vadd.f32 %v3404, %v3470
        %v3492 = vadd.f32 %v3405, %v3473
        %v3493 = vadd.f32 %v3406, %v3476
        %v3494 = vadd.f32 %v3407, %v3479
        %v3495 = vadd.f32 %v3408, %v3482
        %v3496 = vadd.f32 %v3409, %v3485
        %v3497 = vadd.f32 %v3410, %v3488
        %v3498 = vld [vmem:[%s3411 + $0x1] sm:$0xff]
        %v3499 = vld [vmem:[%s3411 + $0x11] sm:$0xff]
        %v3500 = vld [vmem:[%s3411 + $0x21] sm:$0xff]
        %v3501 = vld [vmem:[%s3411 + $0x31] sm:$0xff]
        %v3502 = vld [vmem:[%s3411 + $0x41] sm:$0xff]
        %v3503 = vld [vmem:[%s3411 + $0x51] sm:$0xff]
        %v3504 = vld [vmem:[%s3411 + $0x61] sm:$0xff]
        %v3505 = vld [vmem:[%s3411 + $0x71] sm:$0xff]
        %s3506 = scalar_lea.vmem %s3, 224
        %v3507 = vld [vmem:[%s3506] sm:$0xff]
        %v3508 = vld [vmem:[%s3506 + $0x8] sm:$0xff]
        %v3509 = vld [vmem:[%s3506 + $0x10] sm:$0xff]
        %v3510 = vld [vmem:[%s3506 + $0x18] sm:$0xff]
        %v3512 = vsel %vm2881, %v3498, 0
        %v3515 = vsel %vm2881, %v3499, 0
        %v3518 = vsel %vm2881, %v3500, 0
        %v3521 = vsel %vm2881, %v3501, 0
        %v3524 = vsel %vm2881, %v3502, 0
        %v3527 = vsel %vm2881, %v3503, 0
        %v3530 = vsel %vm2881, %v3504, 0
        %v3533 = vsel %vm2881, %v3505, 0
        %3535 = vmatpush.msra.mxu0 0.0
        %3536 = vmatpush.msra.mxu0 0.0
        %3537 = vmatpush.msra.mxu0 0.0
        %3538 = vmatpush.msra.mxu0 0.0
        %3539 = vmatpush.msra.mxu0 0.0
        %3540 = vmatpush.msra.mxu0 0.0
        %3541 = vmatpush.msra.mxu0 0.0
        %3542 = vmatpush.msra.mxu0 0.0
        %3543 = vmatpush.msra.mxu0 0.0
        %3544 = vmatpush.msra.mxu0 0.0
        %3545 = vmatpush.msra.mxu0 0.0
        %3546 = vmatpush.msra.mxu0 0.0
        %3547 = vmatpush.msra.mxu0 %v3510
        %3548 = vmatpush.msra.mxu0 %v3509
        %3549 = vmatpush.msra.mxu0 %v3508
        %3550 = vmatpush.msra.mxu0 %v3507
        %3551 = vmatmul.f32.gmra.mxu0 %v3512
        %v3552 = vpop.f32.mrf.mxu0
        %v3553 = vadd.f32 0.0, %v3552
        %3554 = vmatmul.f32.gmra.mxu0 %v3515
        %v3555 = vpop.f32.mrf.mxu0
        %v3556 = vadd.f32 0.0, %v3555
        %3557 = vmatmul.f32.gmra.mxu0 %v3518
        %v3558 = vpop.f32.mrf.mxu0
        %v3559 = vadd.f32 0.0, %v3558
        %3560 = vmatmul.f32.gmra.mxu0 %v3521
        %v3561 = vpop.f32.mrf.mxu0
        %v3562 = vadd.f32 0.0, %v3561
        %3563 = vmatmul.f32.gmra.mxu0 %v3524
        %v3564 = vpop.f32.mrf.mxu0
        %v3565 = vadd.f32 0.0, %v3564
        %3566 = vmatmul.f32.gmra.mxu0 %v3527
        %v3567 = vpop.f32.mrf.mxu0
        %v3568 = vadd.f32 0.0, %v3567
        %3569 = vmatmul.f32.gmra.mxu0 %v3530
        %v3570 = vpop.f32.mrf.mxu0
        %v3571 = vadd.f32 0.0, %v3570
        %3572 = vmatmul.f32.gmra.mxu0 %v3533
        %v3573 = vpop.f32.mrf.mxu0
        %v3574 = vadd.f32 0.0, %v3573
        %3575 = vdwg.mxu0
        %v3576 = vadd.f32 %v3490, %v3553
        %v3577 = vadd.f32 %v3491, %v3556
        %v3578 = vadd.f32 %v3492, %v3559
        %v3579 = vadd.f32 %v3493, %v3562
        %v3580 = vadd.f32 %v3494, %v3565
        %v3581 = vadd.f32 %v3495, %v3568
        %v3582 = vadd.f32 %v3496, %v3571
        %v3583 = vadd.f32 %v3497, %v3574
        %v3584 = vld [vmem:[%s3411 + $0x2] sm:$0xff]
        %v3585 = vld [vmem:[%s3411 + $0x12] sm:$0xff]
        %v3586 = vld [vmem:[%s3411 + $0x22] sm:$0xff]
        %v3587 = vld [vmem:[%s3411 + $0x32] sm:$0xff]
        %v3588 = vld [vmem:[%s3411 + $0x42] sm:$0xff]
        %v3589 = vld [vmem:[%s3411 + $0x52] sm:$0xff]
        %v3590 = vld [vmem:[%s3411 + $0x62] sm:$0xff]
        %v3591 = vld [vmem:[%s3411 + $0x72] sm:$0xff]
        %s3592 = scalar_lea.vmem %s3, 256
        %v3593 = vld [vmem:[%s3592] sm:$0xff]
        %v3594 = vld [vmem:[%s3592 + $0x8] sm:$0xff]
        %v3595 = vld [vmem:[%s3592 + $0x10] sm:$0xff]
        %v3596 = vld [vmem:[%s3592 + $0x18] sm:$0xff]
        %v3598 = vsel %vm2881, %v3584, 0
        %v3601 = vsel %vm2881, %v3585, 0
        %v3604 = vsel %vm2881, %v3586, 0
        %v3607 = vsel %vm2881, %v3587, 0
        %v3610 = vsel %vm2881, %v3588, 0
        %v3613 = vsel %vm2881, %v3589, 0
        %v3616 = vsel %vm2881, %v3590, 0
        %v3619 = vsel %vm2881, %v3591, 0
        %3621 = vmatpush.msra.mxu0 0.0
        %3622 = vmatpush.msra.mxu0 0.0
        %3623 = vmatpush.msra.mxu0 0.0
        %3624 = vmatpush.msra.mxu0 0.0
        %3625 = vmatpush.msra.mxu0 0.0
        %3626 = vmatpush.msra.mxu0 0.0
        %3627 = vmatpush.msra.mxu0 0.0
        %3628 = vmatpush.msra.mxu0 0.0
        %3629 = vmatpush.msra.mxu0 0.0
        %3630 = vmatpush.msra.mxu0 0.0
        %3631 = vmatpush.msra.mxu0 0.0
        %3632 = vmatpush.msra.mxu0 0.0
        %3633 = vmatpush.msra.mxu0 %v3596
        %3634 = vmatpush.msra.mxu0 %v3595
        %3635 = vmatpush.msra.mxu0 %v3594
        %3636 = vmatpush.msra.mxu0 %v3593
        %3637 = vmatmul.f32.gmra.mxu0 %v3598
        %v3638 = vpop.f32.mrf.mxu0
        %v3639 = vadd.f32 0.0, %v3638
        %3640 = vmatmul.f32.gmra.mxu0 %v3601
        %v3641 = vpop.f32.mrf.mxu0
        %v3642 = vadd.f32 0.0, %v3641
        %3643 = vmatmul.f32.gmra.mxu0 %v3604
        %v3644 = vpop.f32.mrf.mxu0
        %v3645 = vadd.f32 0.0, %v3644
        %3646 = vmatmul.f32.gmra.mxu0 %v3607
        %v3647 = vpop.f32.mrf.mxu0
        %v3648 = vadd.f32 0.0, %v3647
        %3649 = vmatmul.f32.gmra.mxu0 %v3610
        %v3650 = vpop.f32.mrf.mxu0
        %v3651 = vadd.f32 0.0, %v3650
        %3652 = vmatmul.f32.gmra.mxu0 %v3613
        %v3653 = vpop.f32.mrf.mxu0
        %v3654 = vadd.f32 0.0, %v3653
        %3655 = vmatmul.f32.gmra.mxu0 %v3616
        %v3656 = vpop.f32.mrf.mxu0
        %v3657 = vadd.f32 0.0, %v3656
        %3658 = vmatmul.f32.gmra.mxu0 %v3619
        %v3659 = vpop.f32.mrf.mxu0
        %v3660 = vadd.f32 0.0, %v3659
        %3661 = vdwg.mxu0
        %v3662 = vadd.f32 %v3576, %v3639
        %v3663 = vadd.f32 %v3577, %v3642
        %v3664 = vadd.f32 %v3578, %v3645
        %v3665 = vadd.f32 %v3579, %v3648
        %v3666 = vadd.f32 %v3580, %v3651
        %v3667 = vadd.f32 %v3581, %v3654
        %v3668 = vadd.f32 %v3582, %v3657
        %v3669 = vadd.f32 %v3583, %v3660
        %v3670 = vld [vmem:[%s6] sm:$0xff]
        %v3671 = vld [vmem:[%s6 + $0x8] sm:$0xff]
        %v3672 = vld [vmem:[%s4] sm:$0x1]
        %v3674 = vperm.slane %v3672, 0
        %vm3676 = vcmask 523264
        %v3678 = vsel %vm3676, %v3670, 0
        %v3681 = vsel %vm3676, %v3671, 0
        %3683 = vmatpush.msra.mxu0 0.0
        %3684 = vmatpush.msra.mxu0 0.0
        %3685 = vmatpush.msra.mxu0 0.0
        %3686 = vmatpush.msra.mxu0 0.0
        %3687 = vmatpush.msra.mxu0 0.0
        %3688 = vmatpush.msra.mxu0 0.0
        %3689 = vmatpush.msra.mxu0 0.0
        %3690 = vmatpush.msra.mxu0 0.0
        %3691 = vmatpush.msra.mxu0 %v3669
        %3692 = vmatpush.msra.mxu0 %v3668
        %3693 = vmatpush.msra.mxu0 %v3667
        %3694 = vmatpush.msra.mxu0 %v3666
        %3695 = vmatpush.msra.mxu0 %v3665
        %3696 = vmatpush.msra.mxu0 %v3664
        %3697 = vmatpush.msra.mxu0 %v3663
        %3698 = vmatpush.msra.mxu0 %v3662
        %3699 = vmatmul.f32.gmra.mxu0 %v3678
        %v3700 = vpop.f32.mrf.mxu0
        %v3701 = vadd.f32 %v3674, %v3700
        %3702 = vmatmul.f32.gmra.mxu0 %v3681
        %v3703 = vpop.f32.mrf.mxu0
        %v3704 = vadd.f32 %v3674, %v3703
        %3705 = vdwg.mxu0
        %v3706 = vmax.f32 %v3701, 0.0
        %v3707 = vmax.f32 %v3704, 0.0
        %v3708 = vld [vmem:[%s8] sm:$0x1]
        %v3709 = vld [vmem:[%s7] sm:$0xff]
        %v3710 = vld [vmem:[%s7 + $0x8] sm:$0xff]
        %v3711 = vld [vmem:[%s7 + $0x10] sm:$0xff]
        %v3712 = vld [vmem:[%s7 + $0x18] sm:$0xff]
        %v3713 = vld [vmem:[%s7 + $0x20] sm:$0xff]
        %v3714 = vld [vmem:[%s7 + $0x28] sm:$0xff]
        %v3715 = vld [vmem:[%s7 + $0x30] sm:$0xff]
        %v3716 = vld [vmem:[%s7 + $0x38] sm:$0xff]
        %v3718 = vsel %vm3676, %v3706, 0
        %3720 = vmatpush.msra.mxu0 0.0
        %3721 = vmatpush.msra.mxu0 0.0
        %3722 = vmatpush.msra.mxu0 0.0
        %3723 = vmatpush.msra.mxu0 0.0
        %3724 = vmatpush.msra.mxu0 0.0
        %3725 = vmatpush.msra.mxu0 0.0
        %3726 = vmatpush.msra.mxu0 0.0
        %3727 = vmatpush.msra.mxu0 0.0
        %3728 = vmatpush.msra.mxu0 %v3716
        %3729 = vmatpush.msra.mxu0 %v3715
        %3730 = vmatpush.msra.mxu0 %v3714
        %3731 = vmatpush.msra.mxu0 %v3713
        %3732 = vmatpush.msra.mxu0 %v3712
        %3733 = vmatpush.msra.mxu0 %v3711
        %3734 = vmatpush.msra.mxu0 %v3710
        %3735 = vmatpush.msra.mxu0 %v3709
        %3736 = vmatmul.f32.gmra.mxu0 %v3718
        %v3737 = vpop.f32.mrf.mxu0
        %v3738 = vadd.f32 0.0, %v3737
        %3739 = vdwg.mxu0
        %v3740 = vadd.f32 %v3708, %v3738
        %s3741 = scalar_lea.vmem %s7, 64
        %v3742 = vld [vmem:[%s3741] sm:$0xff]
        %v3743 = vld [vmem:[%s3741 + $0x8] sm:$0xff]
        %v3744 = vld [vmem:[%s3741 + $0x10] sm:$0xff]
        %v3745 = vld [vmem:[%s3741 + $0x18] sm:$0xff]
        %v3746 = vld [vmem:[%s3741 + $0x20] sm:$0xff]
        %v3747 = vld [vmem:[%s3741 + $0x28] sm:$0xff]
        %v3748 = vld [vmem:[%s3741 + $0x30] sm:$0xff]
        %v3749 = vld [vmem:[%s3741 + $0x38] sm:$0xff]
        %v3750 = vrot.slane %v3706, 1
        %v3751 = vsel %vm3676, %v3750, 0
        %3753 = vmatpush.msra.mxu0 0.0
        %3754 = vmatpush.msra.mxu0 0.0
        %3755 = vmatpush.msra.mxu0 0.0
        %3756 = vmatpush.msra.mxu0 0.0
        %3757 = vmatpush.msra.mxu0 0.0
        %3758 = vmatpush.msra.mxu0 0.0
        %3759 = vmatpush.msra.mxu0 0.0
        %3760 = vmatpush.msra.mxu0 0.0
        %3761 = vmatpush.msra.mxu0 %v3749
        %3762 = vmatpush.msra.mxu0 %v3748
        %3763 = vmatpush.msra.mxu0 %v3747
        %3764 = vmatpush.msra.mxu0 %v3746
        %3765 = vmatpush.msra.mxu0 %v3745
        %3766 = vmatpush.msra.mxu0 %v3744
        %3767 = vmatpush.msra.mxu0 %v3743
        %3768 = vmatpush.msra.mxu0 %v3742
        %3769 = vmatmul.f32.gmra.mxu0 %v3751
        %v3770 = vpop.f32.mrf.mxu0
        %v3771 = vadd.f32 0.0, %v3770
        %3772 = vdwg.mxu0
        %v3773 = vadd.f32 %v3740, %v3771
        %s3774 = scalar_lea.vmem %s7, 128
        %v3775 = vld [vmem:[%s3774] sm:$0xff]
        %v3776 = vld [vmem:[%s3774 + $0x8] sm:$0xff]
        %v3777 = vld [vmem:[%s3774 + $0x10] sm:$0xff]
        %v3778 = vld [vmem:[%s3774 + $0x18] sm:$0xff]
        %v3779 = vld [vmem:[%s3774 + $0x20] sm:$0xff]
        %v3780 = vld [vmem:[%s3774 + $0x28] sm:$0xff]
        %v3781 = vld [vmem:[%s3774 + $0x30] sm:$0xff]
        %v3782 = vld [vmem:[%s3774 + $0x38] sm:$0xff]
        %v3783 = vrot.slane %v3706, 2
        %v3784 = vsel %vm3676, %v3783, 0
        %3786 = vmatpush.msra.mxu0 0.0
        %3787 = vmatpush.msra.mxu0 0.0
        %3788 = vmatpush.msra.mxu0 0.0
        %3789 = vmatpush.msra.mxu0 0.0
        %3790 = vmatpush.msra.mxu0 0.0
        %3791 = vmatpush.msra.mxu0 0.0
        %3792 = vmatpush.msra.mxu0 0.0
        %3793 = vmatpush.msra.mxu0 0.0
        %3794 = vmatpush.msra.mxu0 %v3782
        %3795 = vmatpush.msra.mxu0 %v3781
        %3796 = vmatpush.msra.mxu0 %v3780
        %3797 = vmatpush.msra.mxu0 %v3779
        %3798 = vmatpush.msra.mxu0 %v3778
        %3799 = vmatpush.msra.mxu0 %v3777
        %3800 = vmatpush.msra.mxu0 %v3776
        %3801 = vmatpush.msra.mxu0 %v3775
        %3802 = vmatmul.f32.gmra.mxu0 %v3784
        %v3803 = vpop.f32.mrf.mxu0
        %v3804 = vadd.f32 0.0, %v3803
        %3805 = vdwg.mxu0
        %v3806 = vadd.f32 %v3773, %v3804
        %s3807 = scalar_lea.vmem %s7, 192
        %v3808 = vld [vmem:[%s3807] sm:$0xff]
        %v3809 = vld [vmem:[%s3807 + $0x8] sm:$0xff]
        %v3810 = vld [vmem:[%s3807 + $0x10] sm:$0xff]
        %v3811 = vld [vmem:[%s3807 + $0x18] sm:$0xff]
        %v3812 = vld [vmem:[%s3807 + $0x20] sm:$0xff]
        %v3813 = vld [vmem:[%s3807 + $0x28] sm:$0xff]
        %v3814 = vld [vmem:[%s3807 + $0x30] sm:$0xff]
        %v3815 = vld [vmem:[%s3807 + $0x38] sm:$0xff]
        %v3816 = vrot.slane %v3706, 3
        %v3817 = vsel %vm3676, %v3816, 0
        %3819 = vmatpush.msra.mxu0 0.0
        %3820 = vmatpush.msra.mxu0 0.0
        %3821 = vmatpush.msra.mxu0 0.0
        %3822 = vmatpush.msra.mxu0 0.0
        %3823 = vmatpush.msra.mxu0 0.0
        %3824 = vmatpush.msra.mxu0 0.0
        %3825 = vmatpush.msra.mxu0 0.0
        %3826 = vmatpush.msra.mxu0 0.0
        %3827 = vmatpush.msra.mxu0 %v3815
        %3828 = vmatpush.msra.mxu0 %v3814
        %3829 = vmatpush.msra.mxu0 %v3813
        %3830 = vmatpush.msra.mxu0 %v3812
        %3831 = vmatpush.msra.mxu0 %v3811
        %3832 = vmatpush.msra.mxu0 %v3810
        %3833 = vmatpush.msra.mxu0 %v3809
        %3834 = vmatpush.msra.mxu0 %v3808
        %3835 = vmatmul.f32.gmra.mxu0 %v3817
        %v3836 = vpop.f32.mrf.mxu0
        %v3837 = vadd.f32 0.0, %v3836
        %3838 = vdwg.mxu0
        %v3839 = vadd.f32 %v3806, %v3837
        %s3840 = scalar_lea.vmem %s7, 256
        %v3841 = vld [vmem:[%s3840] sm:$0xff]
        %v3842 = vld [vmem:[%s3840 + $0x8] sm:$0xff]
        %v3843 = vld [vmem:[%s3840 + $0x10] sm:$0xff]
        %v3844 = vld [vmem:[%s3840 + $0x18] sm:$0xff]
        %v3845 = vld [vmem:[%s3840 + $0x20] sm:$0xff]
        %v3846 = vld [vmem:[%s3840 + $0x28] sm:$0xff]
        %v3847 = vld [vmem:[%s3840 + $0x30] sm:$0xff]
        %v3848 = vld [vmem:[%s3840 + $0x38] sm:$0xff]
        %v3849 = vrot.slane %v3706, 4
        %v3850 = vsel %vm3676, %v3849, 0
        %3852 = vmatpush.msra.mxu0 0.0
        %3853 = vmatpush.msra.mxu0 0.0
        %3854 = vmatpush.msra.mxu0 0.0
        %3855 = vmatpush.msra.mxu0 0.0
        %3856 = vmatpush.msra.mxu0 0.0
        %3857 = vmatpush.msra.mxu0 0.0
        %3858 = vmatpush.msra.mxu0 0.0
        %3859 = vmatpush.msra.mxu0 0.0
        %3860 = vmatpush.msra.mxu0 %v3848
        %3861 = vmatpush.msra.mxu0 %v3847
        %3862 = vmatpush.msra.mxu0 %v3846
        %3863 = vmatpush.msra.mxu0 %v3845
        %3864 = vmatpush.msra.mxu0 %v3844
        %3865 = vmatpush.msra.mxu0 %v3843
        %3866 = vmatpush.msra.mxu0 %v3842
        %3867 = vmatpush.msra.mxu0 %v3841
        %3868 = vmatmul.f32.gmra.mxu0 %v3850
        %v3869 = vpop.f32.mrf.mxu0
        %v3870 = vadd.f32 0.0, %v3869
        %3871 = vdwg.mxu0
        %v3872 = vadd.f32 %v3839, %v3870
        %s3873 = scalar_lea.vmem %s7, 320
        %v3874 = vld [vmem:[%s3873] sm:$0xff]
        %v3875 = vld [vmem:[%s3873 + $0x8] sm:$0xff]
        %v3876 = vld [vmem:[%s3873 + $0x10] sm:$0xff]
        %v3877 = vld [vmem:[%s3873 + $0x18] sm:$0xff]
        %v3878 = vld [vmem:[%s3873 + $0x20] sm:$0xff]
        %v3879 = vld [vmem:[%s3873 + $0x28] sm:$0xff]
        %v3880 = vld [vmem:[%s3873 + $0x30] sm:$0xff]
        %v3881 = vld [vmem:[%s3873 + $0x38] sm:$0xff]
        %v3882 = vrot.slane %v3706, 5
        %v3883 = vsel %vm3676, %v3882, 0
        %3885 = vmatpush.msra.mxu0 0.0
        %3886 = vmatpush.msra.mxu0 0.0
        %3887 = vmatpush.msra.mxu0 0.0
        %3888 = vmatpush.msra.mxu0 0.0
        %3889 = vmatpush.msra.mxu0 0.0
        %3890 = vmatpush.msra.mxu0 0.0
        %3891 = vmatpush.msra.mxu0 0.0
        %3892 = vmatpush.msra.mxu0 0.0
        %3893 = vmatpush.msra.mxu0 %v3881
        %3894 = vmatpush.msra.mxu0 %v3880
        %3895 = vmatpush.msra.mxu0 %v3879
        %3896 = vmatpush.msra.mxu0 %v3878
        %3897 = vmatpush.msra.mxu0 %v3877
        %3898 = vmatpush.msra.mxu0 %v3876
        %3899 = vmatpush.msra.mxu0 %v3875
        %3900 = vmatpush.msra.mxu0 %v3874
        %3901 = vmatmul.f32.gmra.mxu0 %v3883
        %v3902 = vpop.f32.mrf.mxu0
        %v3903 = vadd.f32 0.0, %v3902
        %3904 = vdwg.mxu0
        %v3905 = vadd.f32 %v3872, %v3903
        %s3906 = scalar_lea.vmem %s7, 384
        %v3907 = vld [vmem:[%s3906] sm:$0xff]
        %v3908 = vld [vmem:[%s3906 + $0x8] sm:$0xff]
        %v3909 = vld [vmem:[%s3906 + $0x10] sm:$0xff]
        %v3910 = vld [vmem:[%s3906 + $0x18] sm:$0xff]
        %v3911 = vld [vmem:[%s3906 + $0x20] sm:$0xff]
        %v3912 = vld [vmem:[%s3906 + $0x28] sm:$0xff]
        %v3913 = vld [vmem:[%s3906 + $0x30] sm:$0xff]
        %v3914 = vld [vmem:[%s3906 + $0x38] sm:$0xff]
        %v3915 = vrot.slane %v3706, 6
        %v3916 = vsel %vm3676, %v3915, 0
        %3918 = vmatpush.msra.mxu0 0.0
        %3919 = vmatpush.msra.mxu0 0.0
        %3920 = vmatpush.msra.mxu0 0.0
        %3921 = vmatpush.msra.mxu0 0.0
        %3922 = vmatpush.msra.mxu0 0.0
        %3923 = vmatpush.msra.mxu0 0.0
        %3924 = vmatpush.msra.mxu0 0.0
        %3925 = vmatpush.msra.mxu0 0.0
        %3926 = vmatpush.msra.mxu0 %v3914
        %3927 = vmatpush.msra.mxu0 %v3913
        %3928 = vmatpush.msra.mxu0 %v3912
        %3929 = vmatpush.msra.mxu0 %v3911
        %3930 = vmatpush.msra.mxu0 %v3910
        %3931 = vmatpush.msra.mxu0 %v3909
        %3932 = vmatpush.msra.mxu0 %v3908
        %3933 = vmatpush.msra.mxu0 %v3907
        %3934 = vmatmul.f32.gmra.mxu0 %v3916
        %v3935 = vpop.f32.mrf.mxu0
        %v3936 = vadd.f32 0.0, %v3935
        %3937 = vdwg.mxu0
        %v3938 = vadd.f32 %v3905, %v3936
        %s3939 = scalar_lea.vmem %s7, 448
        %v3940 = vld [vmem:[%s3939] sm:$0xff]
        %v3941 = vld [vmem:[%s3939 + $0x8] sm:$0xff]
        %v3942 = vld [vmem:[%s3939 + $0x10] sm:$0xff]
        %v3943 = vld [vmem:[%s3939 + $0x18] sm:$0xff]
        %v3944 = vld [vmem:[%s3939 + $0x20] sm:$0xff]
        %v3945 = vld [vmem:[%s3939 + $0x28] sm:$0xff]
        %v3946 = vld [vmem:[%s3939 + $0x30] sm:$0xff]
        %v3947 = vld [vmem:[%s3939 + $0x38] sm:$0xff]
        %v3948 = vrot.slane %v3706, 7
        %v3949 = vsel %vm3676, %v3948, 0
        %3951 = vmatpush.msra.mxu0 0.0
        %3952 = vmatpush.msra.mxu0 0.0
        %3953 = vmatpush.msra.mxu0 0.0
        %3954 = vmatpush.msra.mxu0 0.0
        %3955 = vmatpush.msra.mxu0 0.0
        %3956 = vmatpush.msra.mxu0 0.0
        %3957 = vmatpush.msra.mxu0 0.0
        %3958 = vmatpush.msra.mxu0 0.0
        %3959 = vmatpush.msra.mxu0 %v3947
        %3960 = vmatpush.msra.mxu0 %v3946
        %3961 = vmatpush.msra.mxu0 %v3945
        %3962 = vmatpush.msra.mxu0 %v3944
        %3963 = vmatpush.msra.mxu0 %v3943
        %3964 = vmatpush.msra.mxu0 %v3942
        %3965 = vmatpush.msra.mxu0 %v3941
        %3966 = vmatpush.msra.mxu0 %v3940
        %3967 = vmatmul.f32.gmra.mxu0 %v3949
        %v3968 = vpop.f32.mrf.mxu0
        %v3969 = vadd.f32 0.0, %v3968
        %3970 = vdwg.mxu0
        %v3971 = vadd.f32 %v3938, %v3969
        %s3972 = scalar_lea.vmem %s7, 512
        %v3973 = vld [vmem:[%s3972] sm:$0xff]
        %v3974 = vld [vmem:[%s3972 + $0x8] sm:$0xff]
        %v3975 = vld [vmem:[%s3972 + $0x10] sm:$0xff]
        %v3976 = vld [vmem:[%s3972 + $0x18] sm:$0xff]
        %v3977 = vld [vmem:[%s3972 + $0x20] sm:$0xff]
        %v3978 = vld [vmem:[%s3972 + $0x28] sm:$0xff]
        %v3979 = vld [vmem:[%s3972 + $0x30] sm:$0xff]
        %v3980 = vld [vmem:[%s3972 + $0x38] sm:$0xff]
        %v3982 = vsel %vm3676, %v3707, 0
        %3984 = vmatpush.msra.mxu0 0.0
        %3985 = vmatpush.msra.mxu0 0.0
        %3986 = vmatpush.msra.mxu0 0.0
        %3987 = vmatpush.msra.mxu0 0.0
        %3988 = vmatpush.msra.mxu0 0.0
        %3989 = vmatpush.msra.mxu0 0.0
        %3990 = vmatpush.msra.mxu0 0.0
        %3991 = vmatpush.msra.mxu0 0.0
        %3992 = vmatpush.msra.mxu0 %v3980
        %3993 = vmatpush.msra.mxu0 %v3979
        %3994 = vmatpush.msra.mxu0 %v3978
        %3995 = vmatpush.msra.mxu0 %v3977
        %3996 = vmatpush.msra.mxu0 %v3976
        %3997 = vmatpush.msra.mxu0 %v3975
        %3998 = vmatpush.msra.mxu0 %v3974
        %3999 = vmatpush.msra.mxu0 %v3973
        %4000 = vmatmul.f32.gmra.mxu0 %v3982
        %v4001 = vpop.f32.mrf.mxu0
        %v4002 = vadd.f32 0.0, %v4001
        %4003 = vdwg.mxu0
        %v4004 = vadd.f32 %v3971, %v4002
        %s4005 = scalar_lea.vmem %s7, 576
        %v4006 = vld [vmem:[%s4005] sm:$0xff]
        %v4007 = vld [vmem:[%s4005 + $0x8] sm:$0xff]
        %v4008 = vld [vmem:[%s4005 + $0x10] sm:$0xff]
        %v4009 = vld [vmem:[%s4005 + $0x18] sm:$0xff]
        %v4010 = vld [vmem:[%s4005 + $0x20] sm:$0xff]
        %v4011 = vld [vmem:[%s4005 + $0x28] sm:$0xff]
        %v4012 = vld [vmem:[%s4005 + $0x30] sm:$0xff]
        %v4013 = vld [vmem:[%s4005 + $0x38] sm:$0xff]
        %v4014 = vrot.slane %v3707, 1
        %v4015 = vsel %vm3676, %v4014, 0
        %4017 = vmatpush.msra.mxu0 0.0
        %4018 = vmatpush.msra.mxu0 0.0
        %4019 = vmatpush.msra.mxu0 0.0
        %4020 = vmatpush.msra.mxu0 0.0
        %4021 = vmatpush.msra.mxu0 0.0
        %4022 = vmatpush.msra.mxu0 0.0
        %4023 = vmatpush.msra.mxu0 0.0
        %4024 = vmatpush.msra.mxu0 0.0
        %4025 = vmatpush.msra.mxu0 %v4013
        %4026 = vmatpush.msra.mxu0 %v4012
        %4027 = vmatpush.msra.mxu0 %v4011
        %4028 = vmatpush.msra.mxu0 %v4010
        %4029 = vmatpush.msra.mxu0 %v4009
        %4030 = vmatpush.msra.mxu0 %v4008
        %4031 = vmatpush.msra.mxu0 %v4007
        %4032 = vmatpush.msra.mxu0 %v4006
        %4033 = vmatmul.f32.gmra.mxu0 %v4015
        %v4034 = vpop.f32.mrf.mxu0
        %v4035 = vadd.f32 0.0, %v4034
        %4036 = vdwg.mxu0
        %v4037 = vadd.f32 %v4004, %v4035
        %s4038 = scalar_lea.vmem %s7, 640
        %v4039 = vld [vmem:[%s4038] sm:$0xff]
        %v4040 = vld [vmem:[%s4038 + $0x8] sm:$0xff]
        %v4041 = vld [vmem:[%s4038 + $0x10] sm:$0xff]
        %v4042 = vld [vmem:[%s4038 + $0x18] sm:$0xff]
        %v4043 = vld [vmem:[%s4038 + $0x20] sm:$0xff]
        %v4044 = vld [vmem:[%s4038 + $0x28] sm:$0xff]
        %v4045 = vld [vmem:[%s4038 + $0x30] sm:$0xff]
        %v4046 = vld [vmem:[%s4038 + $0x38] sm:$0xff]
        %v4047 = vrot.slane %v3707, 2
        %v4048 = vsel %vm3676, %v4047, 0
        %4050 = vmatpush.msra.mxu0 0.0
        %4051 = vmatpush.msra.mxu0 0.0
        %4052 = vmatpush.msra.mxu0 0.0
        %4053 = vmatpush.msra.mxu0 0.0
        %4054 = vmatpush.msra.mxu0 0.0
        %4055 = vmatpush.msra.mxu0 0.0
        %4056 = vmatpush.msra.mxu0 0.0
        %4057 = vmatpush.msra.mxu0 0.0
        %4058 = vmatpush.msra.mxu0 %v4046
        %4059 = vmatpush.msra.mxu0 %v4045
        %4060 = vmatpush.msra.mxu0 %v4044
        %4061 = vmatpush.msra.mxu0 %v4043
        %4062 = vmatpush.msra.mxu0 %v4042
        %4063 = vmatpush.msra.mxu0 %v4041
        %4064 = vmatpush.msra.mxu0 %v4040
        %4065 = vmatpush.msra.mxu0 %v4039
        %4066 = vmatmul.f32.gmra.mxu0 %v4048
        %v4067 = vpop.f32.mrf.mxu0
        %v4068 = vadd.f32 0.0, %v4067
        %4069 = vdwg.mxu0
        %v4070 = vadd.f32 %v4037, %v4068
        %s4071 = scalar_lea.vmem %s7, 704
        %v4072 = vld [vmem:[%s4071] sm:$0xff]
        %v4073 = vld [vmem:[%s4071 + $0x8] sm:$0xff]
        %v4074 = vld [vmem:[%s4071 + $0x10] sm:$0xff]
        %v4075 = vld [vmem:[%s4071 + $0x18] sm:$0xff]
        %v4076 = vld [vmem:[%s4071 + $0x20] sm:$0xff]
        %v4077 = vld [vmem:[%s4071 + $0x28] sm:$0xff]
        %v4078 = vld [vmem:[%s4071 + $0x30] sm:$0xff]
        %v4079 = vld [vmem:[%s4071 + $0x38] sm:$0xff]
        %v4080 = vrot.slane %v3707, 3
        %v4081 = vsel %vm3676, %v4080, 0
        %4083 = vmatpush.msra.mxu0 0.0
        %4084 = vmatpush.msra.mxu0 0.0
        %4085 = vmatpush.msra.mxu0 0.0
        %4086 = vmatpush.msra.mxu0 0.0
        %4087 = vmatpush.msra.mxu0 0.0
        %4088 = vmatpush.msra.mxu0 0.0
        %4089 = vmatpush.msra.mxu0 0.0
        %4090 = vmatpush.msra.mxu0 0.0
        %4091 = vmatpush.msra.mxu0 %v4079
        %4092 = vmatpush.msra.mxu0 %v4078
        %4093 = vmatpush.msra.mxu0 %v4077
        %4094 = vmatpush.msra.mxu0 %v4076
        %4095 = vmatpush.msra.mxu0 %v4075
        %4096 = vmatpush.msra.mxu0 %v4074
        %4097 = vmatpush.msra.mxu0 %v4073
        %4098 = vmatpush.msra.mxu0 %v4072
        %4099 = vmatmul.f32.gmra.mxu0 %v4081
        %v4100 = vpop.f32.mrf.mxu0
        %v4101 = vadd.f32 0.0, %v4100
        %4102 = vdwg.mxu0
        %v4103 = vadd.f32 %v4070, %v4101
        %s4104 = scalar_lea.vmem %s7, 768
        %v4105 = vld [vmem:[%s4104] sm:$0xff]
        %v4106 = vld [vmem:[%s4104 + $0x8] sm:$0xff]
        %v4107 = vld [vmem:[%s4104 + $0x10] sm:$0xff]
        %v4108 = vld [vmem:[%s4104 + $0x18] sm:$0xff]
        %v4109 = vld [vmem:[%s4104 + $0x20] sm:$0xff]
        %v4110 = vld [vmem:[%s4104 + $0x28] sm:$0xff]
        %v4111 = vld [vmem:[%s4104 + $0x30] sm:$0xff]
        %v4112 = vld [vmem:[%s4104 + $0x38] sm:$0xff]
        %v4113 = vrot.slane %v3707, 4
        %v4114 = vsel %vm3676, %v4113, 0
        %4116 = vmatpush.msra.mxu0 0.0
        %4117 = vmatpush.msra.mxu0 0.0
        %4118 = vmatpush.msra.mxu0 0.0
        %4119 = vmatpush.msra.mxu0 0.0
        %4120 = vmatpush.msra.mxu0 0.0
        %4121 = vmatpush.msra.mxu0 0.0
        %4122 = vmatpush.msra.mxu0 0.0
        %4123 = vmatpush.msra.mxu0 0.0
        %4124 = vmatpush.msra.mxu0 %v4112
        %4125 = vmatpush.msra.mxu0 %v4111
        %4126 = vmatpush.msra.mxu0 %v4110
        %4127 = vmatpush.msra.mxu0 %v4109
        %4128 = vmatpush.msra.mxu0 %v4108
        %4129 = vmatpush.msra.mxu0 %v4107
        %4130 = vmatpush.msra.mxu0 %v4106
        %4131 = vmatpush.msra.mxu0 %v4105
        %4132 = vmatmul.f32.gmra.mxu0 %v4114
        %v4133 = vpop.f32.mrf.mxu0
        %v4134 = vadd.f32 0.0, %v4133
        %4135 = vdwg.mxu0
        %v4136 = vadd.f32 %v4103, %v4134
        %s4137 = scalar_lea.vmem %s7, 832
        %v4138 = vld [vmem:[%s4137] sm:$0xff]
        %v4139 = vld [vmem:[%s4137 + $0x8] sm:$0xff]
        %v4140 = vld [vmem:[%s4137 + $0x10] sm:$0xff]
        %v4141 = vld [vmem:[%s4137 + $0x18] sm:$0xff]
        %v4142 = vld [vmem:[%s4137 + $0x20] sm:$0xff]
        %v4143 = vld [vmem:[%s4137 + $0x28] sm:$0xff]
        %v4144 = vld [vmem:[%s4137 + $0x30] sm:$0xff]
        %v4145 = vld [vmem:[%s4137 + $0x38] sm:$0xff]
        %v4146 = vrot.slane %v3707, 5
        %v4147 = vsel %vm3676, %v4146, 0
        %4149 = vmatpush.msra.mxu0 0.0
        %4150 = vmatpush.msra.mxu0 0.0
        %4151 = vmatpush.msra.mxu0 0.0
        %4152 = vmatpush.msra.mxu0 0.0
        %4153 = vmatpush.msra.mxu0 0.0
        %4154 = vmatpush.msra.mxu0 0.0
        %4155 = vmatpush.msra.mxu0 0.0
        %4156 = vmatpush.msra.mxu0 0.0
        %4157 = vmatpush.msra.mxu0 %v4145
        %4158 = vmatpush.msra.mxu0 %v4144
        %4159 = vmatpush.msra.mxu0 %v4143
        %4160 = vmatpush.msra.mxu0 %v4142
        %4161 = vmatpush.msra.mxu0 %v4141
        %4162 = vmatpush.msra.mxu0 %v4140
        %4163 = vmatpush.msra.mxu0 %v4139
        %4164 = vmatpush.msra.mxu0 %v4138
        %4165 = vmatmul.f32.gmra.mxu0 %v4147
        %v4166 = vpop.f32.mrf.mxu0
        %v4167 = vadd.f32 0.0, %v4166
        %4168 = vdwg.mxu0
        %v4169 = vadd.f32 %v4136, %v4167
        %s4170 = scalar_lea.vmem %s7, 896
        %v4171 = vld [vmem:[%s4170] sm:$0xff]
        %v4172 = vld [vmem:[%s4170 + $0x8] sm:$0xff]
        %v4173 = vld [vmem:[%s4170 + $0x10] sm:$0xff]
        %v4174 = vld [vmem:[%s4170 + $0x18] sm:$0xff]
        %v4175 = vld [vmem:[%s4170 + $0x20] sm:$0xff]
        %v4176 = vld [vmem:[%s4170 + $0x28] sm:$0xff]
        %v4177 = vld [vmem:[%s4170 + $0x30] sm:$0xff]
        %v4178 = vld [vmem:[%s4170 + $0x38] sm:$0xff]
        %v4179 = vrot.slane %v3707, 6
        %v4180 = vsel %vm3676, %v4179, 0
        %4182 = vmatpush.msra.mxu0 0.0
        %4183 = vmatpush.msra.mxu0 0.0
        %4184 = vmatpush.msra.mxu0 0.0
        %4185 = vmatpush.msra.mxu0 0.0
        %4186 = vmatpush.msra.mxu0 0.0
        %4187 = vmatpush.msra.mxu0 0.0
        %4188 = vmatpush.msra.mxu0 0.0
        %4189 = vmatpush.msra.mxu0 0.0
        %4190 = vmatpush.msra.mxu0 %v4178
        %4191 = vmatpush.msra.mxu0 %v4177
        %4192 = vmatpush.msra.mxu0 %v4176
        %4193 = vmatpush.msra.mxu0 %v4175
        %4194 = vmatpush.msra.mxu0 %v4174
        %4195 = vmatpush.msra.mxu0 %v4173
        %4196 = vmatpush.msra.mxu0 %v4172
        %4197 = vmatpush.msra.mxu0 %v4171
        %4198 = vmatmul.f32.gmra.mxu0 %v4180
        %v4199 = vpop.f32.mrf.mxu0
        %v4200 = vadd.f32 0.0, %v4199
        %4201 = vdwg.mxu0
        %v4202 = vadd.f32 %v4169, %v4200
        %s4203 = scalar_lea.vmem %s7, 960
        %v4204 = vld [vmem:[%s4203] sm:$0xff]
        %v4205 = vld [vmem:[%s4203 + $0x8] sm:$0xff]
        %v4206 = vld [vmem:[%s4203 + $0x10] sm:$0xff]
        %v4207 = vld [vmem:[%s4203 + $0x18] sm:$0xff]
        %v4208 = vld [vmem:[%s4203 + $0x20] sm:$0xff]
        %v4209 = vld [vmem:[%s4203 + $0x28] sm:$0xff]
        %v4210 = vld [vmem:[%s4203 + $0x30] sm:$0xff]
        %v4211 = vld [vmem:[%s4203 + $0x38] sm:$0xff]
        %v4212 = vrot.slane %v3707, 7
        %v4213 = vsel %vm3676, %v4212, 0
        %4215 = vmatpush.msra.mxu0 0.0
        %4216 = vmatpush.msra.mxu0 0.0
        %4217 = vmatpush.msra.mxu0 0.0
        %4218 = vmatpush.msra.mxu0 0.0
        %4219 = vmatpush.msra.mxu0 0.0
        %4220 = vmatpush.msra.mxu0 0.0
        %4221 = vmatpush.msra.mxu0 0.0
        %4222 = vmatpush.msra.mxu0 0.0
        %4223 = vmatpush.msra.mxu0 %v4211
        %4224 = vmatpush.msra.mxu0 %v4210
        %4225 = vmatpush.msra.mxu0 %v4209
        %4226 = vmatpush.msra.mxu0 %v4208
        %4227 = vmatpush.msra.mxu0 %v4207
        %4228 = vmatpush.msra.mxu0 %v4206
        %4229 = vmatpush.msra.mxu0 %v4205
        %4230 = vmatpush.msra.mxu0 %v4204
        %4231 = vmatmul.f32.gmra.mxu0 %v4213
        %v4232 = vpop.f32.mrf.mxu0
        %v4233 = vadd.f32 0.0, %v4232
        %4234 = vdwg.mxu0
        %v4235 = vadd.f32 %v4202, %v4233
        %vm4236 = vcmask 253952
        %4237 = vst.msk [vmem:[%s324] sm:$0x1] %vm4236, %v4235
        %s4238 = sand.u32 %s225, 1
        %s4239 = scalar_lea.sflag [#allocation4], %s4238
        %s4240 = sand.u32 %s225, 1
        %s4241 = scalar_lea.vmem [#allocation3], %s4240
        // Predicated region
        $region57: #{encoder_forward.1} parent=55 // pred_check
          %p4242 = pneg %p235
        $region58: #{encoder_forward.1} parent=55 // pred_check_branch
          %4244 = sbr.rel (%p4242) target = $region60
        $region59: #{encoder_forward.1} parent=55 // pred_region
          %4246 = vsyncadd %s4239, 0
          %s4247 = scalar_lea.hbm %s9, %s23
          %s4249 = sshll.u32 %s4241, 4
          %s4250 = int_to_ptr.vmem [resolvable:$true] %s4249
          %s4251 = sshll.u32 %s4247, 4
          %s4252 = int_to_ptr.hbm [resolvable:$true] %s4251
          %4254 = dma.vmem_to_hbm [thread:$0]  %s4250, 16, %s4252, %s4239
        $region60: #{encoder_forward.1} parent=55 // pred_fallthru
          _
      $region56: #{encoder_forward.1} parent=5 // pred_fallthru
        _
      %p4255 = scmp.le.s32.totalorder 2, %s18
      // Predicated region
      $region61: #{encoder_forward.1} parent=5 // pred_check
        %p4256 = pneg %p4255
      $region62: #{encoder_forward.1} parent=5 // pred_check_branch
        %4258 = sbr.rel (%p4256) target = $region64
      $region63: #{encoder_forward.1} parent=5 // pred_region
        %s4259 = ssub.s32 %s18, 2
        // Predicated region
        $region65: #{encoder_forward.1} parent=63 // pred_check
          %p4260 = pneg %p241
        $region66: #{encoder_forward.1} parent=63 // pred_check_branch
          %4262 = sbr.rel (%p4260) target = $region68
        $region67: #{encoder_forward.1} parent=63 // pred_region
          %s4263 = sand.u32 %s226, 1
          %s4264 = scalar_lea.sflag [#allocation4], %s4263
          %s4265 = sand.u32 %s226, 1
          %s4266 = scalar_lea.vmem [#allocation3], %s4265
          %4268 = dma.done %s4264, 16
        $region68: #{encoder_forward.1} parent=63 // pred_fallthru
          _
      $region64: #{encoder_forward.1} parent=5 // pred_fallthru
        _
    $region6: #{encoder_forward.1} parent=1 // loop_footer
      %s22 = sadd.s32 1, %s18
    $region7: #{encoder_forward.1} parent=1 // loop_footer_branch
      %17 = sbr.rel target = $region3
    $region8: #{encoder_forward.1} parent=1 // loop_exit
      _
    %4269 = vsyncpa [#allocation4], 1
    %s4270 = scalar_lea.sflag [#allocation4], 1
    %4271 = vsyncpa %s4270, 1

</llo_original>
